<compile_context>
chip_gen: v7x
topology: tpu7x:2x2x1
jax: 0.10.0
libtpu: 0.0.40
codegen_flags: <defaults>
</compile_context>

<pallas_src>
import functools

import jax
import jax.numpy as jnp
from jax.experimental import pallas as pl
from jax.experimental.pallas import tpu as pltpu

IN_DIM = 28 * 28        # 784 (used as the full last dim -> no K padding needed)
HID = 512
OUT_DIM = 10
OUT_PAD = 128           # lane-dense fc3 output, sliced back to 10 in the wrapper
BN_EPS = 1e-5

_FUSED_H1_BUDGET = 16 * 1024 * 1024   # max VMEM bytes for resident fc1 activations


def _round_up(n, m):
    return (n + m - 1) // m * m


def _const_spec(shape):
    """Constant-index (resident) block; single-buffered when supported."""
    index_map = lambda *_: (0,) * len(shape)
    try:
        return pl.BlockSpec(shape, index_map, pipeline_mode=pl.Buffered(1))
    except (TypeError, AttributeError):   # older JAX: no pipeline_mode/Buffered
        return pl.BlockSpec(shape, index_map)


# ---------------------------------------------------------------------------
# Fused kernel: grid = (phase, batch-tile).  fc1 activations stay in VMEM.
# ---------------------------------------------------------------------------
def _fused_mlp_kernel(x_ref, w1_ref, b1_ref, gamma_ref, beta_ref,
                      w2_ref, b2_ref, w3_ref, b3_ref, o_ref,
                      h1_scr, stats_scr, bn_scr,
                      *, batch_real, batch_tile, n_pad):
    phase = pl.program_id(0)
    i = pl.program_id(1)
    row0 = pl.multiple_of(i * batch_tile, batch_tile)

    @pl.when(phase == 0)
    def _fc1_and_stats():
        @pl.when(i == 0)
        def _init():
            stats_scr[...] = jnp.zeros_like(stats_scr)

        h = jnp.dot(x_ref[...], w1_ref[...],
                    preferred_element_type=jnp.float32) + b1_ref[...]
        h = jnp.maximum(h, 0.0)                                  # (bt, 512) f32
        h1_scr[pl.ds(row0, batch_tile), :] = h.astype(h1_scr.dtype)
        # Accumulate BN statistics from the pre-cast f32 activations.
        stats_scr[...] += jnp.concatenate(
            [jnp.sum(h, axis=0, keepdims=True),
             jnp.sum(h * h, axis=0, keepdims=True)], axis=0)

    @pl.when(phase == 1)
    def _bn_fc2_fc3():
        @pl.when(i == 0)
        def _finalize_bn():
            s = stats_scr[0:1, :]
            sq = stats_scr[1:2, :]
            if n_pad:
                # Zero-padded batch rows contribute exactly relu(b1) each.
                hp = jnp.maximum(b1_ref[...], 0.0)
                s = s - n_pad * hp
                sq = sq - n_pad * hp * hp
            inv_n = 1.0 / batch_real
            mean = s * inv_n
            var = jnp.maximum(sq * inv_n - mean * mean, 0.0)     # clamp >= 0
            scale = jax.lax.rsqrt(var + BN_EPS) * gamma_ref[...]
            bn_scr[0:1, :] = scale
            bn_scr[1:2, :] = beta_ref[...] - mean * scale

        h = h1_scr[pl.ds(row0, batch_tile), :].astype(jnp.float32)
        h = h * bn_scr[0:1, :] + bn_scr[1:2, :]
        h = jnp.dot(h.astype(w2_ref.dtype), w2_ref[...],
                    preferred_element_type=jnp.float32) + b2_ref[...]
        h = jnp.maximum(h, 0.0)
        o_ref[...] = jnp.dot(h.astype(w3_ref.dtype), w3_ref[...],
                             preferred_element_type=jnp.float32) + b3_ref[...]


# ---------------------------------------------------------------------------
# Two-pass fallback (large batches).  Pass 1 is fully parallel (per-tile
# partial statistics -> dual-TC on v7x); reduction happens in the wrapper.
# ---------------------------------------------------------------------------
def _fc1_stats_kernel(x_ref, w1_ref, b1_ref, h1_ref, pstats_ref):
    h = jnp.dot(x_ref[...], w1_ref[...],
                preferred_element_type=jnp.float32) + b1_ref[...]
    h = jnp.maximum(h, 0.0)
    h1_ref[...] = h.astype(h1_ref.dtype)
    pstats_ref[...] = jnp.concatenate(
        [jnp.sum(h, axis=0, keepdims=True),
         jnp.sum(h * h, axis=0, keepdims=True)], axis=0)[None]


def _bn_fc2_fc3_kernel(h1_ref, scale_ref, shift_ref,
                       w2_ref, b2_ref, w3_ref, b3_ref, o_ref):
    h = h1_ref[...].astype(jnp.float32) * scale_ref[...] + shift_ref[...]
    h = jnp.dot(h.astype(w2_ref.dtype), w2_ref[...],
                preferred_element_type=jnp.float32) + b2_ref[...]
    h = jnp.maximum(h, 0.0)
    o_ref[...] = jnp.dot(h.astype(w3_ref.dtype), w3_ref[...],
                         preferred_element_type=jnp.float32) + b3_ref[...]


def mlp_forward(x_nchw, params, *, compute_dtype=jnp.bfloat16, batch_tile=512,
                force_two_pass=False, interpret=False):
    """x_nchw: (B, 1, 28, 28).  Returns (B, 10) float32 logits
    (training-mode BatchNorm, i.e. batch statistics, like the PyTorch module)."""
    w1, b1, gamma, beta, w2, b2, w3, b3 = params
    B = x_nchw.shape[0]
    cdt = jnp.dtype(compute_dtype)

    bt = _round_up(min(batch_tile, _round_up(B, 8)), 8)
    Bp = _round_up(B, bt)
    n_tiles = Bp // bt
    n_pad = Bp - B

    # flatten(x, 1); cast once to the MXU compute dtype; pad only the batch dim.
    x = x_nchw.reshape(B, -1).astype(cdt)
    if n_pad:
        x = jnp.pad(x, ((0, n_pad), (0, 0)))

    w1c = w1.astype(cdt)
    w2c = w2.astype(cdt)
    w3c = jnp.pad(w3.astype(cdt), ((0, 0), (0, OUT_PAD - OUT_DIM)))
    b1f = b1.reshape(1, HID).astype(jnp.float32)
    b2f = b2.reshape(1, HID).astype(jnp.float32)
    b3f = jnp.pad(b3.reshape(1, OUT_DIM).astype(jnp.float32),
                  ((0, 0), (0, OUT_PAD - OUT_DIM)))
    gammaf = gamma.reshape(1, HID).astype(jnp.float32)
    betaf = beta.reshape(1, HID).astype(jnp.float32)

    matmul_flops = 2 * Bp * (IN_DIM * HID + HID * HID + HID * OUT_PAD)
    weight_bytes = (w1c.size + w2c.size + w3c.size) * cdt.itemsize
    h1_bytes = Bp * HID * cdt.itemsize
    use_fused = (not force_two_pass) and (h1_bytes <= _FUSED_H1_BUDGET)

    if use_fused:
        kern = functools.partial(_fused_mlp_kernel, batch_real=B,
                                 batch_tile=bt, n_pad=n_pad)
        # x is only read in phase 0; in phase 1 its index stays at block 0 so no
        # extra DMA happens.  The output is only written in phase 1.
        tiled_x = pl.BlockSpec((bt, IN_DIM), lambda p, i: (i * (1 - p), 0))
        tiled_o = pl.BlockSpec((bt, OUT_PAD), lambda p, i: (i * p, 0))
        vmem_limit = int(min(
            max(h1_bytes + 2 * weight_bytes + 2 * bt * IN_DIM * cdt.itemsize
                + 2 * bt * OUT_PAD * 4 + (4 << 20), 32 << 20),
            56 << 20))
        cost = pl.CostEstimate(
            flops=matmul_flops + 10 * Bp * HID,
            transcendentals=HID,
            bytes_accessed=int(Bp * IN_DIM * cdt.itemsize + weight_bytes
                               + Bp * OUT_PAD * 4))
        out = pl.pallas_call(
            kern,
            out_shape=jax.ShapeDtypeStruct((Bp, OUT_PAD), jnp.float32),
            grid_spec=pltpu.PrefetchScalarGridSpec(
                num_scalar_prefetch=0,
                grid=(2, n_tiles),
                in_specs=[tiled_x,
                          _const_spec((IN_DIM, HID)), _const_spec((1, HID)),
                          _const_spec((1, HID)), _const_spec((1, HID)),
                          _const_spec((HID, HID)), _const_spec((1, HID)),
                          _const_spec((HID, OUT_PAD)), _const_spec((1, OUT_PAD))],
                out_specs=tiled_o,
                scratch_shapes=[pltpu.VMEM((Bp, HID), cdt),        # resident h1
                                pltpu.VMEM((2, HID), jnp.float32),  # sum / sumsq
                                pltpu.VMEM((2, HID), jnp.float32)], # scale/shift
            ),
            compiler_params=pltpu.CompilerParams(
                # Phase 1 depends on all of phase 0 (batch stats + resident
                # activations), so both axes are sequential on one TensorCore.
                dimension_semantics=("arbitrary", "arbitrary"),
                vmem_limit_bytes=vmem_limit),
            cost_estimate=cost,
            interpret=interpret,
        )(x, w1c, b1f, gammaf, betaf, w2c, b2f, w3c, b3f)
        return out[:B, :OUT_DIM]

    # ---- two-pass fallback -------------------------------------------------
    # Pass 1: fc1 + ReLU + per-tile partial statistics (fully parallel).
    h1, pstats = pl.pallas_call(
        _fc1_stats_kernel,
        out_shape=(jax.ShapeDtypeStruct((Bp, HID), cdt),
                   jax.ShapeDtypeStruct((n_tiles, 2, HID), jnp.float32)),
        grid_spec=pltpu.PrefetchScalarGridSpec(
            num_scalar_prefetch=0,
            grid=(n_tiles,),
            in_specs=[pl.BlockSpec((bt, IN_DIM), lambda i: (i, 0)),
                      _const_spec((IN_DIM, HID)), _const_spec((1, HID))],
            out_specs=(pl.BlockSpec((bt, HID), lambda i: (i, 0)),
                       pl.BlockSpec((1, 2, HID), lambda i: (i, 0, 0))),
        ),
        compiler_params=pltpu.CompilerParams(dimension_semantics=("parallel",)),
        cost_estimate=pl.CostEstimate(
            flops=2 * Bp * IN_DIM * HID + 6 * Bp * HID,
            transcendentals=0,
            bytes_accessed=int(Bp * IN_DIM * cdt.itemsize
                               + IN_DIM * HID * cdt.itemsize
                               + Bp * HID * cdt.itemsize)),
        interpret=interpret,
    )(x, w1c, b1f)

    # Tiny (n_tiles, 2, 512) reduction + BN scale/shift in plain XLA.
    stats = jnp.sum(pstats, axis=0)                              # (2, HID)
    if n_pad:
        hp = jnp.maximum(b1f, 0.0)        # exact contribution of each pad row
        stats = stats - jnp.concatenate([hp, hp * hp], axis=0) * float(n_pad)
    mean = stats[0:1] / float(B)
    var = jnp.maximum(stats[1:2] / float(B) - mean * mean, 0.0)
    scale = gammaf * jax.lax.rsqrt(var + BN_EPS)
    shift = betaf - mean * scale

    # Pass 2: BatchNorm + fc2 + ReLU + fc3 (parallel tiles).
    out = pl.pallas_call(
        _bn_fc2_fc3_kernel,
        out_shape=jax.ShapeDtypeStruct((Bp, OUT_PAD), jnp.float32),
        grid_spec=pltpu.PrefetchScalarGridSpec(
            num_scalar_prefetch=0,
            grid=(n_tiles,),
            in_specs=[pl.BlockSpec((bt, HID), lambda i: (i, 0)),
                      _const_spec((1, HID)), _const_spec((1, HID)),
                      _const_spec((HID, HID)), _const_spec((1, HID)),
                      _const_spec((HID, OUT_PAD)), _const_spec((1, OUT_PAD))],
            out_specs=pl.BlockSpec((bt, OUT_PAD), lambda i: (i, 0)),
        ),
        compiler_params=pltpu.CompilerParams(dimension_semantics=("parallel",)),
        cost_estimate=pl.CostEstimate(
            flops=2 * Bp * HID * (HID + OUT_PAD) + 6 * Bp * HID,
            transcendentals=0,
            bytes_accessed=int(Bp * HID * cdt.itemsize
                               + HID * (HID + OUT_PAD) * cdt.itemsize
                               + Bp * OUT_PAD * 4)),
        interpret=interpret,
    )(h1, scale, shift, w2c, b2f, w3c, b3f)
    return out[:B, :OUT_DIM]


def init_params(key):
    """PyTorch layout: weights stored (in_features, out_features); all f32."""
    k1, k2, k3, k4 = jax.random.split(key, 4)
    w1 = jax.random.normal(k1, (IN_DIM, HID), jnp.float32) * 0.02
    b1 = jax.random.normal(k4, (HID,), jnp.float32) * 0.05
    gamma = jnp.ones((HID,), jnp.float32)
    beta = jnp.zeros((HID,), jnp.float32)
    w2 = jax.random.normal(k2, (HID, HID), jnp.float32) * 0.02
    b2 = jnp.full((HID,), 0.01, jnp.float32)
    w3 = jax.random.normal(k3, (HID, OUT_DIM), jnp.float32) * 0.02
    b3 = jnp.full((OUT_DIM,), 0.01, jnp.float32)
    return (w1, b1, gamma, beta, w2, b2, w3, b3)


def mlp_reference(x_nchw, params, precision=jax.lax.Precision.HIGHEST):
    """Pure-f32 JAX reference matching the PyTorch training-mode forward."""
    w1, b1, gamma, beta, w2, b2, w3, b3 = params
    x = x_nchw.reshape(x_nchw.shape[0], -1).astype(jnp.float32)
    h = jnp.maximum(jnp.dot(x, w1, precision=precision) + b1, 0.0)
    mean = jnp.mean(h, axis=0, keepdims=True)
    var = jnp.mean((h - mean) ** 2, axis=0, keepdims=True)   # biased (PyTorch)
    h = (h - mean) * jax.lax.rsqrt(var + BN_EPS) * gamma + beta
    h = jnp.maximum(jnp.dot(h, w2, precision=precision) + b2, 0.0)
    return jnp.dot(h, w3, precision=precision) + b3


if __name__ == "__main__":
    key = jax.random.PRNGKey(0)
    kx, kp = jax.random.split(key)
    params = init_params(kp)

    # Small deterministic MNIST-shaped batch.  batch_tile=8 forces several grid
    # tiles and a ragged (zero-padded) final batch, exercising both fused
    # phases, the exact pad-row statistics correction, and the fallback path.
    B = 20
    x = jax.random.normal(kx, (B, 1, 28, 28), jnp.float32)
    ref = mlp_reference(x, params)
    ref_default = mlp_reference(x, params, precision=None)
    f32_tol = max(3e-3, 3.0 * float(jnp.max(jnp.abs(ref - ref_default))))

    # 1) fused kernel, f32 compute (tight numerical check).
    out_f32 = mlp_forward(x, params, compute_dtype=jnp.float32, batch_tile=8)
    jax.block_until_ready(out_f32)
    assert out_f32.shape == (B, OUT_DIM)
    err = float(jnp.max(jnp.abs(out_f32 - ref)))
    assert err < f32_tol, f"fused f32 max err {err} (tol {f32_tol})"

    # 2) fused kernel, bf16 compute (the default fast path).
    out_bf16 = mlp_forward(x, params, batch_tile=8)
    jax.block_until_ready(out_bf16)
    assert out_bf16.shape == (B, OUT_DIM)
    assert bool(jnp.all(jnp.isfinite(out_bf16)))
    err = float(jnp.max(jnp.abs(out_bf16 - ref)))
    assert err < 6e-2, f"fused bf16 max err {err}"

    # 3) two-pass fallback (large-batch path), bf16.
    out_tp = mlp_forward(x, params, batch_tile=8, force_two_pass=True)
    jax.block_until_ready(out_tp)
    assert out_tp.shape == (B, OUT_DIM)
    err = float(jnp.max(jnp.abs(out_tp - ref)))
    assert err < 6e-2, f"two-pass bf16 max err {err}"

    print("KERNEL_OK")
</pallas_src>

<mosaic_0001>
module attributes {stable_mosaic.version = 11 : i64} {
  func.func @_fused_mlp_kernel(%arg0: i32, %arg1: i32, %arg2: memref<8x784xf32, #tpu.memory_space<vmem>>, %arg3: memref<784x512xf32, #tpu.memory_space<vmem>>, %arg4: memref<1x512xf32, #tpu.memory_space<vmem>>, %arg5: memref<1x512xf32, #tpu.memory_space<vmem>>, %arg6: memref<1x512xf32, #tpu.memory_space<vmem>>, %arg7: memref<512x512xf32, #tpu.memory_space<vmem>>, %arg8: memref<1x512xf32, #tpu.memory_space<vmem>>, %arg9: memref<512x128xf32, #tpu.memory_space<vmem>>, %arg10: memref<1x128xf32, #tpu.memory_space<vmem>>, %arg11: memref<8x128xf32, #tpu.memory_space<vmem>>, %arg12: memref<24x512xf32, #tpu.memory_space<vmem>>, %arg13: memref<2x512xf32, #tpu.memory_space<vmem>>, %arg14: memref<2x512xf32, #tpu.memory_space<vmem>>) attributes {dimension_semantics = [#tpu.dimension_semantics<arbitrary>, #tpu.dimension_semantics<arbitrary>], iteration_bounds = array<i64: 2, 3>, scalar_prefetch = 0 : i64, scratch_operands = 3 : i64, tpu.core_type = #tpu.core_type<tc>, window_params = [{transform_indices = @transform_0, window_bounds = array<i64: 8, 784>}, {pipeline_mode = #tpu.pipeline_mode<synchronous>, transform_indices = @transform_1, window_bounds = array<i64: 784, 512>}, {pipeline_mode = #tpu.pipeline_mode<synchronous>, transform_indices = @transform_2, window_bounds = array<i64: 1, 512>}, {pipeline_mode = #tpu.pipeline_mode<synchronous>, transform_indices = @transform_3, window_bounds = array<i64: 1, 512>}, {pipeline_mode = #tpu.pipeline_mode<synchronous>, transform_indices = @transform_4, window_bounds = array<i64: 1, 512>}, {pipeline_mode = #tpu.pipeline_mode<synchronous>, transform_indices = @transform_5, window_bounds = array<i64: 512, 512>}, {pipeline_mode = #tpu.pipeline_mode<synchronous>, transform_indices = @transform_6, window_bounds = array<i64: 1, 512>}, {pipeline_mode = #tpu.pipeline_mode<synchronous>, transform_indices = @transform_7, window_bounds = array<i64: 512, 128>}, {pipeline_mode = #tpu.pipeline_mode<synchronous>, transform_indices = @transform_8, window_bounds = array<i64: 1, 128>}, {transform_indices = @transform_9, window_bounds = array<i64: 8, 128>}]} {
    %c8_i32 = arith.constant 8 : i32
    %0 = arith.muli %arg1, %c8_i32 : i32
    %1 = tpu.assume_multiple %0, 8 : i32
    %c0_i32 = arith.constant 0 : i32
    %2 = arith.cmpi eq, %arg0, %c0_i32 : i32
    %3 = arith.extui %2 : i1 to i32
    %c0_i32_0 = arith.constant 0 : i32
    %4 = arith.cmpi ne, %3, %c0_i32_0 : i32
    scf.if %4 {
      %c0_i32_2 = arith.constant 0 : i32
      %8 = arith.cmpi eq, %arg1, %c0_i32_2 : i32
      %9 = arith.extui %8 : i1 to i32
      %c0_i32_3 = arith.constant 0 : i32
      %10 = arith.cmpi ne, %9, %c0_i32_3 : i32
      scf.if %10 {
        %cst_17 = arith.constant 0.000000e+00 : f32
        %30 = vector.broadcast %cst_17 : f32 to vector<2x512xf32>
        %c0_18 = arith.constant 0 : index
        %c0_19 = arith.constant 0 : index
        %31 = vector.load %arg13[%c0_18, %c0_19] : memref<2x512xf32, #tpu.memory_space<vmem>>, vector<2x512xf32>
        tpu.vector_store %arg13[%c0_18, %c0_19], %30 {strides = array<i32>} : memref<2x512xf32, #tpu.memory_space<vmem>>, vector<2x512xf32>,
      } else {
      }
      %c0 = arith.constant 0 : index
      %c0_4 = arith.constant 0 : index
      %11 = vector.load %arg2[%c0, %c0_4] : memref<8x784xf32, #tpu.memory_space<vmem>>, vector<8x784xf32>
      %c0_5 = arith.constant 0 : index
      %c0_6 = arith.constant 0 : index
      %12 = vector.load %arg3[%c0_5, %c0_6] : memref<784x512xf32, #tpu.memory_space<vmem>>, vector<784x512xf32>
      %cst = arith.constant dense<0.000000e+00> : vector<8x512xf32>
      %13 = tpu.matmul %11, %12, %cst {dimension_numbers = #tpu.dot_dimension_numbers<[1], [0], [0], [1], [0, 0, 1, 1], [], []>} : vector<8x784xf32>, vector<784x512xf32>, vector<8x512xf32> -> vector<8x512xf32>
      %c0_7 = arith.constant 0 : index
      %c0_8 = arith.constant 0 : index
      %14 = vector.load %arg4[%c0_7, %c0_8] : memref<1x512xf32, #tpu.memory_space<vmem>>, vector<1x512xf32>
      %15 = vector.broadcast %14 : vector<1x512xf32> to vector<8x512xf32>
      %16 = arith.addf %13, %15 : vector<8x512xf32>
      %cst_9 = arith.constant 0.000000e+00 : f32
      %17 = vector.broadcast %cst_9 : f32 to vector<8x512xf32>
      %18 = arith.maximumf %16, %17 : vector<8x512xf32>
      %19 = arith.index_cast %1 : i32 to index
      %c0_10 = arith.constant 0 : index
      %20 = vector.load %arg12[%19, %c0_10] : memref<24x512xf32, #tpu.memory_space<vmem>>, vector<8x512xf32>
      tpu.vector_store %arg12[%19, %c0_10], %18 {strides = array<i32>} : memref<24x512xf32, #tpu.memory_space<vmem>>, vector<8x512xf32>,
      %c0_11 = arith.constant 0 : index
      %c0_12 = arith.constant 0 : index
      %21 = vector.load %arg13[%c0_11, %c0_12] : memref<2x512xf32, #tpu.memory_space<vmem>>, vector<2x512xf32>
      %cst_13 = arith.constant dense<0.000000e+00> : vector<512xf32>
      %22 = vector.multi_reduction <add>, %18, %cst_13 [0] : vector<8x512xf32> to vector<512xf32>
      %23 = vector.shape_cast %22 : vector<512xf32> to vector<1x512xf32>
      %24 = arith.mulf %18, %18 : vector<8x512xf32>
      %cst_14 = arith.constant dense<0.000000e+00> : vector<512xf32>
      %25 = vector.multi_reduction <add>, %24, %cst_14 [0] : vector<8x512xf32> to vector<512xf32>
      %26 = vector.shape_cast %25 : vector<512xf32> to vector<1x512xf32>
      %27 = tpu.concatenate %23, %26 in 0 : vector<1x512xf32>, vector<1x512xf32> -> vector<2x512xf32>
      %28 = arith.addf %21, %27 : vector<2x512xf32>
      %c0_15 = arith.constant 0 : index
      %c0_16 = arith.constant 0 : index
      %29 = vector.load %arg13[%c0_15, %c0_16] : memref<2x512xf32, #tpu.memory_space<vmem>>, vector<2x512xf32>
      tpu.vector_store %arg13[%c0_15, %c0_16], %28 {strides = array<i32>} : memref<2x512xf32, #tpu.memory_space<vmem>>, vector<2x512xf32>,
    } else {
    }
    %c1_i32 = arith.constant 1 : i32
    %5 = arith.cmpi eq, %arg0, %c1_i32 : i32
    %6 = arith.extui %5 : i1 to i32
    %c0_i32_1 = arith.constant 0 : i32
    %7 = arith.cmpi ne, %6, %c0_i32_1 : i32
    scf.if %7 {
      %c0_i32_2 = arith.constant 0 : i32
      %8 = arith.cmpi eq, %arg1, %c0_i32_2 : i32
      %9 = arith.extui %8 : i1 to i32
      %c0_i32_3 = arith.constant 0 : i32
      %10 = arith.cmpi ne, %9, %c0_i32_3 : i32
      scf.if %10 {
        %c0_19 = arith.constant 0 : index
        %c0_20 = arith.constant 0 : index
        %32 = vector.load %arg13[%c0_19, %c0_20] : memref<2x512xf32, #tpu.memory_space<vmem>>, vector<1x512xf32>
        %c1_21 = arith.constant 1 : index
        %c0_22 = arith.constant 0 : index
        %33 = vector.load %arg13[%c1_21, %c0_22] : memref<2x512xf32, #tpu.memory_space<vmem>>, vector<1x512xf32>
        %c0_23 = arith.constant 0 : index
        %c0_24 = arith.constant 0 : index
        %34 = vector.load %arg4[%c0_23, %c0_24] : memref<1x512xf32, #tpu.memory_space<vmem>>, vector<1x512xf32>
        %cst_25 = arith.constant 0.000000e+00 : f32
        %35 = vector.broadcast %cst_25 : f32 to vector<1x512xf32>
        %36 = arith.maximumf %34, %35 : vector<1x512xf32>
        %cst_26 = arith.constant 4.000000e+00 : f32
        %37 = vector.broadcast %cst_26 : f32 to vector<1x512xf32>
        %38 = arith.mulf %37, %36 : vector<1x512xf32>
        %39 = arith.subf %32, %38 : vector<1x512xf32>
        %cst_27 = arith.constant 4.000000e+00 : f32
        %40 = vector.broadcast %cst_27 : f32 to vector<1x512xf32>
        %41 = arith.mulf %40, %36 : vector<1x512xf32>
        %42 = arith.mulf %41, %36 : vector<1x512xf32>
        %43 = arith.subf %33, %42 : vector<1x512xf32>
        %cst_28 = arith.constant 5.000000e-02 : f32
        %44 = vector.broadcast %cst_28 : f32 to vector<1x512xf32>
        %45 = arith.mulf %39, %44 : vector<1x512xf32>
        %cst_29 = arith.constant 5.000000e-02 : f32
        %46 = vector.broadcast %cst_29 : f32 to vector<1x512xf32>
        %47 = arith.mulf %43, %46 : vector<1x512xf32>
        %48 = arith.mulf %45, %45 : vector<1x512xf32>
        %49 = arith.subf %47, %48 : vector<1x512xf32>
        %cst_30 = arith.constant 0.000000e+00 : f32
        %50 = vector.broadcast %cst_30 : f32 to vector<1x512xf32>
        %51 = arith.maximumf %49, %50 : vector<1x512xf32>
        %cst_31 = arith.constant 9.99999974E-6 : f32
        %52 = vector.broadcast %cst_31 : f32 to vector<1x512xf32>
        %53 = arith.addf %51, %52 : vector<1x512xf32>
        %54 = math.rsqrt %53 : vector<1x512xf32>
        %c0_32 = arith.constant 0 : index
        %c0_33 = arith.constant 0 : index
        %55 = vector.load %arg5[%c0_32, %c0_33] : memref<1x512xf32, #tpu.memory_space<vmem>>, vector<1x512xf32>
        %56 = arith.mulf %54, %55 : vector<1x512xf32>
        %c0_34 = arith.constant 0 : index
        %c0_35 = arith.constant 0 : index
        %57 = vector.load %arg14[%c0_34, %c0_35] : memref<2x512xf32, #tpu.memory_space<vmem>>, vector<1x512xf32>
        tpu.vector_store %arg14[%c0_34, %c0_35], %56 {strides = array<i32>} : memref<2x512xf32, #tpu.memory_space<vmem>>, vector<1x512xf32>,
        %c0_36 = arith.constant 0 : index
        %c0_37 = arith.constant 0 : index
        %58 = vector.load %arg6[%c0_36, %c0_37] : memref<1x512xf32, #tpu.memory_space<vmem>>, vector<1x512xf32>
        %59 = arith.mulf %45, %56 : vector<1x512xf32>
        %60 = arith.subf %58, %59 : vector<1x512xf32>
        %c1_38 = arith.constant 1 : index
        %c0_39 = arith.constant 0 : index
        %61 = vector.load %arg14[%c1_38, %c0_39] : memref<2x512xf32, #tpu.memory_space<vmem>>, vector<1x512xf32>
        tpu.vector_store %arg14[%c1_38, %c0_39], %60 {strides = array<i32>} : memref<2x512xf32, #tpu.memory_space<vmem>>, vector<1x512xf32>,
      } else {
      }
      %11 = arith.index_cast %1 : i32 to index
      %c0 = arith.constant 0 : index
      %12 = vector.load %arg12[%11, %c0] : memref<24x512xf32, #tpu.memory_space<vmem>>, vector<8x512xf32>
      %c0_4 = arith.constant 0 : index
      %c0_5 = arith.constant 0 : index
      %13 = vector.load %arg14[%c0_4, %c0_5] : memref<2x512xf32, #tpu.memory_space<vmem>>, vector<1x512xf32>
      %14 = vector.broadcast %13 : vector<1x512xf32> to vector<8x512xf32>
      %15 = arith.mulf %12, %14 : vector<8x512xf32>
      %c1 = arith.constant 1 : index
      %c0_6 = arith.constant 0 : index
      %16 = vector.load %arg14[%c1, %c0_6] : memref<2x512xf32, #tpu.memory_space<vmem>>, vector<1x512xf32>
      %17 = vector.broadcast %16 : vector<1x512xf32> to vector<8x512xf32>
      %18 = arith.addf %15, %17 : vector<8x512xf32>
      %c0_7 = arith.constant 0 : index
      %c0_8 = arith.constant 0 : index
      %19 = vector.load %arg7[%c0_7, %c0_8] : memref<512x512xf32, #tpu.memory_space<vmem>>, vector<512x512xf32>
      %cst = arith.constant dense<0.000000e+00> : vector<8x512xf32>
      %20 = tpu.matmul %18, %19, %cst {dimension_numbers = #tpu.dot_dimension_numbers<[1], [0], [0], [1], [0, 0, 1, 1], [], []>} : vector<8x512xf32>, vector<512x512xf32>, vector<8x512xf32> -> vector<8x512xf32>
      %c0_9 = arith.constant 0 : index
      %c0_10 = arith.constant 0 : index
      %21 = vector.load %arg8[%c0_9, %c0_10] : memref<1x512xf32, #tpu.memory_space<vmem>>, vector<1x512xf32>
      %22 = vector.broadcast %21 : vector<1x512xf32> to vector<8x512xf32>
      %23 = arith.addf %20, %22 : vector<8x512xf32>
      %cst_11 = arith.constant 0.000000e+00 : f32
      %24 = vector.broadcast %cst_11 : f32 to vector<8x512xf32>
      %25 = arith.maximumf %23, %24 : vector<8x512xf32>
      %c0_12 = arith.constant 0 : index
      %c0_13 = arith.constant 0 : index
      %26 = vector.load %arg9[%c0_12, %c0_13] : memref<512x128xf32, #tpu.memory_space<vmem>>, vector<512x128xf32>
      %cst_14 = arith.constant dense<0.000000e+00> : vector<8x128xf32>
      %27 = tpu.matmul %25, %26, %cst_14 {dimension_numbers = #tpu.dot_dimension_numbers<[1], [0], [0], [1], [0, 0, 1, 1], [], []>} : vector<8x512xf32>, vector<512x128xf32>, vector<8x128xf32> -> vector<8x128xf32>
      %c0_15 = arith.constant 0 : index
      %c0_16 = arith.constant 0 : index
      %28 = vector.load %arg10[%c0_15, %c0_16] : memref<1x128xf32, #tpu.memory_space<vmem>>, vector<1x128xf32>
      %29 = vector.broadcast %28 : vector<1x128xf32> to vector<8x128xf32>
      %30 = arith.addf %27, %29 : vector<8x128xf32>
      %c0_17 = arith.constant 0 : index
      %c0_18 = arith.constant 0 : index
      %31 = vector.load %arg11[%c0_17, %c0_18] : memref<8x128xf32, #tpu.memory_space<vmem>>, vector<8x128xf32>
      tpu.vector_store %arg11[%c0_17, %c0_18], %30 {strides = array<i32>} : memref<8x128xf32, #tpu.memory_space<vmem>>, vector<8x128xf32>,
    } else {
    }
    return
  }
  func.func @transform_0(%arg0: i32, %arg1: i32) -> (i32, i32) {
    %c1_i32 = arith.constant 1 : i32
    %0 = arith.subi %c1_i32, %arg0 : i32
    %1 = arith.muli %arg1, %0 : i32
    %c0_i32 = arith.constant 0 : i32
    %c0_i32_0 = arith.constant 0 : i32
    return %1, %c0_i32 : i32, i32
  }
  func.func @transform_1(%arg0: i32, %arg1: i32) -> (i32, i32) {
    %c0_i32 = arith.constant 0 : i32
    %c0_i32_0 = arith.constant 0 : i32
    %c0_i32_1 = arith.constant 0 : i32
    return %c0_i32, %c0_i32_0 : i32, i32
  }
  func.func @transform_2(%arg0: i32, %arg1: i32) -> (i32, i32) {
    %c0_i32 = arith.constant 0 : i32
    %c0_i32_0 = arith.constant 0 : i32
    %c0_i32_1 = arith.constant 0 : i32
    return %c0_i32, %c0_i32_0 : i32, i32
  }
  func.func @transform_3(%arg0: i32, %arg1: i32) -> (i32, i32) {
    %c0_i32 = arith.constant 0 : i32
    %c0_i32_0 = arith.constant 0 : i32
    %c0_i32_1 = arith.constant 0 : i32
    return %c0_i32, %c0_i32_0 : i32, i32
  }
  func.func @transform_4(%arg0: i32, %arg1: i32) -> (i32, i32) {
    %c0_i32 = arith.constant 0 : i32
    %c0_i32_0 = arith.constant 0 : i32
    %c0_i32_1 = arith.constant 0 : i32
    return %c0_i32, %c0_i32_0 : i32, i32
  }
  func.func @transform_5(%arg0: i32, %arg1: i32) -> (i32, i32) {
    %c0_i32 = arith.constant 0 : i32
    %c0_i32_0 = arith.constant 0 : i32
    %c0_i32_1 = arith.constant 0 : i32
    return %c0_i32, %c0_i32_0 : i32, i32
  }
  func.func @transform_6(%arg0: i32, %arg1: i32) -> (i32, i32) {
    %c0_i32 = arith.constant 0 : i32
    %c0_i32_0 = arith.constant 0 : i32
    %c0_i32_1 = arith.constant 0 : i32
    return %c0_i32, %c0_i32_0 : i32, i32
  }
  func.func @transform_7(%arg0: i32, %arg1: i32) -> (i32, i32) {
    %c0_i32 = arith.constant 0 : i32
    %c0_i32_0 = arith.constant 0 : i32
    %c0_i32_1 = arith.constant 0 : i32
    return %c0_i32, %c0_i32_0 : i32, i32
  }
  func.func @transform_8(%arg0: i32, %arg1: i32) -> (i32, i32) {
    %c0_i32 = arith.constant 0 : i32
    %c0_i32_0 = arith.constant 0 : i32
    %c0_i32_1 = arith.constant 0 : i32
    return %c0_i32, %c0_i32_0 : i32, i32
  }
  func.func @transform_9(%arg0: i32, %arg1: i32) -> (i32, i32) {
    %0 = arith.muli %arg1, %arg0 : i32
    %c0_i32 = arith.constant 0 : i32
    %c0_i32_0 = arith.constant 0 : i32
    return %0, %c0_i32 : i32, i32
  }
}

</mosaic_0001>

<llo_original>
// kernel: tpu_custom_call.1
$region0: #{tpu_custom_call.1}
  #allocation0 [shape = 'u32[]', space=smem, size = 0x4, offset = 0x4, fixed_abs, tag = 'smem constant byte address 0x4 - core index']
  #allocation1 [shape = 'u32[144,128]{1,0:T(1,128)}', space=vmem, size = 0x12000, scoped, tag = 'internal scratch']
  #allocation2 [shape = 'f32[24,512]{1,0:T(8,128)}', space=vmem, size = 0xc000, scoped, tag = 'scratch operand']
  #allocation3 [shape = 'f32[2,512]{1,0:T(2,128)}', space=vmem, size = 0x1000, scoped, tag = 'scratch operand']
  #allocation4 [shape = 'f32[2,512]{1,0:T(2,128)}', space=vmem, size = 0x1000, scoped, tag = 'scratch operand']
  %s0 = inlined_call_operand.hbm [shape: f32[24,784], index: 0, kind: input, shape index: {}]
  %s1 = inlined_call_operand.hbm [shape: f32[784,512], index: 1, kind: input, shape index: {}]
  %s2 = inlined_call_operand.hbm [shape: f32[1,512], index: 2, kind: input, shape index: {}]
  %s3 = inlined_call_operand.hbm [shape: f32[1,512], index: 3, kind: input, shape index: {}]
  %s4 = inlined_call_operand.hbm [shape: f32[1,512], index: 4, kind: input, shape index: {}]
  %s5 = inlined_call_operand.hbm [shape: f32[512,512], index: 5, kind: input, shape index: {}]
  %s6 = inlined_call_operand.hbm [shape: f32[1,512], index: 6, kind: input, shape index: {}]
  %s7 = inlined_call_operand.hbm [shape: f32[512,128], index: 7, kind: input, shape index: {}]
  %s8 = inlined_call_operand.hbm [shape: f32[1,128], index: 8, kind: input, shape index: {}]
  %s9 = inlined_call_operand.hbm [shape: f32[24,128], index: 9, kind: output, shape index: {}]
  %s10 = sld [smem:[#allocation0]]
  $region121: #{tpu_custom_call.1} parent=0
    _
  %s12 = ssub.s32 1, %s10
  %s13 = scalar_select 0, %s12, %s10
  $region1: #{tpu_custom_call.1} parent=0
    #allocation5 [shape = 'u8[57344]{0}', space=vmem, size = 0xe000, scoped, tag = 'input window, operand 0']
    #allocation6 [shape = 's32[2]{0}', space=sflag, size = 0x8, scoped, tag = 'scoped memory for tpu_custom_call.1']
    #allocation7 [shape = 's32[2]{0}', space=sflag, size = 0x8, scoped, tag = 'scoped memory for tpu_custom_call.1']
    #allocation8 [shape = 'u8[1605632]{0}', space=vmem, size = 0x188000, scoped, tag = 'input window, operand 1, single buffered']
    #allocation9 [shape = 's32[1]{0}', space=sflag, size = 0x4, scoped, tag = 'scoped memory for tpu_custom_call.1']
    #allocation10 [shape = 'u8[2048]{0}', space=vmem, size = 0x800, scoped, tag = 'input window, operand 2, single buffered']
    #allocation11 [shape = 'u8[2048]{0}', space=vmem, size = 0x800, scoped, tag = 'input window, operand 3, single buffered']
    #allocation12 [shape = 's32[1]{0}', space=sflag, size = 0x4, scoped, tag = 'scoped memory for tpu_custom_call.1']
    #allocation13 [shape = 'u8[2048]{0}', space=vmem, size = 0x800, scoped, tag = 'input window, operand 4, single buffered']
    #allocation14 [shape = 'u8[1048576]{0}', space=vmem, size = 0x100000, scoped, tag = 'input window, operand 5, single buffered']
    #allocation15 [shape = 's32[1]{0}', space=sflag, size = 0x4, scoped, tag = 'scoped memory for tpu_custom_call.1']
    #allocation16 [shape = 'u8[2048]{0}', space=vmem, size = 0x800, scoped, tag = 'input window, operand 6, single buffered']
    #allocation17 [shape = 'u8[262144]{0}', space=vmem, size = 0x40000, scoped, tag = 'input window, operand 7, single buffered']
    #allocation18 [shape = 's32[1]{0}', space=sflag, size = 0x4, scoped, tag = 'scoped memory for tpu_custom_call.1']
    #allocation19 [shape = 'u8[512]{0}', space=vmem, size = 0x400, scoped, tag = 'input window, operand 8, single buffered']
    #allocation20 [shape = 'u8[8192]{0}', space=vmem, size = 0x2000, scoped, tag = 'output window, operand 0']
    %14 = vsyncpa [#allocation6], 0
    %s15 = scalar_lea.sflag [#allocation6], 1
    %16 = vsyncpa %s15, 0
    %17 = vsyncpa [#allocation9], 0
    %18 = vsyncpa [#allocation12], 0
    %19 = vsyncpa [#allocation15], 0
    %20 = vsyncpa [#allocation18], 0
    %21 = vsyncpa [#allocation7], 0
    %s22 = scalar_lea.sflag [#allocation7], 1
    %23 = vsyncpa %s22, 0
    loop: start=0, step=1, limit=8
    $region2: #{tpu_custom_call.1} parent=1 // loop_pre_header
      _
    $region3: #{tpu_custom_call.1} parent=1 // loop_header
      %s25 = sphi 0, %s29
      %p26 = scmp.ge.s32.totalorder %s25, 8
      %s32 = sphi 0, %s44
      %s33 = sphi 0, %s40
      %s34 = sphi 0, %s32
      %s35 = sphi 0, %s33
      %s36 = sphi 0, %s34
      %s37 = sphi 0, %s35
      %s51 = sphi 0, %s53
      %s54 = sphi 0, %s51
      %s55 = sphi 0, %s54
      %s71 = sphi 0, %s55
      %s75 = sphi 0, %s75
      %s77 = sphi 0, %s75
      %s78 = sphi 0, %s77
      %s92 = sphi 0, %s78
      %s96 = sphi 0, %s96
      %s98 = sphi 0, %s96
      %s99 = sphi 0, %s98
      %s113 = sphi 0, %s99
      %s117 = sphi 0, %s117
      %s119 = sphi 0, %s117
      %s120 = sphi 0, %s119
      %s134 = sphi 0, %s120
      %s138 = sphi 0, %s138
      %s140 = sphi 0, %s138
      %s141 = sphi 0, %s140
      %s155 = sphi 0, %s141
      %s159 = sphi 0, %s159
      %s161 = sphi 0, %s159
      %s162 = sphi 0, %s161
      %s176 = sphi 0, %s162
      %s180 = sphi 0, %s180
      %s182 = sphi 0, %s180
      %s183 = sphi 0, %s182
      %s197 = sphi 0, %s183
      %s201 = sphi 0, %s201
      %s203 = sphi 0, %s201
      %s204 = sphi 0, %s203
      %s218 = sphi 0, %s204
      %s222 = sphi 0, %s222
      %s224 = sphi 0, %s222
      %s225 = sphi 0, %s224
      %s239 = sphi 0, %s225
      %s247 = sphi 0, %s249
      %s250 = sphi 0, %s247
      %s251 = sphi 0, %s250
      %s267 = sphi 0, %s251
    $region4: #{tpu_custom_call.1} parent=1 // loop_header_branch
      %28 = sbr.rel (%p26) target = $region8
    $region5: #{tpu_custom_call.1} parent=1 // loop_body
      %s30 = ssub.s32 %s25, 1
      %s31 = ssub.s32 %s25, 2
      %s38 = sadd.s32 1, %s33
      %p39 = scmp.ge.s32.totalorder %s38, 3
      %s40 = scalar_select %p39, 0, %s38
      %s41 = sadd.s32 1, %s32
      %s42 = scalar_select %p39, %s41, %s32
      %p43 = scmp.ge.s32.totalorder %s42, 2
      %s44 = scalar_select %p43, 0, %s42
      %s45 = ssub.s32 1, %s32
      %s46 = smul.u32 %s33, %s45
      %s47 = ssub.s32 1, %s44
      %s48 = smul.u32 %s40, %s47
      %s49 = ssub.s32 %s46, %s48
      %p50 = scmp.eq.s32.totalorder %s49, 0
      %s52 = sadd.s32 %s51, 1
      %s53 = scalar_select %p50, %s51, %s52
      %p56 = pneg %p50
      %p57 = scmp.eq.s32.totalorder %s25, 5
      %p58 = por %p56, %p57
      %p59 = scmp.ne.s32.totalorder %s51, %s54
      %p60 = scmp.eq.s32.totalorder %s25, 0
      %p61 = por %p59, %p60
      %p62 = scmp.ne.s32.totalorder %s51, %s54
      %p63 = scmp.eq.s32.totalorder %s30, 5
      %p64 = por %p62, %p63
      %p65 = scmp.ne.s32.totalorder %s54, %s55
      %p66 = scmp.eq.s32.totalorder %s30, 0
      %p67 = por %p65, %p66
      %p68 = scmp.ne.s32.totalorder %s54, %s55
      %p69 = scmp.eq.s32.totalorder %s31, 5
      %p70 = por %p68, %p69
      %p72 = scmp.ne.s32.totalorder %s55, %s71
      %p73 = scmp.eq.s32.totalorder %s31, 0
      %p74 = por %p72, %p73
      %s76 = sadd.s32 %s75, 1
      %p79 = scmp.eq.s32.totalorder %s25, 5
      %p80 = scmp.ne.s32.totalorder %s75, %s77
      %p81 = scmp.eq.s32.totalorder %s25, 0
      %p82 = por %p80, %p81
      %p83 = scmp.ne.s32.totalorder %s75, %s77
      %p84 = scmp.eq.s32.totalorder %s30, 5
      %p85 = por %p83, %p84
      %p86 = scmp.ne.s32.totalorder %s77, %s78
      %p87 = scmp.eq.s32.totalorder %s30, 0
      %p88 = por %p86, %p87
      %p89 = scmp.ne.s32.totalorder %s77, %s78
      %p90 = scmp.eq.s32.totalorder %s31, 5
      %p91 = por %p89, %p90
      %p93 = scmp.ne.s32.totalorder %s78, %s92
      %p94 = scmp.eq.s32.totalorder %s31, 0
      %p95 = por %p93, %p94
      %s97 = sadd.s32 %s96, 1
      %p100 = scmp.eq.s32.totalorder %s25, 5
      %p101 = scmp.ne.s32.totalorder %s96, %s98
      %p102 = scmp.eq.s32.totalorder %s25, 0
      %p103 = por %p101, %p102
      %p104 = scmp.ne.s32.totalorder %s96, %s98
      %p105 = scmp.eq.s32.totalorder %s30, 5
      %p106 = por %p104, %p105
      %p107 = scmp.ne.s32.totalorder %s98, %s99
      %p108 = scmp.eq.s32.totalorder %s30, 0
      %p109 = por %p107, %p108
      %p110 = scmp.ne.s32.totalorder %s98, %s99
      %p111 = scmp.eq.s32.totalorder %s31, 5
      %p112 = por %p110, %p111
      %p114 = scmp.ne.s32.totalorder %s99, %s113
      %p115 = scmp.eq.s32.totalorder %s31, 0
      %p116 = por %p114, %p115
      %s118 = sadd.s32 %s117, 1
      %p121 = scmp.eq.s32.totalorder %s25, 5
      %p122 = scmp.ne.s32.totalorder %s117, %s119
      %p123 = scmp.eq.s32.totalorder %s25, 0
      %p124 = por %p122, %p123
      %p125 = scmp.ne.s32.totalorder %s117, %s119
      %p126 = scmp.eq.s32.totalorder %s30, 5
      %p127 = por %p125, %p126
      %p128 = scmp.ne.s32.totalorder %s119, %s120
      %p129 = scmp.eq.s32.totalorder %s30, 0
      %p130 = por %p128, %p129
      %p131 = scmp.ne.s32.totalorder %s119, %s120
      %p132 = scmp.eq.s32.totalorder %s31, 5
      %p133 = por %p131, %p132
      %p135 = scmp.ne.s32.totalorder %s120, %s134
      %p136 = scmp.eq.s32.totalorder %s31, 0
      %p137 = por %p135, %p136
      %s139 = sadd.s32 %s138, 1
      %p142 = scmp.eq.s32.totalorder %s25, 5
      %p143 = scmp.ne.s32.totalorder %s138, %s140
      %p144 = scmp.eq.s32.totalorder %s25, 0
      %p145 = por %p143, %p144
      %p146 = scmp.ne.s32.totalorder %s138, %s140
      %p147 = scmp.eq.s32.totalorder %s30, 5
      %p148 = por %p146, %p147
      %p149 = scmp.ne.s32.totalorder %s140, %s141
      %p150 = scmp.eq.s32.totalorder %s30, 0
      %p151 = por %p149, %p150
      %p152 = scmp.ne.s32.totalorder %s140, %s141
      %p153 = scmp.eq.s32.totalorder %s31, 5
      %p154 = por %p152, %p153
      %p156 = scmp.ne.s32.totalorder %s141, %s155
      %p157 = scmp.eq.s32.totalorder %s31, 0
      %p158 = por %p156, %p157
      %s160 = sadd.s32 %s159, 1
      %p163 = scmp.eq.s32.totalorder %s25, 5
      %p164 = scmp.ne.s32.totalorder %s159, %s161
      %p165 = scmp.eq.s32.totalorder %s25, 0
      %p166 = por %p164, %p165
      %p167 = scmp.ne.s32.totalorder %s159, %s161
      %p168 = scmp.eq.s32.totalorder %s30, 5
      %p169 = por %p167, %p168
      %p170 = scmp.ne.s32.totalorder %s161, %s162
      %p171 = scmp.eq.s32.totalorder %s30, 0
      %p172 = por %p170, %p171
      %p173 = scmp.ne.s32.totalorder %s161, %s162
      %p174 = scmp.eq.s32.totalorder %s31, 5
      %p175 = por %p173, %p174
      %p177 = scmp.ne.s32.totalorder %s162, %s176
      %p178 = scmp.eq.s32.totalorder %s31, 0
      %p179 = por %p177, %p178
      %s181 = sadd.s32 %s180, 1
      %p184 = scmp.eq.s32.totalorder %s25, 5
      %p185 = scmp.ne.s32.totalorder %s180, %s182
      %p186 = scmp.eq.s32.totalorder %s25, 0
      %p187 = por %p185, %p186
      %p188 = scmp.ne.s32.totalorder %s180, %s182
      %p189 = scmp.eq.s32.totalorder %s30, 5
      %p190 = por %p188, %p189
      %p191 = scmp.ne.s32.totalorder %s182, %s183
      %p192 = scmp.eq.s32.totalorder %s30, 0
      %p193 = por %p191, %p192
      %p194 = scmp.ne.s32.totalorder %s182, %s183
      %p195 = scmp.eq.s32.totalorder %s31, 5
      %p196 = por %p194, %p195
      %p198 = scmp.ne.s32.totalorder %s183, %s197
      %p199 = scmp.eq.s32.totalorder %s31, 0
      %p200 = por %p198, %p199
      %s202 = sadd.s32 %s201, 1
      %p205 = scmp.eq.s32.totalorder %s25, 5
      %p206 = scmp.ne.s32.totalorder %s201, %s203
      %p207 = scmp.eq.s32.totalorder %s25, 0
      %p208 = por %p206, %p207
      %p209 = scmp.ne.s32.totalorder %s201, %s203
      %p210 = scmp.eq.s32.totalorder %s30, 5
      %p211 = por %p209, %p210
      %p212 = scmp.ne.s32.totalorder %s203, %s204
      %p213 = scmp.eq.s32.totalorder %s30, 0
      %p214 = por %p212, %p213
      %p215 = scmp.ne.s32.totalorder %s203, %s204
      %p216 = scmp.eq.s32.totalorder %s31, 5
      %p217 = por %p215, %p216
      %p219 = scmp.ne.s32.totalorder %s204, %s218
      %p220 = scmp.eq.s32.totalorder %s31, 0
      %p221 = por %p219, %p220
      %s223 = sadd.s32 %s222, 1
      %p226 = scmp.eq.s32.totalorder %s25, 5
      %p227 = scmp.ne.s32.totalorder %s222, %s224
      %p228 = scmp.eq.s32.totalorder %s25, 0
      %p229 = por %p227, %p228
      %p230 = scmp.ne.s32.totalorder %s222, %s224
      %p231 = scmp.eq.s32.totalorder %s30, 5
      %p232 = por %p230, %p231
      %p233 = scmp.ne.s32.totalorder %s224, %s225
      %p234 = scmp.eq.s32.totalorder %s30, 0
      %p235 = por %p233, %p234
      %p236 = scmp.ne.s32.totalorder %s224, %s225
      %p237 = scmp.eq.s32.totalorder %s31, 5
      %p238 = por %p236, %p237
      %p240 = scmp.ne.s32.totalorder %s225, %s239
      %p241 = scmp.eq.s32.totalorder %s31, 0
      %p242 = por %p240, %p241
      %s243 = smul.u32 %s33, %s32
      %s244 = smul.u32 %s40, %s44
      %s245 = ssub.s32 %s243, %s244
      %p246 = scmp.eq.s32.totalorder %s245, 0
      %s248 = sadd.s32 %s247, 1
      %s249 = scalar_select %p246, %s247, %s248
      %p252 = pneg %p246
      %p253 = scmp.eq.s32.totalorder %s25, 5
      %p254 = por %p252, %p253
      %p255 = scmp.ne.s32.totalorder %s247, %s250
      %p256 = scmp.eq.s32.totalorder %s25, 0
      %p257 = por %p255, %p256
      %p258 = scmp.ne.s32.totalorder %s247, %s250
      %p259 = scmp.eq.s32.totalorder %s30, 5
      %p260 = por %p258, %p259
      %p261 = scmp.ne.s32.totalorder %s250, %s251
      %p262 = scmp.eq.s32.totalorder %s30, 0
      %p263 = por %p261, %p262
      %p264 = scmp.ne.s32.totalorder %s250, %s251
      %p265 = scmp.eq.s32.totalorder %s31, 5
      %p266 = por %p264, %p265
      %p268 = scmp.ne.s32.totalorder %s251, %s267
      %p269 = scmp.eq.s32.totalorder %s31, 0
      %p270 = por %p268, %p269
      %p271 = scmp.le.s32.totalorder 1, %s25
      %p272 = scmp.lt.s32.totalorder %s25, 7
      %p273 = pnand %p271, %p272
      %p274 = pneg %p273
      // Predicated region
      $region9: #{tpu_custom_call.1} parent=5 // pred_check
        _
      $region10: #{tpu_custom_call.1} parent=5 // pred_check_branch
        %276 = sbr.rel (%p273) target = $region12
      $region11: #{tpu_custom_call.1} parent=5 // pred_region
        %s277 = ssub.s32 %s25, 1
        // Predicated region
        $region13: #{tpu_custom_call.1} parent=11 // pred_check
          %p278 = pneg %p88
        $region14: #{tpu_custom_call.1} parent=11 // pred_check_branch
          %280 = sbr.rel (%p278) target = $region16
        $region15: #{tpu_custom_call.1} parent=11 // pred_region
          %s282 = ssub.s32 50176, 50176
          %283 = vsyncadd [#allocation9], %s282
          %s284 = sshll.u32 [#allocation8], 4
          %s285 = int_to_ptr.vmem [resolvable:$true] %s284
          %290 = dma.hbm_to_vmem [thread:$0]  %s1, 50176, %s285, [#allocation9], 512, 512, 32
        $region16: #{tpu_custom_call.1} parent=11 // pred_fallthru
          _
        // Predicated region
        $region17: #{tpu_custom_call.1} parent=11 // pred_check
          %p291 = pneg %p109
        $region18: #{tpu_custom_call.1} parent=11 // pred_check_branch
          %293 = sbr.rel (%p291) target = $region20
        $region19: #{tpu_custom_call.1} parent=11 // pred_region
          %s295 = ssub.s32 64, 64
          %296 = vsyncadd [#allocation9], %s295
          %s298 = sshll.u32 [#allocation10], 4
          %s299 = int_to_ptr.vmem [resolvable:$true] %s298
          %301 = dma.hbm_to_vmem [thread:$0]  %s2, 64, %s299, [#allocation9]
        $region20: #{tpu_custom_call.1} parent=11 // pred_fallthru
          _
        // Predicated region
        $region21: #{tpu_custom_call.1} parent=11 // pred_check
          %p302 = pneg %p130
        $region22: #{tpu_custom_call.1} parent=11 // pred_check_branch
          %304 = sbr.rel (%p302) target = $region24
        $region23: #{tpu_custom_call.1} parent=11 // pred_region
          %s306 = ssub.s32 64, 64
          %307 = vsyncadd [#allocation12], %s306
          %s309 = sshll.u32 [#allocation11], 4
          %s310 = int_to_ptr.vmem [resolvable:$true] %s309
          %312 = dma.hbm_to_vmem [thread:$0]  %s3, 64, %s310, [#allocation12]
        $region24: #{tpu_custom_call.1} parent=11 // pred_fallthru
          _
        // Predicated region
        $region25: #{tpu_custom_call.1} parent=11 // pred_check
          %p313 = pneg %p151
        $region26: #{tpu_custom_call.1} parent=11 // pred_check_branch
          %315 = sbr.rel (%p313) target = $region28
        $region27: #{tpu_custom_call.1} parent=11 // pred_region
          %s317 = ssub.s32 64, 64
          %318 = vsyncadd [#allocation12], %s317
          %s320 = sshll.u32 [#allocation13], 4
          %s321 = int_to_ptr.vmem [resolvable:$true] %s320
          %323 = dma.hbm_to_vmem [thread:$0]  %s4, 64, %s321, [#allocation12]
        $region28: #{tpu_custom_call.1} parent=11 // pred_fallthru
          _
        // Predicated region
        $region29: #{tpu_custom_call.1} parent=11 // pred_check
          %p324 = pneg %p172
        $region30: #{tpu_custom_call.1} parent=11 // pred_check_branch
          %326 = sbr.rel (%p324) target = $region32
        $region31: #{tpu_custom_call.1} parent=11 // pred_region
          %s328 = ssub.s32 32768, 32768
          %329 = vsyncadd [#allocation15], %s328
          %s330 = sshll.u32 [#allocation14], 4
          %s331 = int_to_ptr.vmem [resolvable:$true] %s330
          %336 = dma.hbm_to_vmem [thread:$0]  %s5, 32768, %s331, [#allocation15], 512, 512, 32
        $region32: #{tpu_custom_call.1} parent=11 // pred_fallthru
          _
        // Predicated region
        $region33: #{tpu_custom_call.1} parent=11 // pred_check
          %p337 = pneg %p193
        $region34: #{tpu_custom_call.1} parent=11 // pred_check_branch
          %339 = sbr.rel (%p337) target = $region36
        $region35: #{tpu_custom_call.1} parent=11 // pred_region
          %s341 = ssub.s32 64, 64
          %342 = vsyncadd [#allocation15], %s341
          %s344 = sshll.u32 [#allocation16], 4
          %s345 = int_to_ptr.vmem [resolvable:$true] %s344
          %347 = dma.hbm_to_vmem [thread:$0]  %s6, 64, %s345, [#allocation15]
        $region36: #{tpu_custom_call.1} parent=11 // pred_fallthru
          _
        // Predicated region
        $region37: #{tpu_custom_call.1} parent=11 // pred_check
          %p348 = pneg %p214
        $region38: #{tpu_custom_call.1} parent=11 // pred_check_branch
          %350 = sbr.rel (%p348) target = $region40
        $region39: #{tpu_custom_call.1} parent=11 // pred_region
          %s352 = ssub.s32 8192, 8192
          %353 = vsyncadd [#allocation18], %s352
          %s354 = sshll.u32 [#allocation17], 4
          %s355 = int_to_ptr.vmem [resolvable:$true] %s354
          %360 = dma.hbm_to_vmem [thread:$0]  %s7, 8192, %s355, [#allocation18], 128, 128, 8
        $region40: #{tpu_custom_call.1} parent=11 // pred_fallthru
          _
        // Predicated region
        $region41: #{tpu_custom_call.1} parent=11 // pred_check
          %p361 = pneg %p235
        $region42: #{tpu_custom_call.1} parent=11 // pred_check_branch
          %363 = sbr.rel (%p361) target = $region44
        $region43: #{tpu_custom_call.1} parent=11 // pred_region
          %s365 = ssub.s32 16, 16
          %366 = vsyncadd [#allocation18], %s365
          %s368 = sshll.u32 [#allocation19], 4
          %s369 = int_to_ptr.vmem [resolvable:$true] %s368
          %371 = dma.hbm_to_vmem [thread:$0]  %s8, 16, %s369, [#allocation18]
        $region44: #{tpu_custom_call.1} parent=11 // pred_fallthru
          _
      $region12: #{tpu_custom_call.1} parent=5 // pred_fallthru
        _
      %p372 = scmp.lt.s32.totalorder %s25, 6
      // Predicated region
      $region45: #{tpu_custom_call.1} parent=5 // pred_check
        %p373 = pneg %p372
      $region46: #{tpu_custom_call.1} parent=5 // pred_check_branch
        %375 = sbr.rel (%p373) target = $region48
      $region47: #{tpu_custom_call.1} parent=5 // pred_region
        // Predicated region
        $region49: #{tpu_custom_call.1} parent=47 // pred_check
          %p376 = pneg %p61
        $region50: #{tpu_custom_call.1} parent=47 // pred_check_branch
          %378 = sbr.rel (%p376) target = $region52
        $region51: #{tpu_custom_call.1} parent=47 // pred_region
          %s379 = sand.u32 %s51, 1
          %s380 = scalar_lea.sflag [#allocation6], %s379
          %s381 = sand.u32 %s51, 1
          %s382 = smul.addr %s381, 56
          %s383 = scalar_lea.vmem [#allocation5], %s382
          %s384 = ssub.s32 1, %s32
          %s385 = smul.u32 %s33, %s384
          %s387 = ssub.s32 896, 896
          %388 = vsyncadd %s380, %s387
          %s389 = smul.addr %s385, 7
          %s390 = smul.addr %s389, 128
          %s391 = scalar_lea.hbm %s0, %s390
          %s393 = sshll.u32 %s383, 4
          %s394 = int_to_ptr.vmem [resolvable:$true] %s393
          %396 = dma.hbm_to_vmem [thread:$0]  %s391, 896, %s394, %s380
        $region52: #{tpu_custom_call.1} parent=47 // pred_fallthru
          _
      $region48: #{tpu_custom_call.1} parent=5 // pred_fallthru
        _
      %p397 = scmp.le.s32.totalorder 1, %s25
      %p398 = scmp.lt.s32.totalorder %s25, 7
      %p399 = pnand %p397, %p398
      %p400 = pneg %p399
      // Predicated region
      $region53: #{tpu_custom_call.1} parent=5 // pred_check
        _
      $region54: #{tpu_custom_call.1} parent=5 // pred_check_branch
        %402 = sbr.rel (%p399) target = $region56
      $region55: #{tpu_custom_call.1} parent=5 // pred_region
        %s403 = ssub.s32 %s25, 1
        %s404 = sand.u32 %s54, 1
        %s405 = scalar_lea.sflag [#allocation6], %s404
        %s406 = sand.u32 %s54, 1
        %s407 = smul.addr %s406, 56
        %s408 = scalar_lea.vmem [#allocation5], %s407
        // Predicated region
        $region57: #{tpu_custom_call.1} parent=55 // pred_check
          %p409 = pneg %p67
        $region58: #{tpu_custom_call.1} parent=55 // pred_check_branch
          %411 = sbr.rel (%p409) target = $region60
        $region59: #{tpu_custom_call.1} parent=55 // pred_region
          %412 = dma.done %s405, 896
        $region60: #{tpu_custom_call.1} parent=55 // pred_fallthru
          _
        // Predicated region
        $region61: #{tpu_custom_call.1} parent=55 // pred_check
          %p413 = pneg %p88
        $region62: #{tpu_custom_call.1} parent=55 // pred_check_branch
          %415 = sbr.rel (%p413) target = $region64
        $region63: #{tpu_custom_call.1} parent=55 // pred_region
          %416 = dma.done [#allocation9], 50176
        $region64: #{tpu_custom_call.1} parent=55 // pred_fallthru
          _
        // Predicated region
        $region65: #{tpu_custom_call.1} parent=55 // pred_check
          %p417 = pneg %p109
        $region66: #{tpu_custom_call.1} parent=55 // pred_check_branch
          %419 = sbr.rel (%p417) target = $region68
        $region67: #{tpu_custom_call.1} parent=55 // pred_region
          %420 = dma.done [#allocation9], 64
        $region68: #{tpu_custom_call.1} parent=55 // pred_fallthru
          _
        // Predicated region
        $region69: #{tpu_custom_call.1} parent=55 // pred_check
          %p421 = pneg %p130
        $region70: #{tpu_custom_call.1} parent=55 // pred_check_branch
          %423 = sbr.rel (%p421) target = $region72
        $region71: #{tpu_custom_call.1} parent=55 // pred_region
          %424 = dma.done [#allocation12], 64
        $region72: #{tpu_custom_call.1} parent=55 // pred_fallthru
          _
        // Predicated region
        $region73: #{tpu_custom_call.1} parent=55 // pred_check
          %p425 = pneg %p151
        $region74: #{tpu_custom_call.1} parent=55 // pred_check_branch
          %427 = sbr.rel (%p425) target = $region76
        $region75: #{tpu_custom_call.1} parent=55 // pred_region
          %428 = dma.done [#allocation12], 64
        $region76: #{tpu_custom_call.1} parent=55 // pred_fallthru
          _
        // Predicated region
        $region77: #{tpu_custom_call.1} parent=55 // pred_check
          %p429 = pneg %p172
        $region78: #{tpu_custom_call.1} parent=55 // pred_check_branch
          %431 = sbr.rel (%p429) target = $region80
        $region79: #{tpu_custom_call.1} parent=55 // pred_region
          %432 = dma.done [#allocation15], 32768
        $region80: #{tpu_custom_call.1} parent=55 // pred_fallthru
          _
        // Predicated region
        $region81: #{tpu_custom_call.1} parent=55 // pred_check
          %p433 = pneg %p193
        $region82: #{tpu_custom_call.1} parent=55 // pred_check_branch
          %435 = sbr.rel (%p433) target = $region84
        $region83: #{tpu_custom_call.1} parent=55 // pred_region
          %436 = dma.done [#allocation15], 64
        $region84: #{tpu_custom_call.1} parent=55 // pred_fallthru
          _
        // Predicated region
        $region85: #{tpu_custom_call.1} parent=55 // pred_check
          %p437 = pneg %p214
        $region86: #{tpu_custom_call.1} parent=55 // pred_check_branch
          %439 = sbr.rel (%p437) target = $region88
        $region87: #{tpu_custom_call.1} parent=55 // pred_region
          %440 = dma.done [#allocation18], 8192
        $region88: #{tpu_custom_call.1} parent=55 // pred_fallthru
          _
        // Predicated region
        $region89: #{tpu_custom_call.1} parent=55 // pred_check
          %p441 = pneg %p235
        $region90: #{tpu_custom_call.1} parent=55 // pred_check_branch
          %443 = sbr.rel (%p441) target = $region92
        $region91: #{tpu_custom_call.1} parent=55 // pred_region
          %444 = dma.done [#allocation18], 16
        $region92: #{tpu_custom_call.1} parent=55 // pred_fallthru
          _
        %s445 = sand.u32 %s54, 1
        %s446 = scalar_lea.sflag [#allocation6], %s445
        %s447 = sand.u32 %s54, 1
        %s448 = smul.addr %s447, 56
        %s449 = scalar_lea.vmem [#allocation5], %s448
        %p450 = pneg %p67
        %p451 = pneg %p64
        %p452 = pneg %p88
        %p453 = pneg %p85
        %p454 = pneg %p109
        %p455 = pneg %p106
        %p456 = pneg %p130
        %p457 = pneg %p127
        %p458 = pneg %p151
        %p459 = pneg %p148
        %p460 = pneg %p172
        %p461 = pneg %p169
        %p462 = pneg %p193
        %p463 = pneg %p190
        %p464 = pneg %p214
        %p465 = pneg %p211
        %p466 = pneg %p235
        %p467 = pneg %p232
        %p468 = pneg %p263
        %p469 = pneg %p260
        %s470 = sand.u32 %s250, 1
        %s471 = scalar_lea.sflag [#allocation7], %s470
        %s472 = sand.u32 %s250, 1
        %s473 = smul.addr %s472, 8
        %s474 = scalar_lea.vmem [#allocation20], %s473
        %s475 = ssub.s32 1, %s34
        %s476 = smul.u32 %s35, %s475
        %s477 = smul.u32 %s35, %s34
        %s478 = smul.u32 %s35, 8
        %p479 = scmp.eq.s32.totalorder %s34, 0
        // Predicated region
        $region93: #{tpu_custom_call.1} parent=55 // pred_check
          %p480 = pneg %p479
        $region94: #{tpu_custom_call.1} parent=55 // pred_check_branch
          %482 = sbr.rel (%p480) target = $region96
        $region95: #{tpu_custom_call.1} parent=55 // pred_region
          %p483 = scmp.eq.s32.totalorder %s35, 0
          // Predicated region
          $region97: #{tpu_custom_call.1} parent=95 // pred_check
            %p484 = pneg %p483
          $region98: #{tpu_custom_call.1} parent=95 // pred_check_branch
            %486 = sbr.rel (%p484) target = $region100
          $region99: #{tpu_custom_call.1} parent=95 // pred_region
            %487 = vst [vmem:[#allocation3] sm:$0xff] 0.0
          $region100: #{tpu_custom_call.1} parent=95 // pred_fallthru
            _
          %v488 = vld [vmem:[%s408] sm:$0xff]
          %v489 = vld [vmem:[%s408 + $0x8] sm:$0xff]
          %v490 = vld [vmem:[%s408 + $0x10] sm:$0xff]
          %v491 = vld [vmem:[%s408 + $0x18] sm:$0xff]
          %v492 = vld [vmem:[%s408 + $0x20] sm:$0xff]
          %v493 = vld [vmem:[%s408 + $0x28] sm:$0xff]
          %v494 = vld [vmem:[%s408 + $0x30] sm:$0xff]
          %v495 = vld [vmem:[#allocation8] sm:$0xff]
          %v496 = vld [vmem:[#allocation8 + $0x8] sm:$0xff]
          %v497 = vld [vmem:[#allocation8 + $0x10] sm:$0xff]
          %v498 = vld [vmem:[#allocation8 + $0x18] sm:$0xff]
          %v499 = vld [vmem:[#allocation8 + $0x20] sm:$0xff]
          %v500 = vld [vmem:[#allocation8 + $0x28] sm:$0xff]
          %v501 = vld [vmem:[#allocation8 + $0x30] sm:$0xff]
          %v502 = vld [vmem:[#allocation8 + $0x38] sm:$0xff]
          %v503 = vld [vmem:[#allocation8 + $0x40] sm:$0xff]
          %v504 = vld [vmem:[#allocation8 + $0x48] sm:$0xff]
          %v505 = vld [vmem:[#allocation8 + $0x50] sm:$0xff]
          %v506 = vld [vmem:[#allocation8 + $0x58] sm:$0xff]
          %v507 = vld [vmem:[#allocation8 + $0x60] sm:$0xff]
          %v508 = vld [vmem:[#allocation8 + $0x68] sm:$0xff]
          %v509 = vld [vmem:[#allocation8 + $0x70] sm:$0xff]
          %v510 = vld [vmem:[#allocation8 + $0x78] sm:$0xff]
          %v511 = vld [vmem:[#allocation8 + $0x80] sm:$0xff]
          %v512 = vld [vmem:[#allocation8 + $0x88] sm:$0xff]
          %v513 = vld [vmem:[#allocation8 + $0x90] sm:$0xff]
          %v514 = vld [vmem:[#allocation8 + $0x98] sm:$0xff]
          %v515 = vld [vmem:[#allocation8 + $0xa0] sm:$0xff]
          %v516 = vld [vmem:[#allocation8 + $0xa8] sm:$0xff]
          %v517 = vld [vmem:[#allocation8 + $0xb0] sm:$0xff]
          %v518 = vld [vmem:[#allocation8 + $0xb8] sm:$0xff]
          %v519 = vld [vmem:[#allocation8 + $0xc0] sm:$0xff]
          %v520 = vld [vmem:[#allocation8 + $0xc8] sm:$0xff]
          %v521 = vld [vmem:[#allocation8 + $0xd0] sm:$0xff]
          %v522 = vld [vmem:[#allocation8 + $0xd8] sm:$0xff]
          %v523 = vld [vmem:[#allocation8 + $0xe0] sm:$0xff]
          %v524 = vld [vmem:[#allocation8 + $0xe8] sm:$0xff]
          %v525 = vld [vmem:[#allocation8 + $0xf0] sm:$0xff]
          %v526 = vld [vmem:[#allocation8 + $0xf8] sm:$0xff]
          %v527 = vld [vmem:[#allocation8 + $0x100] sm:$0xff]
          %v528 = vld [vmem:[#allocation8 + $0x108] sm:$0xff]
          %v529 = vld [vmem:[#allocation8 + $0x110] sm:$0xff]
          %v530 = vld [vmem:[#allocation8 + $0x118] sm:$0xff]
          %v531 = vld [vmem:[#allocation8 + $0x120] sm:$0xff]
          %v532 = vld [vmem:[#allocation8 + $0x128] sm:$0xff]
          %v533 = vld [vmem:[#allocation8 + $0x130] sm:$0xff]
          %v534 = vld [vmem:[#allocation8 + $0x138] sm:$0xff]
          %v535 = vld [vmem:[#allocation8 + $0x140] sm:$0xff]
          %v536 = vld [vmem:[#allocation8 + $0x148] sm:$0xff]
          %v537 = vld [vmem:[#allocation8 + $0x150] sm:$0xff]
          %v538 = vld [vmem:[#allocation8 + $0x158] sm:$0xff]
          %v539 = vld [vmem:[#allocation8 + $0x160] sm:$0xff]
          %v540 = vld [vmem:[#allocation8 + $0x168] sm:$0xff]
          %v541 = vld [vmem:[#allocation8 + $0x170] sm:$0xff]
          %v542 = vld [vmem:[#allocation8 + $0x178] sm:$0xff]
          %v543 = vld [vmem:[#allocation8 + $0x180] sm:$0xff]
          %v544 = vld [vmem:[#allocation8 + $0x188] sm:$0xff]
          %v545 = vld [vmem:[#allocation8 + $0x190] sm:$0xff]
          %v546 = vld [vmem:[#allocation8 + $0x198] sm:$0xff]
          %v547 = vld [vmem:[#allocation8 + $0x1a0] sm:$0xff]
          %v548 = vld [vmem:[#allocation8 + $0x1a8] sm:$0xff]
          %v549 = vld [vmem:[#allocation8 + $0x1b0] sm:$0xff]
          %v550 = vld [vmem:[#allocation8 + $0x1b8] sm:$0xff]
          %v551 = vld [vmem:[#allocation8 + $0x1c0] sm:$0xff]
          %v552 = vld [vmem:[#allocation8 + $0x1c8] sm:$0xff]
          %v553 = vld [vmem:[#allocation8 + $0x1d0] sm:$0xff]
          %v554 = vld [vmem:[#allocation8 + $0x1d8] sm:$0xff]
          %v555 = vld [vmem:[#allocation8 + $0x1e0] sm:$0xff]
          %v556 = vld [vmem:[#allocation8 + $0x1e8] sm:$0xff]
          %v557 = vld [vmem:[#allocation8 + $0x1f0] sm:$0xff]
          %v558 = vld [vmem:[#allocation8 + $0x1f8] sm:$0xff]
          %v559 = vld [vmem:[#allocation8 + $0x200] sm:$0xff]
          %v560 = vld [vmem:[#allocation8 + $0x208] sm:$0xff]
          %v561 = vld [vmem:[#allocation8 + $0x210] sm:$0xff]
          %v562 = vld [vmem:[#allocation8 + $0x218] sm:$0xff]
          %v563 = vld [vmem:[#allocation8 + $0x220] sm:$0xff]
          %v564 = vld [vmem:[#allocation8 + $0x228] sm:$0xff]
          %v565 = vld [vmem:[#allocation8 + $0x230] sm:$0xff]
          %v566 = vld [vmem:[#allocation8 + $0x238] sm:$0xff]
          %v567 = vld [vmem:[#allocation8 + $0x240] sm:$0xff]
          %v568 = vld [vmem:[#allocation8 + $0x248] sm:$0xff]
          %v569 = vld [vmem:[#allocation8 + $0x250] sm:$0xff]
          %v570 = vld [vmem:[#allocation8 + $0x258] sm:$0xff]
          %v571 = vld [vmem:[#allocation8 + $0x260] sm:$0xff]
          %v572 = vld [vmem:[#allocation8 + $0x268] sm:$0xff]
          %v573 = vld [vmem:[#allocation8 + $0x270] sm:$0xff]
          %v574 = vld [vmem:[#allocation8 + $0x278] sm:$0xff]
          %v575 = vld [vmem:[#allocation8 + $0x280] sm:$0xff]
          %v576 = vld [vmem:[#allocation8 + $0x288] sm:$0xff]
          %v577 = vld [vmem:[#allocation8 + $0x290] sm:$0xff]
          %v578 = vld [vmem:[#allocation8 + $0x298] sm:$0xff]
          %v579 = vld [vmem:[#allocation8 + $0x2a0] sm:$0xff]
          %v580 = vld [vmem:[#allocation8 + $0x2a8] sm:$0xff]
          %v581 = vld [vmem:[#allocation8 + $0x2b0] sm:$0xff]
          %v582 = vld [vmem:[#allocation8 + $0x2b8] sm:$0xff]
          %v583 = vld [vmem:[#allocation8 + $0x2c0] sm:$0xff]
          %v584 = vld [vmem:[#allocation8 + $0x2c8] sm:$0xff]
          %v585 = vld [vmem:[#allocation8 + $0x2d0] sm:$0xff]
          %v586 = vld [vmem:[#allocation8 + $0x2d8] sm:$0xff]
          %v587 = vld [vmem:[#allocation8 + $0x2e0] sm:$0xff]
          %v588 = vld [vmem:[#allocation8 + $0x2e8] sm:$0xff]
          %v589 = vld [vmem:[#allocation8 + $0x2f0] sm:$0xff]
          %v590 = vld [vmem:[#allocation8 + $0x2f8] sm:$0xff]
          %v591 = vld [vmem:[#allocation8 + $0x300] sm:$0xff]
          %v592 = vld [vmem:[#allocation8 + $0x308] sm:$0xff]
          %v593 = vld [vmem:[#allocation8 + $0x310] sm:$0xff]
          %v594 = vld [vmem:[#allocation8 + $0x318] sm:$0xff]
          %v595 = vld [vmem:[#allocation8 + $0x320] sm:$0xff]
          %v596 = vld [vmem:[#allocation8 + $0x328] sm:$0xff]
          %v597 = vld [vmem:[#allocation8 + $0x330] sm:$0xff]
          %v598 = vld [vmem:[#allocation8 + $0x338] sm:$0xff]
          %v599 = vld [vmem:[#allocation8 + $0x340] sm:$0xff]
          %v600 = vld [vmem:[#allocation8 + $0x348] sm:$0xff]
          %v601 = vld [vmem:[#allocation8 + $0x350] sm:$0xff]
          %v602 = vld [vmem:[#allocation8 + $0x358] sm:$0xff]
          %v603 = vld [vmem:[#allocation8 + $0x360] sm:$0xff]
          %v604 = vld [vmem:[#allocation8 + $0x368] sm:$0xff]
          %v605 = vld [vmem:[#allocation8 + $0x370] sm:$0xff]
          %v606 = vld [vmem:[#allocation8 + $0x378] sm:$0xff]
          %v607 = vld [vmem:[#allocation8 + $0x380] sm:$0xff]
          %v608 = vld [vmem:[#allocation8 + $0x388] sm:$0xff]
          %v609 = vld [vmem:[#allocation8 + $0x390] sm:$0xff]
          %v610 = vld [vmem:[#allocation8 + $0x398] sm:$0xff]
          %v611 = vld [vmem:[#allocation8 + $0x3a0] sm:$0xff]
          %v612 = vld [vmem:[#allocation8 + $0x3a8] sm:$0xff]
          %v613 = vld [vmem:[#allocation8 + $0x3b0] sm:$0xff]
          %v614 = vld [vmem:[#allocation8 + $0x3b8] sm:$0xff]
          %v615 = vld [vmem:[#allocation8 + $0x3c0] sm:$0xff]
          %v616 = vld [vmem:[#allocation8 + $0x3c8] sm:$0xff]
          %v617 = vld [vmem:[#allocation8 + $0x3d0] sm:$0xff]
          %v618 = vld [vmem:[#allocation8 + $0x3d8] sm:$0xff]
          %v619 = vld [vmem:[#allocation8 + $0x3e0] sm:$0xff]
          %v620 = vld [vmem:[#allocation8 + $0x3e8] sm:$0xff]
          %v621 = vld [vmem:[#allocation8 + $0x3f0] sm:$0xff]
          %v622 = vld [vmem:[#allocation8 + $0x3f8] sm:$0xff]
          %v623 = vld [vmem:[#allocation8 + $0x400] sm:$0xff]
          %v624 = vld [vmem:[#allocation8 + $0x408] sm:$0xff]
          %v625 = vld [vmem:[#allocation8 + $0x410] sm:$0xff]
          %v626 = vld [vmem:[#allocation8 + $0x418] sm:$0xff]
          %v627 = vld [vmem:[#allocation8 + $0x420] sm:$0xff]
          %v628 = vld [vmem:[#allocation8 + $0x428] sm:$0xff]
          %v629 = vld [vmem:[#allocation8 + $0x430] sm:$0xff]
          %v630 = vld [vmem:[#allocation8 + $0x438] sm:$0xff]
          %v631 = vld [vmem:[#allocation8 + $0x440] sm:$0xff]
          %v632 = vld [vmem:[#allocation8 + $0x448] sm:$0xff]
          %v633 = vld [vmem:[#allocation8 + $0x450] sm:$0xff]
          %v634 = vld [vmem:[#allocation8 + $0x458] sm:$0xff]
          %v635 = vld [vmem:[#allocation8 + $0x460] sm:$0xff]
          %v636 = vld [vmem:[#allocation8 + $0x468] sm:$0xff]
          %v637 = vld [vmem:[#allocation8 + $0x470] sm:$0xff]
          %v638 = vld [vmem:[#allocation8 + $0x478] sm:$0xff]
          %v639 = vld [vmem:[#allocation8 + $0x480] sm:$0xff]
          %v640 = vld [vmem:[#allocation8 + $0x488] sm:$0xff]
          %v641 = vld [vmem:[#allocation8 + $0x490] sm:$0xff]
          %v642 = vld [vmem:[#allocation8 + $0x498] sm:$0xff]
          %v643 = vld [vmem:[#allocation8 + $0x4a0] sm:$0xff]
          %v644 = vld [vmem:[#allocation8 + $0x4a8] sm:$0xff]
          %v645 = vld [vmem:[#allocation8 + $0x4b0] sm:$0xff]
          %v646 = vld [vmem:[#allocation8 + $0x4b8] sm:$0xff]
          %v647 = vld [vmem:[#allocation8 + $0x4c0] sm:$0xff]
          %v648 = vld [vmem:[#allocation8 + $0x4c8] sm:$0xff]
          %v649 = vld [vmem:[#allocation8 + $0x4d0] sm:$0xff]
          %v650 = vld [vmem:[#allocation8 + $0x4d8] sm:$0xff]
          %v651 = vld [vmem:[#allocation8 + $0x4e0] sm:$0xff]
          %v652 = vld [vmem:[#allocation8 + $0x4e8] sm:$0xff]
          %v653 = vld [vmem:[#allocation8 + $0x4f0] sm:$0xff]
          %v654 = vld [vmem:[#allocation8 + $0x4f8] sm:$0xff]
          %v655 = vld [vmem:[#allocation8 + $0x500] sm:$0xff]
          %v656 = vld [vmem:[#allocation8 + $0x508] sm:$0xff]
          %v657 = vld [vmem:[#allocation8 + $0x510] sm:$0xff]
          %v658 = vld [vmem:[#allocation8 + $0x518] sm:$0xff]
          %v659 = vld [vmem:[#allocation8 + $0x520] sm:$0xff]
          %v660 = vld [vmem:[#allocation8 + $0x528] sm:$0xff]
          %v661 = vld [vmem:[#allocation8 + $0x530] sm:$0xff]
          %v662 = vld [vmem:[#allocation8 + $0x538] sm:$0xff]
          %v663 = vld [vmem:[#allocation8 + $0x540] sm:$0xff]
          %v664 = vld [vmem:[#allocation8 + $0x548] sm:$0xff]
          %v665 = vld [vmem:[#allocation8 + $0x550] sm:$0xff]
          %v666 = vld [vmem:[#allocation8 + $0x558] sm:$0xff]
          %v667 = vld [vmem:[#allocation8 + $0x560] sm:$0xff]
          %v668 = vld [vmem:[#allocation8 + $0x568] sm:$0xff]
          %v669 = vld [vmem:[#allocation8 + $0x570] sm:$0xff]
          %v670 = vld [vmem:[#allocation8 + $0x578] sm:$0xff]
          %v671 = vld [vmem:[#allocation8 + $0x580] sm:$0xff]
          %v672 = vld [vmem:[#allocation8 + $0x588] sm:$0xff]
          %v673 = vld [vmem:[#allocation8 + $0x590] sm:$0xff]
          %v674 = vld [vmem:[#allocation8 + $0x598] sm:$0xff]
          %v675 = vld [vmem:[#allocation8 + $0x5a0] sm:$0xff]
          %v676 = vld [vmem:[#allocation8 + $0x5a8] sm:$0xff]
          %v677 = vld [vmem:[#allocation8 + $0x5b0] sm:$0xff]
          %v678 = vld [vmem:[#allocation8 + $0x5b8] sm:$0xff]
          %v679 = vld [vmem:[#allocation8 + $0x5c0] sm:$0xff]
          %v680 = vld [vmem:[#allocation8 + $0x5c8] sm:$0xff]
          %v681 = vld [vmem:[#allocation8 + $0x5d0] sm:$0xff]
          %v682 = vld [vmem:[#allocation8 + $0x5d8] sm:$0xff]
          %v683 = vld [vmem:[#allocation8 + $0x5e0] sm:$0xff]
          %v684 = vld [vmem:[#allocation8 + $0x5e8] sm:$0xff]
          %v685 = vld [vmem:[#allocation8 + $0x5f0] sm:$0xff]
          %v686 = vld [vmem:[#allocation8 + $0x5f8] sm:$0xff]
          %v687 = vld [vmem:[#allocation8 + $0x600] sm:$0xff]
          %v688 = vld [vmem:[#allocation8 + $0x608] sm:$0xff]
          %v689 = vld [vmem:[#allocation8 + $0x610] sm:$0xff]
          %v690 = vld [vmem:[#allocation8 + $0x618] sm:$0xff]
          %v691 = vld [vmem:[#allocation8 + $0x620] sm:$0xff]
          %v692 = vld [vmem:[#allocation8 + $0x628] sm:$0xff]
          %v693 = vld [vmem:[#allocation8 + $0x630] sm:$0xff]
          %v694 = vld [vmem:[#allocation8 + $0x638] sm:$0xff]
          %v695 = vld [vmem:[#allocation8 + $0x640] sm:$0xff]
          %v696 = vld [vmem:[#allocation8 + $0x648] sm:$0xff]
          %v697 = vld [vmem:[#allocation8 + $0x650] sm:$0xff]
          %v698 = vld [vmem:[#allocation8 + $0x658] sm:$0xff]
          %v699 = vld [vmem:[#allocation8 + $0x660] sm:$0xff]
          %v700 = vld [vmem:[#allocation8 + $0x668] sm:$0xff]
          %v701 = vld [vmem:[#allocation8 + $0x670] sm:$0xff]
          %v702 = vld [vmem:[#allocation8 + $0x678] sm:$0xff]
          %v703 = vld [vmem:[#allocation8 + $0x680] sm:$0xff]
          %v704 = vld [vmem:[#allocation8 + $0x688] sm:$0xff]
          %v705 = vld [vmem:[#allocation8 + $0x690] sm:$0xff]
          %v706 = vld [vmem:[#allocation8 + $0x698] sm:$0xff]
          %v707 = vld [vmem:[#allocation8 + $0x6a0] sm:$0xff]
          %v708 = vld [vmem:[#allocation8 + $0x6a8] sm:$0xff]
          %v709 = vld [vmem:[#allocation8 + $0x6b0] sm:$0xff]
          %v710 = vld [vmem:[#allocation8 + $0x6b8] sm:$0xff]
          %v711 = vld [vmem:[#allocation8 + $0x6c0] sm:$0xff]
          %v712 = vld [vmem:[#allocation8 + $0x6c8] sm:$0xff]
          %v713 = vld [vmem:[#allocation8 + $0x6d0] sm:$0xff]
          %v714 = vld [vmem:[#allocation8 + $0x6d8] sm:$0xff]
          %v715 = vld [vmem:[#allocation8 + $0x6e0] sm:$0xff]
          %v716 = vld [vmem:[#allocation8 + $0x6e8] sm:$0xff]
          %v717 = vld [vmem:[#allocation8 + $0x6f0] sm:$0xff]
          %v718 = vld [vmem:[#allocation8 + $0x6f8] sm:$0xff]
          %v719 = vld [vmem:[#allocation8 + $0x700] sm:$0xff]
          %v720 = vld [vmem:[#allocation8 + $0x708] sm:$0xff]
          %v721 = vld [vmem:[#allocation8 + $0x710] sm:$0xff]
          %v722 = vld [vmem:[#allocation8 + $0x718] sm:$0xff]
          %v723 = vld [vmem:[#allocation8 + $0x720] sm:$0xff]
          %v724 = vld [vmem:[#allocation8 + $0x728] sm:$0xff]
          %v725 = vld [vmem:[#allocation8 + $0x730] sm:$0xff]
          %v726 = vld [vmem:[#allocation8 + $0x738] sm:$0xff]
          %v727 = vld [vmem:[#allocation8 + $0x740] sm:$0xff]
          %v728 = vld [vmem:[#allocation8 + $0x748] sm:$0xff]
          %v729 = vld [vmem:[#allocation8 + $0x750] sm:$0xff]
          %v730 = vld [vmem:[#allocation8 + $0x758] sm:$0xff]
          %v731 = vld [vmem:[#allocation8 + $0x760] sm:$0xff]
          %v732 = vld [vmem:[#allocation8 + $0x768] sm:$0xff]
          %v733 = vld [vmem:[#allocation8 + $0x770] sm:$0xff]
          %v734 = vld [vmem:[#allocation8 + $0x778] sm:$0xff]
          %v735 = vld [vmem:[#allocation8 + $0x780] sm:$0xff]
          %v736 = vld [vmem:[#allocation8 + $0x788] sm:$0xff]
          %v737 = vld [vmem:[#allocation8 + $0x790] sm:$0xff]
          %v738 = vld [vmem:[#allocation8 + $0x798] sm:$0xff]
          %v739 = vld [vmem:[#allocation8 + $0x7a0] sm:$0xff]
          %v740 = vld [vmem:[#allocation8 + $0x7a8] sm:$0xff]
          %v741 = vld [vmem:[#allocation8 + $0x7b0] sm:$0xff]
          %v742 = vld [vmem:[#allocation8 + $0x7b8] sm:$0xff]
          %v743 = vld [vmem:[#allocation8 + $0x7c0] sm:$0xff]
          %v744 = vld [vmem:[#allocation8 + $0x7c8] sm:$0xff]
          %v745 = vld [vmem:[#allocation8 + $0x7d0] sm:$0xff]
          %v746 = vld [vmem:[#allocation8 + $0x7d8] sm:$0xff]
          %v747 = vld [vmem:[#allocation8 + $0x7e0] sm:$0xff]
          %v748 = vld [vmem:[#allocation8 + $0x7e8] sm:$0xff]
          %v749 = vld [vmem:[#allocation8 + $0x7f0] sm:$0xff]
          %v750 = vld [vmem:[#allocation8 + $0x7f8] sm:$0xff]
          %v751 = vld [vmem:[#allocation8 + $0x800] sm:$0xff]
          %v752 = vld [vmem:[#allocation8 + $0x808] sm:$0xff]
          %v753 = vld [vmem:[#allocation8 + $0x810] sm:$0xff]
          %v754 = vld [vmem:[#allocation8 + $0x818] sm:$0xff]
          %v755 = vld [vmem:[#allocation8 + $0x820] sm:$0xff]
          %v756 = vld [vmem:[#allocation8 + $0x828] sm:$0xff]
          %v757 = vld [vmem:[#allocation8 + $0x830] sm:$0xff]
          %v758 = vld [vmem:[#allocation8 + $0x838] sm:$0xff]
          %v759 = vld [vmem:[#allocation8 + $0x840] sm:$0xff]
          %v760 = vld [vmem:[#allocation8 + $0x848] sm:$0xff]
          %v761 = vld [vmem:[#allocation8 + $0x850] sm:$0xff]
          %v762 = vld [vmem:[#allocation8 + $0x858] sm:$0xff]
          %v763 = vld [vmem:[#allocation8 + $0x860] sm:$0xff]
          %v764 = vld [vmem:[#allocation8 + $0x868] sm:$0xff]
          %v765 = vld [vmem:[#allocation8 + $0x870] sm:$0xff]
          %v766 = vld [vmem:[#allocation8 + $0x878] sm:$0xff]
          %v767 = vld [vmem:[#allocation8 + $0x880] sm:$0xff]
          %v768 = vld [vmem:[#allocation8 + $0x888] sm:$0xff]
          %v769 = vld [vmem:[#allocation8 + $0x890] sm:$0xff]
          %v770 = vld [vmem:[#allocation8 + $0x898] sm:$0xff]
          %v771 = vld [vmem:[#allocation8 + $0x8a0] sm:$0xff]
          %v772 = vld [vmem:[#allocation8 + $0x8a8] sm:$0xff]
          %v773 = vld [vmem:[#allocation8 + $0x8b0] sm:$0xff]
          %v774 = vld [vmem:[#allocation8 + $0x8b8] sm:$0xff]
          %v775 = vld [vmem:[#allocation8 + $0x8c0] sm:$0xff]
          %v776 = vld [vmem:[#allocation8 + $0x8c8] sm:$0xff]
          %v777 = vld [vmem:[#allocation8 + $0x8d0] sm:$0xff]
          %v778 = vld [vmem:[#allocation8 + $0x8d8] sm:$0xff]
          %v779 = vld [vmem:[#allocation8 + $0x8e0] sm:$0xff]
          %v780 = vld [vmem:[#allocation8 + $0x8e8] sm:$0xff]
          %v781 = vld [vmem:[#allocation8 + $0x8f0] sm:$0xff]
          %v782 = vld [vmem:[#allocation8 + $0x8f8] sm:$0xff]
          %v783 = vld [vmem:[#allocation8 + $0x900] sm:$0xff]
          %v784 = vld [vmem:[#allocation8 + $0x908] sm:$0xff]
          %v785 = vld [vmem:[#allocation8 + $0x910] sm:$0xff]
          %v786 = vld [vmem:[#allocation8 + $0x918] sm:$0xff]
          %v787 = vld [vmem:[#allocation8 + $0x920] sm:$0xff]
          %v788 = vld [vmem:[#allocation8 + $0x928] sm:$0xff]
          %v789 = vld [vmem:[#allocation8 + $0x930] sm:$0xff]
          %v790 = vld [vmem:[#allocation8 + $0x938] sm:$0xff]
          %v791 = vld [vmem:[#allocation8 + $0x940] sm:$0xff]
          %v792 = vld [vmem:[#allocation8 + $0x948] sm:$0xff]
          %v793 = vld [vmem:[#allocation8 + $0x950] sm:$0xff]
          %v794 = vld [vmem:[#allocation8 + $0x958] sm:$0xff]
          %v795 = vld [vmem:[#allocation8 + $0x960] sm:$0xff]
          %v796 = vld [vmem:[#allocation8 + $0x968] sm:$0xff]
          %v797 = vld [vmem:[#allocation8 + $0x970] sm:$0xff]
          %v798 = vld [vmem:[#allocation8 + $0x978] sm:$0xff]
          %v799 = vld [vmem:[#allocation8 + $0x980] sm:$0xff]
          %v800 = vld [vmem:[#allocation8 + $0x988] sm:$0xff]
          %v801 = vld [vmem:[#allocation8 + $0x990] sm:$0xff]
          %v802 = vld [vmem:[#allocation8 + $0x998] sm:$0xff]
          %v803 = vld [vmem:[#allocation8 + $0x9a0] sm:$0xff]
          %v804 = vld [vmem:[#allocation8 + $0x9a8] sm:$0xff]
          %v805 = vld [vmem:[#allocation8 + $0x9b0] sm:$0xff]
          %v806 = vld [vmem:[#allocation8 + $0x9b8] sm:$0xff]
          %v807 = vld [vmem:[#allocation8 + $0x9c0] sm:$0xff]
          %v808 = vld [vmem:[#allocation8 + $0x9c8] sm:$0xff]
          %v809 = vld [vmem:[#allocation8 + $0x9d0] sm:$0xff]
          %v810 = vld [vmem:[#allocation8 + $0x9d8] sm:$0xff]
          %v811 = vld [vmem:[#allocation8 + $0x9e0] sm:$0xff]
          %v812 = vld [vmem:[#allocation8 + $0x9e8] sm:$0xff]
          %v813 = vld [vmem:[#allocation8 + $0x9f0] sm:$0xff]
          %v814 = vld [vmem:[#allocation8 + $0x9f8] sm:$0xff]
          %v815 = vld [vmem:[#allocation8 + $0xa00] sm:$0xff]
          %v816 = vld [vmem:[#allocation8 + $0xa08] sm:$0xff]
          %v817 = vld [vmem:[#allocation8 + $0xa10] sm:$0xff]
          %v818 = vld [vmem:[#allocation8 + $0xa18] sm:$0xff]
          %v819 = vld [vmem:[#allocation8 + $0xa20] sm:$0xff]
          %v820 = vld [vmem:[#allocation8 + $0xa28] sm:$0xff]
          %v821 = vld [vmem:[#allocation8 + $0xa30] sm:$0xff]
          %v822 = vld [vmem:[#allocation8 + $0xa38] sm:$0xff]
          %v823 = vld [vmem:[#allocation8 + $0xa40] sm:$0xff]
          %v824 = vld [vmem:[#allocation8 + $0xa48] sm:$0xff]
          %v825 = vld [vmem:[#allocation8 + $0xa50] sm:$0xff]
          %v826 = vld [vmem:[#allocation8 + $0xa58] sm:$0xff]
          %v827 = vld [vmem:[#allocation8 + $0xa60] sm:$0xff]
          %v828 = vld [vmem:[#allocation8 + $0xa68] sm:$0xff]
          %v829 = vld [vmem:[#allocation8 + $0xa70] sm:$0xff]
          %v830 = vld [vmem:[#allocation8 + $0xa78] sm:$0xff]
          %v831 = vld [vmem:[#allocation8 + $0xa80] sm:$0xff]
          %v832 = vld [vmem:[#allocation8 + $0xa88] sm:$0xff]
          %v833 = vld [vmem:[#allocation8 + $0xa90] sm:$0xff]
          %v834 = vld [vmem:[#allocation8 + $0xa98] sm:$0xff]
          %v835 = vld [vmem:[#allocation8 + $0xaa0] sm:$0xff]
          %v836 = vld [vmem:[#allocation8 + $0xaa8] sm:$0xff]
          %v837 = vld [vmem:[#allocation8 + $0xab0] sm:$0xff]
          %v838 = vld [vmem:[#allocation8 + $0xab8] sm:$0xff]
          %v839 = vld [vmem:[#allocation8 + $0xac0] sm:$0xff]
          %v840 = vld [vmem:[#allocation8 + $0xac8] sm:$0xff]
          %v841 = vld [vmem:[#allocation8 + $0xad0] sm:$0xff]
          %v842 = vld [vmem:[#allocation8 + $0xad8] sm:$0xff]
          %v843 = vld [vmem:[#allocation8 + $0xae0] sm:$0xff]
          %v844 = vld [vmem:[#allocation8 + $0xae8] sm:$0xff]
          %v845 = vld [vmem:[#allocation8 + $0xaf0] sm:$0xff]
          %v846 = vld [vmem:[#allocation8 + $0xaf8] sm:$0xff]
          %v847 = vld [vmem:[#allocation8 + $0xb00] sm:$0xff]
          %v848 = vld [vmem:[#allocation8 + $0xb08] sm:$0xff]
          %v849 = vld [vmem:[#allocation8 + $0xb10] sm:$0xff]
          %v850 = vld [vmem:[#allocation8 + $0xb18] sm:$0xff]
          %v851 = vld [vmem:[#allocation8 + $0xb20] sm:$0xff]
          %v852 = vld [vmem:[#allocation8 + $0xb28] sm:$0xff]
          %v853 = vld [vmem:[#allocation8 + $0xb30] sm:$0xff]
          %v854 = vld [vmem:[#allocation8 + $0xb38] sm:$0xff]
          %v855 = vld [vmem:[#allocation8 + $0xb40] sm:$0xff]
          %v856 = vld [vmem:[#allocation8 + $0xb48] sm:$0xff]
          %v857 = vld [vmem:[#allocation8 + $0xb50] sm:$0xff]
          %v858 = vld [vmem:[#allocation8 + $0xb58] sm:$0xff]
          %v859 = vld [vmem:[#allocation8 + $0xb60] sm:$0xff]
          %v860 = vld [vmem:[#allocation8 + $0xb68] sm:$0xff]
          %v861 = vld [vmem:[#allocation8 + $0xb70] sm:$0xff]
          %v862 = vld [vmem:[#allocation8 + $0xb78] sm:$0xff]
          %v863 = vld [vmem:[#allocation8 + $0xb80] sm:$0xff]
          %v864 = vld [vmem:[#allocation8 + $0xb88] sm:$0xff]
          %v865 = vld [vmem:[#allocation8 + $0xb90] sm:$0xff]
          %v866 = vld [vmem:[#allocation8 + $0xb98] sm:$0xff]
          %v867 = vld [vmem:[#allocation8 + $0xba0] sm:$0xff]
          %v868 = vld [vmem:[#allocation8 + $0xba8] sm:$0xff]
          %v869 = vld [vmem:[#allocation8 + $0xbb0] sm:$0xff]
          %v870 = vld [vmem:[#allocation8 + $0xbb8] sm:$0xff]
          %v871 = vld [vmem:[#allocation8 + $0xbc0] sm:$0xff]
          %v872 = vld [vmem:[#allocation8 + $0xbc8] sm:$0xff]
          %v873 = vld [vmem:[#allocation8 + $0xbd0] sm:$0xff]
          %v874 = vld [vmem:[#allocation8 + $0xbd8] sm:$0xff]
          %v875 = vld [vmem:[#allocation8 + $0xbe0] sm:$0xff]
          %v876 = vld [vmem:[#allocation8 + $0xbe8] sm:$0xff]
          %v877 = vld [vmem:[#allocation8 + $0xbf0] sm:$0xff]
          %v878 = vld [vmem:[#allocation8 + $0xbf8] sm:$0xff]
          %v879 = vld [vmem:[#allocation8 + $0xc00] sm:$0xff]
          %v880 = vld [vmem:[#allocation8 + $0xc08] sm:$0xff]
          %v881 = vld [vmem:[#allocation8 + $0xc10] sm:$0xff]
          %v882 = vld [vmem:[#allocation8 + $0xc18] sm:$0xff]
          %v883 = vld [vmem:[#allocation8 + $0xc20] sm:$0xff]
          %v884 = vld [vmem:[#allocation8 + $0xc28] sm:$0xff]
          %v885 = vld [vmem:[#allocation8 + $0xc30] sm:$0xff]
          %v886 = vld [vmem:[#allocation8 + $0xc38] sm:$0xff]
          %v887 = vld [vmem:[#allocation10] sm:$0xf]
          %v889 = vlaneseq
          %v890 = vshrl.u32 %v889, 7
          %v891 = vsub.s32 0, %v890
          %v892 = vrot.slane %v887, %v891
          %v893 = vlaneseq
          %v894 = vshrl.u32 %v893, 7
          %v895 = vsub.s32 1, %v894
          %v896 = vrot.slane %v887, %v895
          %v897 = vlaneseq
          %v898 = vshrl.u32 %v897, 7
          %v899 = vsub.s32 2, %v898
          %v900 = vrot.slane %v887, %v899
          %v901 = vlaneseq
          %v902 = vshrl.u32 %v901, 7
          %v903 = vsub.s32 3, %v902
          %v904 = vrot.slane %v887, %v903
          %vm909 = vcmask 130048
          %v911 = vsel %vm909, %v494, 0
          %913 = vmatprep.subr.mxu0 %v496
          %914 = vmatpush1.msra.mxu0 %v495
          %915 = vmatprep.subr.mxu0 %v500
          %916 = vmatpush1.msra.mxu0 %v499
          %917 = vmatprep.subr.mxu0 %v504
          %918 = vmatpush1.msra.mxu0 %v503
          %919 = vmatprep.subr.mxu0 %v508
          %920 = vmatpush1.msra.mxu0 %v507
          %921 = vmatprep.subr.mxu0 %v512
          %922 = vmatpush1.msra.mxu0 %v511
          %923 = vmatprep.subr.mxu0 %v516
          %924 = vmatpush1.msra.mxu0 %v515
          %925 = vmatprep.subr.mxu0 %v520
          %926 = vmatpush1.msra.mxu0 %v519
          %927 = vmatprep.subr.mxu0 %v524
          %928 = vmatpush1.msra.mxu0 %v523
          %929 = vmatprep.subr.mxu0 %v528
          %930 = vmatpush1.msra.mxu0 %v527
          %931 = vmatprep.subr.mxu0 %v532
          %932 = vmatpush1.msra.mxu0 %v531
          %933 = vmatprep.subr.mxu0 %v536
          %934 = vmatpush1.msra.mxu0 %v535
          %935 = vmatprep.subr.mxu0 %v540
          %936 = vmatpush1.msra.mxu0 %v539
          %937 = vmatprep.subr.mxu0 %v544
          %938 = vmatpush1.msra.mxu0 %v543
          %939 = vmatprep.subr.mxu0 %v548
          %940 = vmatpush1.msra.mxu0 %v547
          %941 = vmatprep.subr.mxu0 %v552
          %942 = vmatpush1.msra.mxu0 %v551
          %943 = vmatprep.subr.mxu0 %v556
          %944 = vmatpush1.msra.mxu0 %v555
          %945 = vmatprep.subr.mxu0 %v560
          %946 = vmatpush1.msra.mxu0 %v559
          %947 = vmatprep.subr.mxu0 %v564
          %948 = vmatpush1.msra.mxu0 %v563
          %949 = vmatprep.subr.mxu0 %v568
          %950 = vmatpush1.msra.mxu0 %v567
          %951 = vmatprep.subr.mxu0 %v572
          %952 = vmatpush1.msra.mxu0 %v571
          %953 = vmatprep.subr.mxu0 %v576
          %954 = vmatpush1.msra.mxu0 %v575
          %955 = vmatprep.subr.mxu0 %v580
          %956 = vmatpush1.msra.mxu0 %v579
          %957 = vmatprep.subr.mxu0 %v584
          %958 = vmatpush1.msra.mxu0 %v583
          %959 = vmatprep.subr.mxu0 %v588
          %960 = vmatpush1.msra.mxu0 %v587
          %961 = vmatprep.subr.mxu0 %v592
          %962 = vmatpush1.msra.mxu0 %v591
          %963 = vmatprep.subr.mxu0 %v596
          %964 = vmatpush1.msra.mxu0 %v595
          %965 = vmatprep.subr.mxu0 %v600
          %966 = vmatpush1.msra.mxu0 %v599
          %967 = vmatprep.subr.mxu0 %v604
          %968 = vmatpush1.msra.mxu0 %v603
          %969 = vmatprep.subr.mxu0 %v608
          %970 = vmatpush1.msra.mxu0 %v607
          %971 = vmatprep.subr.mxu0 %v612
          %972 = vmatpush1.msra.mxu0 %v611
          %973 = vmatprep.subr.mxu0 %v616
          %974 = vmatpush1.msra.mxu0 %v615
          %975 = vmatprep.subr.mxu0 %v620
          %976 = vmatpush1.msra.mxu0 %v619
          %977 = vmatprep.mubr.f32.mxu0 %v489
          %978 = vmatmul.mubr.f32.gmra.mrb[0].mxu0 %v488
          %v979 = vpop.f32.mrb[0].mxu0
          %v980 = vadd.f32 %v892, %v979
          %v981 = vpop.f32.mrb[0].mxu0
          %v982 = vadd.f32 %v896, %v981
          %983 = vdwg.mxu0
          %984 = vmatprep.subr.mxu0 %v624
          %985 = vmatpush1.msra.mxu0 %v623
          %986 = vmatprep.subr.mxu0 %v628
          %987 = vmatpush1.msra.mxu0 %v627
          %988 = vmatprep.subr.mxu0 %v632
          %989 = vmatpush1.msra.mxu0 %v631
          %990 = vmatprep.subr.mxu0 %v636
          %991 = vmatpush1.msra.mxu0 %v635
          %992 = vmatprep.subr.mxu0 %v640
          %993 = vmatpush1.msra.mxu0 %v639
          %994 = vmatprep.subr.mxu0 %v644
          %995 = vmatpush1.msra.mxu0 %v643
          %996 = vmatprep.subr.mxu0 %v648
          %997 = vmatpush1.msra.mxu0 %v647
          %998 = vmatprep.subr.mxu0 %v652
          %999 = vmatpush1.msra.mxu0 %v651
          %1000 = vmatprep.subr.mxu0 %v656
          %1001 = vmatpush1.msra.mxu0 %v655
          %1002 = vmatprep.subr.mxu0 %v660
          %1003 = vmatpush1.msra.mxu0 %v659
          %1004 = vmatprep.subr.mxu0 %v664
          %1005 = vmatpush1.msra.mxu0 %v663
          %1006 = vmatprep.subr.mxu0 %v668
          %1007 = vmatpush1.msra.mxu0 %v667
          %1008 = vmatprep.subr.mxu0 %v672
          %1009 = vmatpush1.msra.mxu0 %v671
          %1010 = vmatprep.subr.mxu0 %v676
          %1011 = vmatpush1.msra.mxu0 %v675
          %1012 = vmatprep.subr.mxu0 %v680
          %1013 = vmatpush1.msra.mxu0 %v679
          %1014 = vmatprep.subr.mxu0 %v684
          %1015 = vmatpush1.msra.mxu0 %v683
          %1016 = vmatprep.subr.mxu0 %v688
          %1017 = vmatpush1.msra.mxu0 %v687
          %1018 = vmatprep.subr.mxu0 %v692
          %1019 = vmatpush1.msra.mxu0 %v691
          %1020 = vmatprep.subr.mxu0 %v696
          %1021 = vmatpush1.msra.mxu0 %v695
          %1022 = vmatprep.subr.mxu0 %v700
          %1023 = vmatpush1.msra.mxu0 %v699
          %1024 = vmatprep.subr.mxu0 %v704
          %1025 = vmatpush1.msra.mxu0 %v703
          %1026 = vmatprep.subr.mxu0 %v708
          %1027 = vmatpush1.msra.mxu0 %v707
          %1028 = vmatprep.subr.mxu0 %v712
          %1029 = vmatpush1.msra.mxu0 %v711
          %1030 = vmatprep.subr.mxu0 %v716
          %1031 = vmatpush1.msra.mxu0 %v715
          %1032 = vmatprep.subr.mxu0 %v720
          %1033 = vmatpush1.msra.mxu0 %v719
          %1034 = vmatprep.subr.mxu0 %v724
          %1035 = vmatpush1.msra.mxu0 %v723
          %1036 = vmatprep.subr.mxu0 %v728
          %1037 = vmatpush1.msra.mxu0 %v727
          %1038 = vmatprep.subr.mxu0 %v732
          %1039 = vmatpush1.msra.mxu0 %v731
          %1040 = vmatprep.subr.mxu0 %v736
          %1041 = vmatpush1.msra.mxu0 %v735
          %1042 = vmatprep.subr.mxu0 %v740
          %1043 = vmatpush1.msra.mxu0 %v739
          %1044 = vmatprep.subr.mxu0 %v744
          %1045 = vmatpush1.msra.mxu0 %v743
          %1046 = vmatprep.subr.mxu0 %v748
          %1047 = vmatpush1.msra.mxu0 %v747
          %1048 = vmatprep.mubr.f32.mxu0 %v491
          %1049 = vmatmul.mubr.f32.gmra.mrb[0].mxu0 %v490
          %v1050 = vpop.f32.mrb[0].mxu0
          %v1051 = vadd.f32 %v980, %v1050
          %v1052 = vpop.f32.mrb[0].mxu0
          %v1053 = vadd.f32 %v982, %v1052
          %1054 = vdwg.mxu0
          %1055 = vmatprep.subr.mxu0 %v752
          %1056 = vmatpush1.msra.mxu0 %v751
          %1057 = vmatprep.subr.mxu0 %v756
          %1058 = vmatpush1.msra.mxu0 %v755
          %1059 = vmatprep.subr.mxu0 %v760
          %1060 = vmatpush1.msra.mxu0 %v759
          %1061 = vmatprep.subr.mxu0 %v764
          %1062 = vmatpush1.msra.mxu0 %v763
          %1063 = vmatprep.subr.mxu0 %v768
          %1064 = vmatpush1.msra.mxu0 %v767
          %1065 = vmatprep.subr.mxu0 %v772
          %1066 = vmatpush1.msra.mxu0 %v771
          %1067 = vmatprep.subr.mxu0 %v776
          %1068 = vmatpush1.msra.mxu0 %v775
          %1069 = vmatprep.subr.mxu0 %v780
          %1070 = vmatpush1.msra.mxu0 %v779
          %1071 = vmatprep.subr.mxu0 %v784
          %1072 = vmatpush1.msra.mxu0 %v783
          %1073 = vmatprep.subr.mxu0 %v788
          %1074 = vmatpush1.msra.mxu0 %v787
          %1075 = vmatprep.subr.mxu0 %v792
          %1076 = vmatpush1.msra.mxu0 %v791
          %1077 = vmatprep.subr.mxu0 %v796
          %1078 = vmatpush1.msra.mxu0 %v795
          %1079 = vmatprep.subr.mxu0 %v800
          %1080 = vmatpush1.msra.mxu0 %v799
          %1081 = vmatprep.subr.mxu0 %v804
          %1082 = vmatpush1.msra.mxu0 %v803
          %1083 = vmatprep.subr.mxu0 %v808
          %1084 = vmatpush1.msra.mxu0 %v807
          %1085 = vmatprep.subr.mxu0 %v812
          %1086 = vmatpush1.msra.mxu0 %v811
          %1087 = vmatprep.subr.mxu0 %v816
          %1088 = vmatpush1.msra.mxu0 %v815
          %1089 = vmatprep.subr.mxu0 %v820
          %1090 = vmatpush1.msra.mxu0 %v819
          %1091 = vmatprep.subr.mxu0 %v824
          %1092 = vmatpush1.msra.mxu0 %v823
          %1093 = vmatprep.subr.mxu0 %v828
          %1094 = vmatpush1.msra.mxu0 %v827
          %1095 = vmatprep.subr.mxu0 %v832
          %1096 = vmatpush1.msra.mxu0 %v831
          %1097 = vmatprep.subr.mxu0 %v836
          %1098 = vmatpush1.msra.mxu0 %v835
          %1099 = vmatprep.subr.mxu0 %v840
          %1100 = vmatpush1.msra.mxu0 %v839
          %1101 = vmatprep.subr.mxu0 %v844
          %1102 = vmatpush1.msra.mxu0 %v843
          %1103 = vmatprep.subr.mxu0 %v848
          %1104 = vmatpush1.msra.mxu0 %v847
          %1105 = vmatprep.subr.mxu0 %v852
          %1106 = vmatpush1.msra.mxu0 %v851
          %1107 = vmatprep.subr.mxu0 %v856
          %1108 = vmatpush1.msra.mxu0 %v855
          %1109 = vmatprep.subr.mxu0 %v860
          %1110 = vmatpush1.msra.mxu0 %v859
          %1111 = vmatprep.subr.mxu0 %v864
          %1112 = vmatpush1.msra.mxu0 %v863
          %1113 = vmatprep.subr.mxu0 %v868
          %1114 = vmatpush1.msra.mxu0 %v867
          %1115 = vmatprep.subr.mxu0 %v872
          %1116 = vmatpush1.msra.mxu0 %v871
          %1117 = vmatprep.subr.mxu0 %v876
          %1118 = vmatpush1.msra.mxu0 %v875
          %1119 = vmatprep.mubr.f32.mxu0 %v493
          %1120 = vmatmul.mubr.f32.gmra.mrb[0].mxu0 %v492
          %v1121 = vpop.f32.mrb[0].mxu0
          %v1122 = vadd.f32 %v1051, %v1121
          %v1123 = vpop.f32.mrb[0].mxu0
          %v1124 = vadd.f32 %v1053, %v1123
          %1125 = vdwg.mxu0
          %1126 = vmatprep.subr.mxu0 %v880
          %1127 = vmatpush1.msra.mxu0 %v879
          %1128 = vmatprep.subr.mxu0 %v884
          %1129 = vmatpush1.msra.mxu0 %v883
          %1130 = vmatprep.subr.mxu0 0.0
          %1131 = vmatpush1.msra.mxu0 0.0
          %1132 = vmatprep.subr.mxu0 0.0
          %1133 = vmatpush1.msra.mxu0 0.0
          %1134 = vmatprep.subr.mxu0 0.0
          %1135 = vmatpush1.msra.mxu0 0.0
          %1136 = vmatprep.subr.mxu0 0.0
          %1137 = vmatpush1.msra.mxu0 0.0
          %1138 = vmatprep.subr.mxu0 0.0
          %1139 = vmatpush1.msra.mxu0 0.0
          %1140 = vmatprep.subr.mxu0 0.0
          %1141 = vmatpush1.msra.mxu0 0.0
          %1142 = vmatprep.subr.mxu0 0.0
          %1143 = vmatpush1.msra.mxu0 0.0
          %1144 = vmatprep.subr.mxu0 0.0
          %1145 = vmatpush1.msra.mxu0 0.0
          %1146 = vmatprep.subr.mxu0 0.0
          %1147 = vmatpush1.msra.mxu0 0.0
          %1148 = vmatprep.subr.mxu0 0.0
          %1149 = vmatpush1.msra.mxu0 0.0
          %1150 = vmatprep.subr.mxu0 0.0
          %1151 = vmatpush1.msra.mxu0 0.0
          %1152 = vmatprep.subr.mxu0 0.0
          %1153 = vmatpush1.msra.mxu0 0.0
          %1154 = vmatprep.subr.mxu0 0.0
          %1155 = vmatpush1.msra.mxu0 0.0
          %1156 = vmatprep.subr.mxu0 0.0
          %1157 = vmatpush1.msra.mxu0 0.0
          %1158 = vmatprep.subr.mxu0 0.0
          %1159 = vmatpush1.msra.mxu0 0.0
          %1160 = vmatprep.subr.mxu0 0.0
          %1161 = vmatpush1.msra.mxu0 0.0
          %1162 = vmatprep.subr.mxu0 0.0
          %1163 = vmatpush1.msra.mxu0 0.0
          %1164 = vmatprep.subr.mxu0 0.0
          %1165 = vmatpush1.msra.mxu0 0.0
          %1166 = vmatprep.subr.mxu0 0.0
          %1167 = vmatpush1.msra.mxu0 0.0
          %1168 = vmatprep.subr.mxu0 0.0
          %1169 = vmatpush1.msra.mxu0 0.0
          %1170 = vmatprep.subr.mxu0 0.0
          %1171 = vmatpush1.msra.mxu0 0.0
          %1172 = vmatprep.subr.mxu0 0.0
          %1173 = vmatpush1.msra.mxu0 0.0
          %1174 = vmatprep.subr.mxu0 0.0
          %1175 = vmatpush1.msra.mxu0 0.0
          %1176 = vmatprep.subr.mxu0 0.0
          %1177 = vmatpush1.msra.mxu0 0.0
          %1178 = vmatprep.subr.mxu0 0.0
          %1179 = vmatpush1.msra.mxu0 0.0
          %1180 = vmatprep.subr.mxu0 0.0
          %1181 = vmatpush1.msra.mxu0 0.0
          %1182 = vmatprep.subr.mxu0 0.0
          %1183 = vmatpush1.msra.mxu0 0.0
          %1184 = vmatprep.subr.mxu0 0.0
          %1185 = vmatpush1.msra.mxu0 0.0
          %1186 = vmatprep.subr.mxu0 0.0
          %1187 = vmatpush1.msra.mxu0 0.0
          %1188 = vmatprep.subr.mxu0 0.0
          %1189 = vmatpush1.msra.mxu0 0.0
          %1190 = vmatprep.mubr.f32.mxu0 0.0
          %1191 = vmatmul.mubr.f32.gmra.mrb[0].mxu0 %v911
          %v1192 = vpop.f32.mrb[0].mxu0
          %v1193 = vadd.f32 %v1122, %v1192
          %v1194 = vpop.f32.mrb[0].mxu0
          %v1195 = vadd.f32 %v1124, %v1194
          %1196 = vdwg.mxu0
          %1197 = vmatprep.subr.mxu0 %v498
          %1198 = vmatpush1.msra.mxu0 %v497
          %1199 = vmatprep.subr.mxu0 %v502
          %1200 = vmatpush1.msra.mxu0 %v501
          %1201 = vmatprep.subr.mxu0 %v506
          %1202 = vmatpush1.msra.mxu0 %v505
          %1203 = vmatprep.subr.mxu0 %v510
          %1204 = vmatpush1.msra.mxu0 %v509
          %1205 = vmatprep.subr.mxu0 %v514
          %1206 = vmatpush1.msra.mxu0 %v513
          %1207 = vmatprep.subr.mxu0 %v518
          %1208 = vmatpush1.msra.mxu0 %v517
          %1209 = vmatprep.subr.mxu0 %v522
          %1210 = vmatpush1.msra.mxu0 %v521
          %1211 = vmatprep.subr.mxu0 %v526
          %1212 = vmatpush1.msra.mxu0 %v525
          %1213 = vmatprep.subr.mxu0 %v530
          %1214 = vmatpush1.msra.mxu0 %v529
          %1215 = vmatprep.subr.mxu0 %v534
          %1216 = vmatpush1.msra.mxu0 %v533
          %1217 = vmatprep.subr.mxu0 %v538
          %1218 = vmatpush1.msra.mxu0 %v537
          %1219 = vmatprep.subr.mxu0 %v542
          %1220 = vmatpush1.msra.mxu0 %v541
          %1221 = vmatprep.subr.mxu0 %v546
          %1222 = vmatpush1.msra.mxu0 %v545
          %1223 = vmatprep.subr.mxu0 %v550
          %1224 = vmatpush1.msra.mxu0 %v549
          %1225 = vmatprep.subr.mxu0 %v554
          %1226 = vmatpush1.msra.mxu0 %v553
          %1227 = vmatprep.subr.mxu0 %v558
          %1228 = vmatpush1.msra.mxu0 %v557
          %1229 = vmatprep.subr.mxu0 %v562
          %1230 = vmatpush1.msra.mxu0 %v561
          %1231 = vmatprep.subr.mxu0 %v566
          %1232 = vmatpush1.msra.mxu0 %v565
          %1233 = vmatprep.subr.mxu0 %v570
          %1234 = vmatpush1.msra.mxu0 %v569
          %1235 = vmatprep.subr.mxu0 %v574
          %1236 = vmatpush1.msra.mxu0 %v573
          %1237 = vmatprep.subr.mxu0 %v578
          %1238 = vmatpush1.msra.mxu0 %v577
          %1239 = vmatprep.subr.mxu0 %v582
          %1240 = vmatpush1.msra.mxu0 %v581
          %1241 = vmatprep.subr.mxu0 %v586
          %1242 = vmatpush1.msra.mxu0 %v585
          %1243 = vmatprep.subr.mxu0 %v590
          %1244 = vmatpush1.msra.mxu0 %v589
          %1245 = vmatprep.subr.mxu0 %v594
          %1246 = vmatpush1.msra.mxu0 %v593
          %1247 = vmatprep.subr.mxu0 %v598
          %1248 = vmatpush1.msra.mxu0 %v597
          %1249 = vmatprep.subr.mxu0 %v602
          %1250 = vmatpush1.msra.mxu0 %v601
          %1251 = vmatprep.subr.mxu0 %v606
          %1252 = vmatpush1.msra.mxu0 %v605
          %1253 = vmatprep.subr.mxu0 %v610
          %1254 = vmatpush1.msra.mxu0 %v609
          %1255 = vmatprep.subr.mxu0 %v614
          %1256 = vmatpush1.msra.mxu0 %v613
          %1257 = vmatprep.subr.mxu0 %v618
          %1258 = vmatpush1.msra.mxu0 %v617
          %1259 = vmatprep.subr.mxu0 %v622
          %1260 = vmatpush1.msra.mxu0 %v621
          %1261 = vmatprep.mubr.f32.mxu0 %v489
          %1262 = vmatmul.mubr.f32.gmra.mrb[0].mxu0 %v488
          %v1263 = vpop.f32.mrb[0].mxu0
          %v1264 = vadd.f32 %v900, %v1263
          %v1265 = vpop.f32.mrb[0].mxu0
          %v1266 = vadd.f32 %v904, %v1265
          %1267 = vdwg.mxu0
          %1268 = vmatprep.subr.mxu0 %v626
          %1269 = vmatpush1.msra.mxu0 %v625
          %1270 = vmatprep.subr.mxu0 %v630
          %1271 = vmatpush1.msra.mxu0 %v629
          %1272 = vmatprep.subr.mxu0 %v634
          %1273 = vmatpush1.msra.mxu0 %v633
          %1274 = vmatprep.subr.mxu0 %v638
          %1275 = vmatpush1.msra.mxu0 %v637
          %1276 = vmatprep.subr.mxu0 %v642
          %1277 = vmatpush1.msra.mxu0 %v641
          %1278 = vmatprep.subr.mxu0 %v646
          %1279 = vmatpush1.msra.mxu0 %v645
          %1280 = vmatprep.subr.mxu0 %v650
          %1281 = vmatpush1.msra.mxu0 %v649
          %1282 = vmatprep.subr.mxu0 %v654
          %1283 = vmatpush1.msra.mxu0 %v653
          %1284 = vmatprep.subr.mxu0 %v658
          %1285 = vmatpush1.msra.mxu0 %v657
          %1286 = vmatprep.subr.mxu0 %v662
          %1287 = vmatpush1.msra.mxu0 %v661
          %1288 = vmatprep.subr.mxu0 %v666
          %1289 = vmatpush1.msra.mxu0 %v665
          %1290 = vmatprep.subr.mxu0 %v670
          %1291 = vmatpush1.msra.mxu0 %v669
          %1292 = vmatprep.subr.mxu0 %v674
          %1293 = vmatpush1.msra.mxu0 %v673
          %1294 = vmatprep.subr.mxu0 %v678
          %1295 = vmatpush1.msra.mxu0 %v677
          %1296 = vmatprep.subr.mxu0 %v682
          %1297 = vmatpush1.msra.mxu0 %v681
          %1298 = vmatprep.subr.mxu0 %v686
          %1299 = vmatpush1.msra.mxu0 %v685
          %1300 = vmatprep.subr.mxu0 %v690
          %1301 = vmatpush1.msra.mxu0 %v689
          %1302 = vmatprep.subr.mxu0 %v694
          %1303 = vmatpush1.msra.mxu0 %v693
          %1304 = vmatprep.subr.mxu0 %v698
          %1305 = vmatpush1.msra.mxu0 %v697
          %1306 = vmatprep.subr.mxu0 %v702
          %1307 = vmatpush1.msra.mxu0 %v701
          %1308 = vmatprep.subr.mxu0 %v706
          %1309 = vmatpush1.msra.mxu0 %v705
          %1310 = vmatprep.subr.mxu0 %v710
          %1311 = vmatpush1.msra.mxu0 %v709
          %1312 = vmatprep.subr.mxu0 %v714
          %1313 = vmatpush1.msra.mxu0 %v713
          %1314 = vmatprep.subr.mxu0 %v718
          %1315 = vmatpush1.msra.mxu0 %v717
          %1316 = vmatprep.subr.mxu0 %v722
          %1317 = vmatpush1.msra.mxu0 %v721
          %1318 = vmatprep.subr.mxu0 %v726
          %1319 = vmatpush1.msra.mxu0 %v725
          %1320 = vmatprep.subr.mxu0 %v730
          %1321 = vmatpush1.msra.mxu0 %v729
          %1322 = vmatprep.subr.mxu0 %v734
          %1323 = vmatpush1.msra.mxu0 %v733
          %1324 = vmatprep.subr.mxu0 %v738
          %1325 = vmatpush1.msra.mxu0 %v737
          %1326 = vmatprep.subr.mxu0 %v742
          %1327 = vmatpush1.msra.mxu0 %v741
          %1328 = vmatprep.subr.mxu0 %v746
          %1329 = vmatpush1.msra.mxu0 %v745
          %1330 = vmatprep.subr.mxu0 %v750
          %1331 = vmatpush1.msra.mxu0 %v749
          %1332 = vmatprep.mubr.f32.mxu0 %v491
          %1333 = vmatmul.mubr.f32.gmra.mrb[0].mxu0 %v490
          %v1334 = vpop.f32.mrb[0].mxu0
          %v1335 = vadd.f32 %v1264, %v1334
          %v1336 = vpop.f32.mrb[0].mxu0
          %v1337 = vadd.f32 %v1266, %v1336
          %1338 = vdwg.mxu0
          %1339 = vmatprep.subr.mxu0 %v754
          %1340 = vmatpush1.msra.mxu0 %v753
          %1341 = vmatprep.subr.mxu0 %v758
          %1342 = vmatpush1.msra.mxu0 %v757
          %1343 = vmatprep.subr.mxu0 %v762
          %1344 = vmatpush1.msra.mxu0 %v761
          %1345 = vmatprep.subr.mxu0 %v766
          %1346 = vmatpush1.msra.mxu0 %v765
          %1347 = vmatprep.subr.mxu0 %v770
          %1348 = vmatpush1.msra.mxu0 %v769
          %1349 = vmatprep.subr.mxu0 %v774
          %1350 = vmatpush1.msra.mxu0 %v773
          %1351 = vmatprep.subr.mxu0 %v778
          %1352 = vmatpush1.msra.mxu0 %v777
          %1353 = vmatprep.subr.mxu0 %v782
          %1354 = vmatpush1.msra.mxu0 %v781
          %1355 = vmatprep.subr.mxu0 %v786
          %1356 = vmatpush1.msra.mxu0 %v785
          %1357 = vmatprep.subr.mxu0 %v790
          %1358 = vmatpush1.msra.mxu0 %v789
          %1359 = vmatprep.subr.mxu0 %v794
          %1360 = vmatpush1.msra.mxu0 %v793
          %1361 = vmatprep.subr.mxu0 %v798
          %1362 = vmatpush1.msra.mxu0 %v797
          %1363 = vmatprep.subr.mxu0 %v802
          %1364 = vmatpush1.msra.mxu0 %v801
          %1365 = vmatprep.subr.mxu0 %v806
          %1366 = vmatpush1.msra.mxu0 %v805
          %1367 = vmatprep.subr.mxu0 %v810
          %1368 = vmatpush1.msra.mxu0 %v809
          %1369 = vmatprep.subr.mxu0 %v814
          %1370 = vmatpush1.msra.mxu0 %v813
          %1371 = vmatprep.subr.mxu0 %v818
          %1372 = vmatpush1.msra.mxu0 %v817
          %1373 = vmatprep.subr.mxu0 %v822
          %1374 = vmatpush1.msra.mxu0 %v821
          %1375 = vmatprep.subr.mxu0 %v826
          %1376 = vmatpush1.msra.mxu0 %v825
          %1377 = vmatprep.subr.mxu0 %v830
          %1378 = vmatpush1.msra.mxu0 %v829
          %1379 = vmatprep.subr.mxu0 %v834
          %1380 = vmatpush1.msra.mxu0 %v833
          %1381 = vmatprep.subr.mxu0 %v838
          %1382 = vmatpush1.msra.mxu0 %v837
          %1383 = vmatprep.subr.mxu0 %v842
          %1384 = vmatpush1.msra.mxu0 %v841
          %1385 = vmatprep.subr.mxu0 %v846
          %1386 = vmatpush1.msra.mxu0 %v845
          %1387 = vmatprep.subr.mxu0 %v850
          %1388 = vmatpush1.msra.mxu0 %v849
          %1389 = vmatprep.subr.mxu0 %v854
          %1390 = vmatpush1.msra.mxu0 %v853
          %1391 = vmatprep.subr.mxu0 %v858
          %1392 = vmatpush1.msra.mxu0 %v857
          %1393 = vmatprep.subr.mxu0 %v862
          %1394 = vmatpush1.msra.mxu0 %v861
          %1395 = vmatprep.subr.mxu0 %v866
          %1396 = vmatpush1.msra.mxu0 %v865
          %1397 = vmatprep.subr.mxu0 %v870
          %1398 = vmatpush1.msra.mxu0 %v869
          %1399 = vmatprep.subr.mxu0 %v874
          %1400 = vmatpush1.msra.mxu0 %v873
          %1401 = vmatprep.subr.mxu0 %v878
          %1402 = vmatpush1.msra.mxu0 %v877
          %1403 = vmatprep.mubr.f32.mxu0 %v493
          %1404 = vmatmul.mubr.f32.gmra.mrb[0].mxu0 %v492
          %v1405 = vpop.f32.mrb[0].mxu0
          %v1406 = vadd.f32 %v1335, %v1405
          %v1407 = vpop.f32.mrb[0].mxu0
          %v1408 = vadd.f32 %v1337, %v1407
          %1409 = vdwg.mxu0
          %1410 = vmatprep.subr.mxu0 %v882
          %1411 = vmatpush1.msra.mxu0 %v881
          %1412 = vmatprep.subr.mxu0 %v886
          %1413 = vmatpush1.msra.mxu0 %v885
          %1414 = vmatprep.subr.mxu0 0.0
          %1415 = vmatpush1.msra.mxu0 0.0
          %1416 = vmatprep.subr.mxu0 0.0
          %1417 = vmatpush1.msra.mxu0 0.0
          %1418 = vmatprep.subr.mxu0 0.0
          %1419 = vmatpush1.msra.mxu0 0.0
          %1420 = vmatprep.subr.mxu0 0.0
          %1421 = vmatpush1.msra.mxu0 0.0
          %1422 = vmatprep.subr.mxu0 0.0
          %1423 = vmatpush1.msra.mxu0 0.0
          %1424 = vmatprep.subr.mxu0 0.0
          %1425 = vmatpush1.msra.mxu0 0.0
          %1426 = vmatprep.subr.mxu0 0.0
          %1427 = vmatpush1.msra.mxu0 0.0
          %1428 = vmatprep.subr.mxu0 0.0
          %1429 = vmatpush1.msra.mxu0 0.0
          %1430 = vmatprep.subr.mxu0 0.0
          %1431 = vmatpush1.msra.mxu0 0.0
          %1432 = vmatprep.subr.mxu0 0.0
          %1433 = vmatpush1.msra.mxu0 0.0
          %1434 = vmatprep.subr.mxu0 0.0
          %1435 = vmatpush1.msra.mxu0 0.0
          %1436 = vmatprep.subr.mxu0 0.0
          %1437 = vmatpush1.msra.mxu0 0.0
          %1438 = vmatprep.subr.mxu0 0.0
          %1439 = vmatpush1.msra.mxu0 0.0
          %1440 = vmatprep.subr.mxu0 0.0
          %1441 = vmatpush1.msra.mxu0 0.0
          %1442 = vmatprep.subr.mxu0 0.0
          %1443 = vmatpush1.msra.mxu0 0.0
          %1444 = vmatprep.subr.mxu0 0.0
          %1445 = vmatpush1.msra.mxu0 0.0
          %1446 = vmatprep.subr.mxu0 0.0
          %1447 = vmatpush1.msra.mxu0 0.0
          %1448 = vmatprep.subr.mxu0 0.0
          %1449 = vmatpush1.msra.mxu0 0.0
          %1450 = vmatprep.subr.mxu0 0.0
          %1451 = vmatpush1.msra.mxu0 0.0
          %1452 = vmatprep.subr.mxu0 0.0
          %1453 = vmatpush1.msra.mxu0 0.0
          %1454 = vmatprep.subr.mxu0 0.0
          %1455 = vmatpush1.msra.mxu0 0.0
          %1456 = vmatprep.subr.mxu0 0.0
          %1457 = vmatpush1.msra.mxu0 0.0
          %1458 = vmatprep.subr.mxu0 0.0
          %1459 = vmatpush1.msra.mxu0 0.0
          %1460 = vmatprep.subr.mxu0 0.0
          %1461 = vmatpush1.msra.mxu0 0.0
          %1462 = vmatprep.subr.mxu0 0.0
          %1463 = vmatpush1.msra.mxu0 0.0
          %1464 = vmatprep.subr.mxu0 0.0
          %1465 = vmatpush1.msra.mxu0 0.0
          %1466 = vmatprep.subr.mxu0 0.0
          %1467 = vmatpush1.msra.mxu0 0.0
          %1468 = vmatprep.subr.mxu0 0.0
          %1469 = vmatpush1.msra.mxu0 0.0
          %1470 = vmatprep.subr.mxu0 0.0
          %1471 = vmatpush1.msra.mxu0 0.0
          %1472 = vmatprep.subr.mxu0 0.0
          %1473 = vmatpush1.msra.mxu0 0.0
          %1474 = vmatprep.mubr.f32.mxu0 0.0
          %1475 = vmatmul.mubr.f32.gmra.mrb[0].mxu0 %v911
          %v1476 = vpop.f32.mrb[0].mxu0
          %v1477 = vadd.f32 %v1406, %v1476
          %v1478 = vpop.f32.mrb[0].mxu0
          %v1479 = vadd.f32 %v1408, %v1478
          %1480 = vdwg.mxu0
          %v1481 = vmax.f32 %v1193, 0.0
          %v1482 = vmax.f32 %v1195, 0.0
          %v1483 = vmax.f32 %v1477, 0.0
          %v1484 = vmax.f32 %v1479, 0.0
          %s1485 = sshra.s32 %s478, 3
          %s1486 = sand.u32 %s478, 7
          %s1487 = smul.u32 %s1485, 4
          %s1488 = smul.addr %s1487, 8
          %s1489 = scalar_lea.vmem [#allocation2], %s1488
          %1490 = vst [vmem:[%s1489] sm:$0xff] %v1481
          %1491 = vst [vmem:[%s1489 + $0x8] sm:$0xff] %v1482
          %1492 = vst [vmem:[%s1489 + $0x10] sm:$0xff] %v1483
          %1493 = vst [vmem:[%s1489 + $0x18] sm:$0xff] %v1484
          %v1494 = vld [vmem:[#allocation3] sm:$0xff]
          %v1495 = vrot.slane %v1481, 4
          %v1496 = vadd.f32 %v1481, %v1495
          %v1497 = vrot.slane %v1496, 2
          %v1498 = vadd.f32 %v1496, %v1497
          %v1499 = vrot.slane %v1498, 1
          %v1500 = vadd.f32 %v1498, %v1499
          %v1501 = vrot.slane %v1482, 4
          %v1502 = vadd.f32 %v1482, %v1501
          %v1503 = vrot.slane %v1502, 2
          %v1504 = vadd.f32 %v1502, %v1503
          %v1505 = vrot.slane %v1504, 1
          %v1506 = vadd.f32 %v1504, %v1505
          %v1507 = vrot.slane %v1483, 4
          %v1508 = vadd.f32 %v1483, %v1507
          %v1509 = vrot.slane %v1508, 2
          %v1510 = vadd.f32 %v1508, %v1509
          %v1511 = vrot.slane %v1510, 1
          %v1512 = vadd.f32 %v1510, %v1511
          %v1513 = vrot.slane %v1484, 4
          %v1514 = vadd.f32 %v1484, %v1513
          %v1515 = vrot.slane %v1514, 2
          %v1516 = vadd.f32 %v1514, %v1515
          %v1517 = vrot.slane %v1516, 1
          %v1518 = vadd.f32 %v1516, %v1517
          %v1519 = vmul.f32 %v1481, %v1481
          %v1520 = vmul.f32 %v1482, %v1482
          %v1521 = vmul.f32 %v1483, %v1483
          %v1522 = vmul.f32 %v1484, %v1484
          %v1523 = vrot.slane %v1519, 4
          %v1524 = vadd.f32 %v1519, %v1523
          %v1525 = vrot.slane %v1524, 2
          %v1526 = vadd.f32 %v1524, %v1525
          %v1527 = vrot.slane %v1526, 1
          %v1528 = vadd.f32 %v1526, %v1527
          %v1529 = vrot.slane %v1520, 4
          %v1530 = vadd.f32 %v1520, %v1529
          %v1531 = vrot.slane %v1530, 2
          %v1532 = vadd.f32 %v1530, %v1531
          %v1533 = vrot.slane %v1532, 1
          %v1534 = vadd.f32 %v1532, %v1533
          %v1535 = vrot.slane %v1521, 4
          %v1536 = vadd.f32 %v1521, %v1535
          %v1537 = vrot.slane %v1536, 2
          %v1538 = vadd.f32 %v1536, %v1537
          %v1539 = vrot.slane %v1538, 1
          %v1540 = vadd.f32 %v1538, %v1539
          %v1541 = vrot.slane %v1522, 4
          %v1542 = vadd.f32 %v1522, %v1541
          %v1543 = vrot.slane %v1542, 2
          %v1544 = vadd.f32 %v1542, %v1543
          %v1545 = vrot.slane %v1544, 1
          %v1546 = vadd.f32 %v1544, %v1545
          %vm1547 = vcmask 1040384
          %v1548 = vsel %vm1547, %v1500, %v1528
          %v1549 = vsel %vm1547, %v1506, %v1534
          %v1550 = vsel %vm1547, %v1512, %v1540
          %v1551 = vsel %vm1547, %v1518, %v1546
          %v1556 = vcombine.low %v1548, %v1549
          %v1557 = vcombine.low %v1550, %v1551
          %v1559 = vunpack.c.l.s4 1983009808
          %v1560 = vunpack.c.0.s8 %v1559
          %v1561 = vlaneseq
          %v1562 = vshrl.u32 %v1561, 7
          %v1563 = vsub.s32 %v1560, %v1562
          %v1564 = vrot.slane %v1556, %v1563
          %v1566 = vunpack.c.l.s4 1983009808
          %v1567 = vunpack.c.0.s8 %v1566
          %v1568 = vlaneseq
          %v1569 = vshrl.u32 %v1568, 7
          %v1570 = vsub.s32 %v1567, %v1569
          %v1571 = vrot.slane %v1557, %v1570
          %v1572 = vcombine.low %v1564, %v1571
          %v1574 = vadd.f32 %v1494, %v1572
          %1575 = vst [vmem:[#allocation3] sm:$0xff] %v1574
        $region96: #{tpu_custom_call.1} parent=55 // pred_fallthru
          _
        %p1576 = scmp.eq.s32.totalorder %s34, 1
        // Predicated region
        $region101: #{tpu_custom_call.1} parent=55 // pred_check
          %p1577 = pneg %p1576
        $region102: #{tpu_custom_call.1} parent=55 // pred_check_branch
          %1579 = sbr.rel (%p1577) target = $region104
        $region103: #{tpu_custom_call.1} parent=55 // pred_region
          %p1580 = scmp.eq.s32.totalorder %s35, 0
          // Predicated region
          $region105: #{tpu_custom_call.1} parent=103 // pred_check
            %p1581 = pneg %p1580
          $region106: #{tpu_custom_call.1} parent=103 // pred_check_branch
            %1583 = sbr.rel (%p1581) target = $region108
          $region107: #{tpu_custom_call.1} parent=103 // pred_region
            %v1584 = vld [vmem:[#allocation3] ss:$2 sm:$0xf]
            %s1585 = scalar_lea.vmem [#allocation3], 1
            %v1586 = vld [vmem:[%s1585] ss:$2 sm:$0xf]
            %v1587 = vld [vmem:[#allocation10] sm:$0xf]
            %v1588 = vmax.f32 %v1587, 0.0
            %v1589 = vmul.f32 %v1588, 4.0
            %v1590 = vsub.f32 %v1584, %v1589
            %v1591 = vmul.f32 %v1589, %v1588
            %v1592 = vsub.f32 %v1586, %v1591
            %v1593 = vmul.f32 %v1590, 0.05
            %v1594 = vmul.f32 %v1592, 0.05
            %v1595 = vmul.f32 %v1593, %v1593
            %v1596 = vsub.f32 %v1594, %v1595
            %v1597 = vmax.f32 %v1596, 0.0
            %v1598 = vadd.f32 %v1597, 1e-05
            %v1599 = vrsqrt.pop %v1598
            %v1600 = vld [vmem:[#allocation11] sm:$0xf]
            %v1601 = vmul.f32 %v1599, %v1600
            %v1602 = vlaneseq
            %vm1603 = vcmp.ge.s32.totalorder %v1602, 0
            %vm1604 = vcmp.lt.s32.totalorder %v1602, 512
            %vm1605 = vmand %vm1603, %vm1604
            %1606 = vst.msk [vmem:[#allocation4] ss:$2 sm:$0xf] %vm1605, %v1601
            %v1607 = vld [vmem:[#allocation13] sm:$0xf]
            %v1608 = vmul.f32 %v1593, %v1601
            %v1609 = vsub.f32 %v1607, %v1608
            %s1610 = scalar_lea.vmem [#allocation4], 1
            %1611 = vst.msk [vmem:[%s1610] ss:$2 sm:$0xf] %vm1605, %v1609
          $region108: #{tpu_custom_call.1} parent=103 // pred_fallthru
            _
          %s1612 = sshra.s32 %s478, 3
          %s1613 = sand.u32 %s478, 7
          %s1614 = smul.u32 %s1612, 4
          %s1615 = smul.addr %s1614, 8
          %s1616 = scalar_lea.vmem [#allocation2], %s1615
          %v1617 = vld [vmem:[%s1616] sm:$0xff]
          %v1618 = vld [vmem:[%s1616 + $0x8] sm:$0xff]
          %v1619 = vld [vmem:[%s1616 + $0x10] sm:$0xff]
          %v1620 = vld [vmem:[%s1616 + $0x18] sm:$0xff]
          %v1621 = vld [vmem:[#allocation4] ss:$2 sm:$0xf]
          %v1623 = vlaneseq
          %v1624 = vshrl.u32 %v1623, 7
          %v1625 = vsub.s32 0, %v1624
          %v1626 = vrot.slane %v1621, %v1625
          %v1627 = vlaneseq
          %v1628 = vshrl.u32 %v1627, 7
          %v1629 = vsub.s32 1, %v1628
          %v1630 = vrot.slane %v1621, %v1629
          %v1631 = vlaneseq
          %v1632 = vshrl.u32 %v1631, 7
          %v1633 = vsub.s32 2, %v1632
          %v1634 = vrot.slane %v1621, %v1633
          %v1635 = vlaneseq
          %v1636 = vshrl.u32 %v1635, 7
          %v1637 = vsub.s32 3, %v1636
          %v1638 = vrot.slane %v1621, %v1637
          %v1643 = vmul.f32 %v1617, %v1626
          %v1644 = vmul.f32 %v1618, %v1630
          %v1645 = vmul.f32 %v1619, %v1634
          %v1646 = vmul.f32 %v1620, %v1638
          %s1647 = scalar_lea.vmem [#allocation4], 1
          %v1648 = vld [vmem:[%s1647] ss:$2 sm:$0xf]
          %v1650 = vlaneseq
          %v1651 = vshrl.u32 %v1650, 7
          %v1652 = vsub.s32 0, %v1651
          %v1653 = vrot.slane %v1648, %v1652
          %v1654 = vlaneseq
          %v1655 = vshrl.u32 %v1654, 7
          %v1656 = vsub.s32 1, %v1655
          %v1657 = vrot.slane %v1648, %v1656
          %v1658 = vlaneseq
          %v1659 = vshrl.u32 %v1658, 7
          %v1660 = vsub.s32 2, %v1659
          %v1661 = vrot.slane %v1648, %v1660
          %v1662 = vlaneseq
          %v1663 = vshrl.u32 %v1662, 7
          %v1664 = vsub.s32 3, %v1663
          %v1665 = vrot.slane %v1648, %v1664
          %v1670 = vadd.f32 %v1643, %v1653
          %v1671 = vadd.f32 %v1644, %v1657
          %v1672 = vadd.f32 %v1645, %v1661
          %v1673 = vadd.f32 %v1646, %v1665
          %v1674 = vld [vmem:[#allocation14] sm:$0xff]
          %v1675 = vld [vmem:[#allocation14 + $0x8] sm:$0xff]
          %v1676 = vld [vmem:[#allocation14 + $0x10] sm:$0xff]
          %v1677 = vld [vmem:[#allocation14 + $0x18] sm:$0xff]
          %v1678 = vld [vmem:[#allocation14 + $0x20] sm:$0xff]
          %v1679 = vld [vmem:[#allocation14 + $0x28] sm:$0xff]
          %v1680 = vld [vmem:[#allocation14 + $0x30] sm:$0xff]
          %v1681 = vld [vmem:[#allocation14 + $0x38] sm:$0xff]
          %v1682 = vld [vmem:[#allocation14 + $0x40] sm:$0xff]
          %v1683 = vld [vmem:[#allocation14 + $0x48] sm:$0xff]
          %v1684 = vld [vmem:[#allocation14 + $0x50] sm:$0xff]
          %v1685 = vld [vmem:[#allocation14 + $0x58] sm:$0xff]
          %v1686 = vld [vmem:[#allocation14 + $0x60] sm:$0xff]
          %v1687 = vld [vmem:[#allocation14 + $0x68] sm:$0xff]
          %v1688 = vld [vmem:[#allocation14 + $0x70] sm:$0xff]
          %v1689 = vld [vmem:[#allocation14 + $0x78] sm:$0xff]
          %v1690 = vld [vmem:[#allocation14 + $0x80] sm:$0xff]
          %v1691 = vld [vmem:[#allocation14 + $0x88] sm:$0xff]
          %v1692 = vld [vmem:[#allocation14 + $0x90] sm:$0xff]
          %v1693 = vld [vmem:[#allocation14 + $0x98] sm:$0xff]
          %v1694 = vld [vmem:[#allocation14 + $0xa0] sm:$0xff]
          %v1695 = vld [vmem:[#allocation14 + $0xa8] sm:$0xff]
          %v1696 = vld [vmem:[#allocation14 + $0xb0] sm:$0xff]
          %v1697 = vld [vmem:[#allocation14 + $0xb8] sm:$0xff]
          %v1698 = vld [vmem:[#allocation14 + $0xc0] sm:$0xff]
          %v1699 = vld [vmem:[#allocation14 + $0xc8] sm:$0xff]
          %v1700 = vld [vmem:[#allocation14 + $0xd0] sm:$0xff]
          %v1701 = vld [vmem:[#allocation14 + $0xd8] sm:$0xff]
          %v1702 = vld [vmem:[#allocation14 + $0xe0] sm:$0xff]
          %v1703 = vld [vmem:[#allocation14 + $0xe8] sm:$0xff]
          %v1704 = vld [vmem:[#allocation14 + $0xf0] sm:$0xff]
          %v1705 = vld [vmem:[#allocation14 + $0xf8] sm:$0xff]
          %v1706 = vld [vmem:[#allocation14 + $0x100] sm:$0xff]
          %v1707 = vld [vmem:[#allocation14 + $0x108] sm:$0xff]
          %v1708 = vld [vmem:[#allocation14 + $0x110] sm:$0xff]
          %v1709 = vld [vmem:[#allocation14 + $0x118] sm:$0xff]
          %v1710 = vld [vmem:[#allocation14 + $0x120] sm:$0xff]
          %v1711 = vld [vmem:[#allocation14 + $0x128] sm:$0xff]
          %v1712 = vld [vmem:[#allocation14 + $0x130] sm:$0xff]
          %v1713 = vld [vmem:[#allocation14 + $0x138] sm:$0xff]
          %v1714 = vld [vmem:[#allocation14 + $0x140] sm:$0xff]
          %v1715 = vld [vmem:[#allocation14 + $0x148] sm:$0xff]
          %v1716 = vld [vmem:[#allocation14 + $0x150] sm:$0xff]
          %v1717 = vld [vmem:[#allocation14 + $0x158] sm:$0xff]
          %v1718 = vld [vmem:[#allocation14 + $0x160] sm:$0xff]
          %v1719 = vld [vmem:[#allocation14 + $0x168] sm:$0xff]
          %v1720 = vld [vmem:[#allocation14 + $0x170] sm:$0xff]
          %v1721 = vld [vmem:[#allocation14 + $0x178] sm:$0xff]
          %v1722 = vld [vmem:[#allocation14 + $0x180] sm:$0xff]
          %v1723 = vld [vmem:[#allocation14 + $0x188] sm:$0xff]
          %v1724 = vld [vmem:[#allocation14 + $0x190] sm:$0xff]
          %v1725 = vld [vmem:[#allocation14 + $0x198] sm:$0xff]
          %v1726 = vld [vmem:[#allocation14 + $0x1a0] sm:$0xff]
          %v1727 = vld [vmem:[#allocation14 + $0x1a8] sm:$0xff]
          %v1728 = vld [vmem:[#allocation14 + $0x1b0] sm:$0xff]
          %v1729 = vld [vmem:[#allocation14 + $0x1b8] sm:$0xff]
          %v1730 = vld [vmem:[#allocation14 + $0x1c0] sm:$0xff]
          %v1731 = vld [vmem:[#allocation14 + $0x1c8] sm:$0xff]
          %v1732 = vld [vmem:[#allocation14 + $0x1d0] sm:$0xff]
          %v1733 = vld [vmem:[#allocation14 + $0x1d8] sm:$0xff]
          %v1734 = vld [vmem:[#allocation14 + $0x1e0] sm:$0xff]
          %v1735 = vld [vmem:[#allocation14 + $0x1e8] sm:$0xff]
          %v1736 = vld [vmem:[#allocation14 + $0x1f0] sm:$0xff]
          %v1737 = vld [vmem:[#allocation14 + $0x1f8] sm:$0xff]
          %v1738 = vld [vmem:[#allocation14 + $0x200] sm:$0xff]
          %v1739 = vld [vmem:[#allocation14 + $0x208] sm:$0xff]
          %v1740 = vld [vmem:[#allocation14 + $0x210] sm:$0xff]
          %v1741 = vld [vmem:[#allocation14 + $0x218] sm:$0xff]
          %v1742 = vld [vmem:[#allocation14 + $0x220] sm:$0xff]
          %v1743 = vld [vmem:[#allocation14 + $0x228] sm:$0xff]
          %v1744 = vld [vmem:[#allocation14 + $0x230] sm:$0xff]
          %v1745 = vld [vmem:[#allocation14 + $0x238] sm:$0xff]
          %v1746 = vld [vmem:[#allocation14 + $0x240] sm:$0xff]
          %v1747 = vld [vmem:[#allocation14 + $0x248] sm:$0xff]
          %v1748 = vld [vmem:[#allocation14 + $0x250] sm:$0xff]
          %v1749 = vld [vmem:[#allocation14 + $0x258] sm:$0xff]
          %v1750 = vld [vmem:[#allocation14 + $0x260] sm:$0xff]
          %v1751 = vld [vmem:[#allocation14 + $0x268] sm:$0xff]
          %v1752 = vld [vmem:[#allocation14 + $0x270] sm:$0xff]
          %v1753 = vld [vmem:[#allocation14 + $0x278] sm:$0xff]
          %v1754 = vld [vmem:[#allocation14 + $0x280] sm:$0xff]
          %v1755 = vld [vmem:[#allocation14 + $0x288] sm:$0xff]
          %v1756 = vld [vmem:[#allocation14 + $0x290] sm:$0xff]
          %v1757 = vld [vmem:[#allocation14 + $0x298] sm:$0xff]
          %v1758 = vld [vmem:[#allocation14 + $0x2a0] sm:$0xff]
          %v1759 = vld [vmem:[#allocation14 + $0x2a8] sm:$0xff]
          %v1760 = vld [vmem:[#allocation14 + $0x2b0] sm:$0xff]
          %v1761 = vld [vmem:[#allocation14 + $0x2b8] sm:$0xff]
          %v1762 = vld [vmem:[#allocation14 + $0x2c0] sm:$0xff]
          %v1763 = vld [vmem:[#allocation14 + $0x2c8] sm:$0xff]
          %v1764 = vld [vmem:[#allocation14 + $0x2d0] sm:$0xff]
          %v1765 = vld [vmem:[#allocation14 + $0x2d8] sm:$0xff]
          %v1766 = vld [vmem:[#allocation14 + $0x2e0] sm:$0xff]
          %v1767 = vld [vmem:[#allocation14 + $0x2e8] sm:$0xff]
          %v1768 = vld [vmem:[#allocation14 + $0x2f0] sm:$0xff]
          %v1769 = vld [vmem:[#allocation14 + $0x2f8] sm:$0xff]
          %v1770 = vld [vmem:[#allocation14 + $0x300] sm:$0xff]
          %v1771 = vld [vmem:[#allocation14 + $0x308] sm:$0xff]
          %v1772 = vld [vmem:[#allocation14 + $0x310] sm:$0xff]
          %v1773 = vld [vmem:[#allocation14 + $0x318] sm:$0xff]
          %v1774 = vld [vmem:[#allocation14 + $0x320] sm:$0xff]
          %v1775 = vld [vmem:[#allocation14 + $0x328] sm:$0xff]
          %v1776 = vld [vmem:[#allocation14 + $0x330] sm:$0xff]
          %v1777 = vld [vmem:[#allocation14 + $0x338] sm:$0xff]
          %v1778 = vld [vmem:[#allocation14 + $0x340] sm:$0xff]
          %v1779 = vld [vmem:[#allocation14 + $0x348] sm:$0xff]
          %v1780 = vld [vmem:[#allocation14 + $0x350] sm:$0xff]
          %v1781 = vld [vmem:[#allocation14 + $0x358] sm:$0xff]
          %v1782 = vld [vmem:[#allocation14 + $0x360] sm:$0xff]
          %v1783 = vld [vmem:[#allocation14 + $0x368] sm:$0xff]
          %v1784 = vld [vmem:[#allocation14 + $0x370] sm:$0xff]
          %v1785 = vld [vmem:[#allocation14 + $0x378] sm:$0xff]
          %v1786 = vld [vmem:[#allocation14 + $0x380] sm:$0xff]
          %v1787 = vld [vmem:[#allocation14 + $0x388] sm:$0xff]
          %v1788 = vld [vmem:[#allocation14 + $0x390] sm:$0xff]
          %v1789 = vld [vmem:[#allocation14 + $0x398] sm:$0xff]
          %v1790 = vld [vmem:[#allocation14 + $0x3a0] sm:$0xff]
          %v1791 = vld [vmem:[#allocation14 + $0x3a8] sm:$0xff]
          %v1792 = vld [vmem:[#allocation14 + $0x3b0] sm:$0xff]
          %v1793 = vld [vmem:[#allocation14 + $0x3b8] sm:$0xff]
          %v1794 = vld [vmem:[#allocation14 + $0x3c0] sm:$0xff]
          %v1795 = vld [vmem:[#allocation14 + $0x3c8] sm:$0xff]
          %v1796 = vld [vmem:[#allocation14 + $0x3d0] sm:$0xff]
          %v1797 = vld [vmem:[#allocation14 + $0x3d8] sm:$0xff]
          %v1798 = vld [vmem:[#allocation14 + $0x3e0] sm:$0xff]
          %v1799 = vld [vmem:[#allocation14 + $0x3e8] sm:$0xff]
          %v1800 = vld [vmem:[#allocation14 + $0x3f0] sm:$0xff]
          %v1801 = vld [vmem:[#allocation14 + $0x3f8] sm:$0xff]
          %v1802 = vld [vmem:[#allocation14 + $0x400] sm:$0xff]
          %v1803 = vld [vmem:[#allocation14 + $0x408] sm:$0xff]
          %v1804 = vld [vmem:[#allocation14 + $0x410] sm:$0xff]
          %v1805 = vld [vmem:[#allocation14 + $0x418] sm:$0xff]
          %v1806 = vld [vmem:[#allocation14 + $0x420] sm:$0xff]
          %v1807 = vld [vmem:[#allocation14 + $0x428] sm:$0xff]
          %v1808 = vld [vmem:[#allocation14 + $0x430] sm:$0xff]
          %v1809 = vld [vmem:[#allocation14 + $0x438] sm:$0xff]
          %v1810 = vld [vmem:[#allocation14 + $0x440] sm:$0xff]
          %v1811 = vld [vmem:[#allocation14 + $0x448] sm:$0xff]
          %v1812 = vld [vmem:[#allocation14 + $0x450] sm:$0xff]
          %v1813 = vld [vmem:[#allocation14 + $0x458] sm:$0xff]
          %v1814 = vld [vmem:[#allocation14 + $0x460] sm:$0xff]
          %v1815 = vld [vmem:[#allocation14 + $0x468] sm:$0xff]
          %v1816 = vld [vmem:[#allocation14 + $0x470] sm:$0xff]
          %v1817 = vld [vmem:[#allocation14 + $0x478] sm:$0xff]
          %v1818 = vld [vmem:[#allocation14 + $0x480] sm:$0xff]
          %v1819 = vld [vmem:[#allocation14 + $0x488] sm:$0xff]
          %v1820 = vld [vmem:[#allocation14 + $0x490] sm:$0xff]
          %v1821 = vld [vmem:[#allocation14 + $0x498] sm:$0xff]
          %v1822 = vld [vmem:[#allocation14 + $0x4a0] sm:$0xff]
          %v1823 = vld [vmem:[#allocation14 + $0x4a8] sm:$0xff]
          %v1824 = vld [vmem:[#allocation14 + $0x4b0] sm:$0xff]
          %v1825 = vld [vmem:[#allocation14 + $0x4b8] sm:$0xff]
          %v1826 = vld [vmem:[#allocation14 + $0x4c0] sm:$0xff]
          %v1827 = vld [vmem:[#allocation14 + $0x4c8] sm:$0xff]
          %v1828 = vld [vmem:[#allocation14 + $0x4d0] sm:$0xff]
          %v1829 = vld [vmem:[#allocation14 + $0x4d8] sm:$0xff]
          %v1830 = vld [vmem:[#allocation14 + $0x4e0] sm:$0xff]
          %v1831 = vld [vmem:[#allocation14 + $0x4e8] sm:$0xff]
          %v1832 = vld [vmem:[#allocation14 + $0x4f0] sm:$0xff]
          %v1833 = vld [vmem:[#allocation14 + $0x4f8] sm:$0xff]
          %v1834 = vld [vmem:[#allocation14 + $0x500] sm:$0xff]
          %v1835 = vld [vmem:[#allocation14 + $0x508] sm:$0xff]
          %v1836 = vld [vmem:[#allocation14 + $0x510] sm:$0xff]
          %v1837 = vld [vmem:[#allocation14 + $0x518] sm:$0xff]
          %v1838 = vld [vmem:[#allocation14 + $0x520] sm:$0xff]
          %v1839 = vld [vmem:[#allocation14 + $0x528] sm:$0xff]
          %v1840 = vld [vmem:[#allocation14 + $0x530] sm:$0xff]
          %v1841 = vld [vmem:[#allocation14 + $0x538] sm:$0xff]
          %v1842 = vld [vmem:[#allocation14 + $0x540] sm:$0xff]
          %v1843 = vld [vmem:[#allocation14 + $0x548] sm:$0xff]
          %v1844 = vld [vmem:[#allocation14 + $0x550] sm:$0xff]
          %v1845 = vld [vmem:[#allocation14 + $0x558] sm:$0xff]
          %v1846 = vld [vmem:[#allocation14 + $0x560] sm:$0xff]
          %v1847 = vld [vmem:[#allocation14 + $0x568] sm:$0xff]
          %v1848 = vld [vmem:[#allocation14 + $0x570] sm:$0xff]
          %v1849 = vld [vmem:[#allocation14 + $0x578] sm:$0xff]
          %v1850 = vld [vmem:[#allocation14 + $0x580] sm:$0xff]
          %v1851 = vld [vmem:[#allocation14 + $0x588] sm:$0xff]
          %v1852 = vld [vmem:[#allocation14 + $0x590] sm:$0xff]
          %v1853 = vld [vmem:[#allocation14 + $0x598] sm:$0xff]
          %v1854 = vld [vmem:[#allocation14 + $0x5a0] sm:$0xff]
          %v1855 = vld [vmem:[#allocation14 + $0x5a8] sm:$0xff]
          %v1856 = vld [vmem:[#allocation14 + $0x5b0] sm:$0xff]
          %v1857 = vld [vmem:[#allocation14 + $0x5b8] sm:$0xff]
          %v1858 = vld [vmem:[#allocation14 + $0x5c0] sm:$0xff]
          %v1859 = vld [vmem:[#allocation14 + $0x5c8] sm:$0xff]
          %v1860 = vld [vmem:[#allocation14 + $0x5d0] sm:$0xff]
          %v1861 = vld [vmem:[#allocation14 + $0x5d8] sm:$0xff]
          %v1862 = vld [vmem:[#allocation14 + $0x5e0] sm:$0xff]
          %v1863 = vld [vmem:[#allocation14 + $0x5e8] sm:$0xff]
          %v1864 = vld [vmem:[#allocation14 + $0x5f0] sm:$0xff]
          %v1865 = vld [vmem:[#allocation14 + $0x5f8] sm:$0xff]
          %v1866 = vld [vmem:[#allocation14 + $0x600] sm:$0xff]
          %v1867 = vld [vmem:[#allocation14 + $0x608] sm:$0xff]
          %v1868 = vld [vmem:[#allocation14 + $0x610] sm:$0xff]
          %v1869 = vld [vmem:[#allocation14 + $0x618] sm:$0xff]
          %v1870 = vld [vmem:[#allocation14 + $0x620] sm:$0xff]
          %v1871 = vld [vmem:[#allocation14 + $0x628] sm:$0xff]
          %v1872 = vld [vmem:[#allocation14 + $0x630] sm:$0xff]
          %v1873 = vld [vmem:[#allocation14 + $0x638] sm:$0xff]
          %v1874 = vld [vmem:[#allocation14 + $0x640] sm:$0xff]
          %v1875 = vld [vmem:[#allocation14 + $0x648] sm:$0xff]
          %v1876 = vld [vmem:[#allocation14 + $0x650] sm:$0xff]
          %v1877 = vld [vmem:[#allocation14 + $0x658] sm:$0xff]
          %v1878 = vld [vmem:[#allocation14 + $0x660] sm:$0xff]
          %v1879 = vld [vmem:[#allocation14 + $0x668] sm:$0xff]
          %v1880 = vld [vmem:[#allocation14 + $0x670] sm:$0xff]
          %v1881 = vld [vmem:[#allocation14 + $0x678] sm:$0xff]
          %v1882 = vld [vmem:[#allocation14 + $0x680] sm:$0xff]
          %v1883 = vld [vmem:[#allocation14 + $0x688] sm:$0xff]
          %v1884 = vld [vmem:[#allocation14 + $0x690] sm:$0xff]
          %v1885 = vld [vmem:[#allocation14 + $0x698] sm:$0xff]
          %v1886 = vld [vmem:[#allocation14 + $0x6a0] sm:$0xff]
          %v1887 = vld [vmem:[#allocation14 + $0x6a8] sm:$0xff]
          %v1888 = vld [vmem:[#allocation14 + $0x6b0] sm:$0xff]
          %v1889 = vld [vmem:[#allocation14 + $0x6b8] sm:$0xff]
          %v1890 = vld [vmem:[#allocation14 + $0x6c0] sm:$0xff]
          %v1891 = vld [vmem:[#allocation14 + $0x6c8] sm:$0xff]
          %v1892 = vld [vmem:[#allocation14 + $0x6d0] sm:$0xff]
          %v1893 = vld [vmem:[#allocation14 + $0x6d8] sm:$0xff]
          %v1894 = vld [vmem:[#allocation14 + $0x6e0] sm:$0xff]
          %v1895 = vld [vmem:[#allocation14 + $0x6e8] sm:$0xff]
          %v1896 = vld [vmem:[#allocation14 + $0x6f0] sm:$0xff]
          %v1897 = vld [vmem:[#allocation14 + $0x6f8] sm:$0xff]
          %v1898 = vld [vmem:[#allocation14 + $0x700] sm:$0xff]
          %v1899 = vld [vmem:[#allocation14 + $0x708] sm:$0xff]
          %v1900 = vld [vmem:[#allocation14 + $0x710] sm:$0xff]
          %v1901 = vld [vmem:[#allocation14 + $0x718] sm:$0xff]
          %v1902 = vld [vmem:[#allocation14 + $0x720] sm:$0xff]
          %v1903 = vld [vmem:[#allocation14 + $0x728] sm:$0xff]
          %v1904 = vld [vmem:[#allocation14 + $0x730] sm:$0xff]
          %v1905 = vld [vmem:[#allocation14 + $0x738] sm:$0xff]
          %v1906 = vld [vmem:[#allocation14 + $0x740] sm:$0xff]
          %v1907 = vld [vmem:[#allocation14 + $0x748] sm:$0xff]
          %v1908 = vld [vmem:[#allocation14 + $0x750] sm:$0xff]
          %v1909 = vld [vmem:[#allocation14 + $0x758] sm:$0xff]
          %v1910 = vld [vmem:[#allocation14 + $0x760] sm:$0xff]
          %v1911 = vld [vmem:[#allocation14 + $0x768] sm:$0xff]
          %v1912 = vld [vmem:[#allocation14 + $0x770] sm:$0xff]
          %v1913 = vld [vmem:[#allocation14 + $0x778] sm:$0xff]
          %v1914 = vld [vmem:[#allocation14 + $0x780] sm:$0xff]
          %v1915 = vld [vmem:[#allocation14 + $0x788] sm:$0xff]
          %v1916 = vld [vmem:[#allocation14 + $0x790] sm:$0xff]
          %v1917 = vld [vmem:[#allocation14 + $0x798] sm:$0xff]
          %v1918 = vld [vmem:[#allocation14 + $0x7a0] sm:$0xff]
          %v1919 = vld [vmem:[#allocation14 + $0x7a8] sm:$0xff]
          %v1920 = vld [vmem:[#allocation14 + $0x7b0] sm:$0xff]
          %v1921 = vld [vmem:[#allocation14 + $0x7b8] sm:$0xff]
          %v1922 = vld [vmem:[#allocation14 + $0x7c0] sm:$0xff]
          %v1923 = vld [vmem:[#allocation14 + $0x7c8] sm:$0xff]
          %v1924 = vld [vmem:[#allocation14 + $0x7d0] sm:$0xff]
          %v1925 = vld [vmem:[#allocation14 + $0x7d8] sm:$0xff]
          %v1926 = vld [vmem:[#allocation14 + $0x7e0] sm:$0xff]
          %v1927 = vld [vmem:[#allocation14 + $0x7e8] sm:$0xff]
          %v1928 = vld [vmem:[#allocation14 + $0x7f0] sm:$0xff]
          %v1929 = vld [vmem:[#allocation14 + $0x7f8] sm:$0xff]
          %v1930 = vld [vmem:[#allocation16] sm:$0xf]
          %v1932 = vlaneseq
          %v1933 = vshrl.u32 %v1932, 7
          %v1934 = vsub.s32 0, %v1933
          %v1935 = vrot.slane %v1930, %v1934
          %v1936 = vlaneseq
          %v1937 = vshrl.u32 %v1936, 7
          %v1938 = vsub.s32 1, %v1937
          %v1939 = vrot.slane %v1930, %v1938
          %v1940 = vlaneseq
          %v1941 = vshrl.u32 %v1940, 7
          %v1942 = vsub.s32 2, %v1941
          %v1943 = vrot.slane %v1930, %v1942
          %v1944 = vlaneseq
          %v1945 = vshrl.u32 %v1944, 7
          %v1946 = vsub.s32 3, %v1945
          %v1947 = vrot.slane %v1930, %v1946
          %1952 = vmatprep.subr.mxu0 %v1675
          %1953 = vmatpush1.msra.mxu0 %v1674
          %1954 = vmatprep.subr.mxu0 %v1679
          %1955 = vmatpush1.msra.mxu0 %v1678
          %1956 = vmatprep.subr.mxu0 %v1683
          %1957 = vmatpush1.msra.mxu0 %v1682
          %1958 = vmatprep.subr.mxu0 %v1687
          %1959 = vmatpush1.msra.mxu0 %v1686
          %1960 = vmatprep.subr.mxu0 %v1691
          %1961 = vmatpush1.msra.mxu0 %v1690
          %1962 = vmatprep.subr.mxu0 %v1695
          %1963 = vmatpush1.msra.mxu0 %v1694
          %1964 = vmatprep.subr.mxu0 %v1699
          %1965 = vmatpush1.msra.mxu0 %v1698
          %1966 = vmatprep.subr.mxu0 %v1703
          %1967 = vmatpush1.msra.mxu0 %v1702
          %1968 = vmatprep.subr.mxu0 %v1707
          %1969 = vmatpush1.msra.mxu0 %v1706
          %1970 = vmatprep.subr.mxu0 %v1711
          %1971 = vmatpush1.msra.mxu0 %v1710
          %1972 = vmatprep.subr.mxu0 %v1715
          %1973 = vmatpush1.msra.mxu0 %v1714
          %1974 = vmatprep.subr.mxu0 %v1719
          %1975 = vmatpush1.msra.mxu0 %v1718
          %1976 = vmatprep.subr.mxu0 %v1723
          %1977 = vmatpush1.msra.mxu0 %v1722
          %1978 = vmatprep.subr.mxu0 %v1727
          %1979 = vmatpush1.msra.mxu0 %v1726
          %1980 = vmatprep.subr.mxu0 %v1731
          %1981 = vmatpush1.msra.mxu0 %v1730
          %1982 = vmatprep.subr.mxu0 %v1735
          %1983 = vmatpush1.msra.mxu0 %v1734
          %1984 = vmatprep.subr.mxu0 %v1739
          %1985 = vmatpush1.msra.mxu0 %v1738
          %1986 = vmatprep.subr.mxu0 %v1743
          %1987 = vmatpush1.msra.mxu0 %v1742
          %1988 = vmatprep.subr.mxu0 %v1747
          %1989 = vmatpush1.msra.mxu0 %v1746
          %1990 = vmatprep.subr.mxu0 %v1751
          %1991 = vmatpush1.msra.mxu0 %v1750
          %1992 = vmatprep.subr.mxu0 %v1755
          %1993 = vmatpush1.msra.mxu0 %v1754
          %1994 = vmatprep.subr.mxu0 %v1759
          %1995 = vmatpush1.msra.mxu0 %v1758
          %1996 = vmatprep.subr.mxu0 %v1763
          %1997 = vmatpush1.msra.mxu0 %v1762
          %1998 = vmatprep.subr.mxu0 %v1767
          %1999 = vmatpush1.msra.mxu0 %v1766
          %2000 = vmatprep.subr.mxu0 %v1771
          %2001 = vmatpush1.msra.mxu0 %v1770
          %2002 = vmatprep.subr.mxu0 %v1775
          %2003 = vmatpush1.msra.mxu0 %v1774
          %2004 = vmatprep.subr.mxu0 %v1779
          %2005 = vmatpush1.msra.mxu0 %v1778
          %2006 = vmatprep.subr.mxu0 %v1783
          %2007 = vmatpush1.msra.mxu0 %v1782
          %2008 = vmatprep.subr.mxu0 %v1787
          %2009 = vmatpush1.msra.mxu0 %v1786
          %2010 = vmatprep.subr.mxu0 %v1791
          %2011 = vmatpush1.msra.mxu0 %v1790
          %2012 = vmatprep.subr.mxu0 %v1795
          %2013 = vmatpush1.msra.mxu0 %v1794
          %2014 = vmatprep.subr.mxu0 %v1799
          %2015 = vmatpush1.msra.mxu0 %v1798
          %2016 = vmatprep.mubr.f32.mxu0 %v1671
          %2017 = vmatmul.mubr.f32.gmra.mrb[0].mxu0 %v1670
          %v2018 = vpop.f32.mrb[0].mxu0
          %v2019 = vadd.f32 %v1935, %v2018
          %v2020 = vpop.f32.mrb[0].mxu0
          %v2021 = vadd.f32 %v1939, %v2020
          %2022 = vdwg.mxu0
          %2023 = vmatprep.subr.mxu0 %v1803
          %2024 = vmatpush1.msra.mxu0 %v1802
          %2025 = vmatprep.subr.mxu0 %v1807
          %2026 = vmatpush1.msra.mxu0 %v1806
          %2027 = vmatprep.subr.mxu0 %v1811
          %2028 = vmatpush1.msra.mxu0 %v1810
          %2029 = vmatprep.subr.mxu0 %v1815
          %2030 = vmatpush1.msra.mxu0 %v1814
          %2031 = vmatprep.subr.mxu0 %v1819
          %2032 = vmatpush1.msra.mxu0 %v1818
          %2033 = vmatprep.subr.mxu0 %v1823
          %2034 = vmatpush1.msra.mxu0 %v1822
          %2035 = vmatprep.subr.mxu0 %v1827
          %2036 = vmatpush1.msra.mxu0 %v1826
          %2037 = vmatprep.subr.mxu0 %v1831
          %2038 = vmatpush1.msra.mxu0 %v1830
          %2039 = vmatprep.subr.mxu0 %v1835
          %2040 = vmatpush1.msra.mxu0 %v1834
          %2041 = vmatprep.subr.mxu0 %v1839
          %2042 = vmatpush1.msra.mxu0 %v1838
          %2043 = vmatprep.subr.mxu0 %v1843
          %2044 = vmatpush1.msra.mxu0 %v1842
          %2045 = vmatprep.subr.mxu0 %v1847
          %2046 = vmatpush1.msra.mxu0 %v1846
          %2047 = vmatprep.subr.mxu0 %v1851
          %2048 = vmatpush1.msra.mxu0 %v1850
          %2049 = vmatprep.subr.mxu0 %v1855
          %2050 = vmatpush1.msra.mxu0 %v1854
          %2051 = vmatprep.subr.mxu0 %v1859
          %2052 = vmatpush1.msra.mxu0 %v1858
          %2053 = vmatprep.subr.mxu0 %v1863
          %2054 = vmatpush1.msra.mxu0 %v1862
          %2055 = vmatprep.subr.mxu0 %v1867
          %2056 = vmatpush1.msra.mxu0 %v1866
          %2057 = vmatprep.subr.mxu0 %v1871
          %2058 = vmatpush1.msra.mxu0 %v1870
          %2059 = vmatprep.subr.mxu0 %v1875
          %2060 = vmatpush1.msra.mxu0 %v1874
          %2061 = vmatprep.subr.mxu0 %v1879
          %2062 = vmatpush1.msra.mxu0 %v1878
          %2063 = vmatprep.subr.mxu0 %v1883
          %2064 = vmatpush1.msra.mxu0 %v1882
          %2065 = vmatprep.subr.mxu0 %v1887
          %2066 = vmatpush1.msra.mxu0 %v1886
          %2067 = vmatprep.subr.mxu0 %v1891
          %2068 = vmatpush1.msra.mxu0 %v1890
          %2069 = vmatprep.subr.mxu0 %v1895
          %2070 = vmatpush1.msra.mxu0 %v1894
          %2071 = vmatprep.subr.mxu0 %v1899
          %2072 = vmatpush1.msra.mxu0 %v1898
          %2073 = vmatprep.subr.mxu0 %v1903
          %2074 = vmatpush1.msra.mxu0 %v1902
          %2075 = vmatprep.subr.mxu0 %v1907
          %2076 = vmatpush1.msra.mxu0 %v1906
          %2077 = vmatprep.subr.mxu0 %v1911
          %2078 = vmatpush1.msra.mxu0 %v1910
          %2079 = vmatprep.subr.mxu0 %v1915
          %2080 = vmatpush1.msra.mxu0 %v1914
          %2081 = vmatprep.subr.mxu0 %v1919
          %2082 = vmatpush1.msra.mxu0 %v1918
          %2083 = vmatprep.subr.mxu0 %v1923
          %2084 = vmatpush1.msra.mxu0 %v1922
          %2085 = vmatprep.subr.mxu0 %v1927
          %2086 = vmatpush1.msra.mxu0 %v1926
          %2087 = vmatprep.mubr.f32.mxu0 %v1673
          %2088 = vmatmul.mubr.f32.gmra.mrb[0].mxu0 %v1672
          %v2089 = vpop.f32.mrb[0].mxu0
          %v2090 = vadd.f32 %v2019, %v2089
          %v2091 = vpop.f32.mrb[0].mxu0
          %v2092 = vadd.f32 %v2021, %v2091
          %2093 = vdwg.mxu0
          %2094 = vmatprep.subr.mxu0 %v1677
          %2095 = vmatpush1.msra.mxu0 %v1676
          %2096 = vmatprep.subr.mxu0 %v1681
          %2097 = vmatpush1.msra.mxu0 %v1680
          %2098 = vmatprep.subr.mxu0 %v1685
          %2099 = vmatpush1.msra.mxu0 %v1684
          %2100 = vmatprep.subr.mxu0 %v1689
          %2101 = vmatpush1.msra.mxu0 %v1688
          %2102 = vmatprep.subr.mxu0 %v1693
          %2103 = vmatpush1.msra.mxu0 %v1692
          %2104 = vmatprep.subr.mxu0 %v1697
          %2105 = vmatpush1.msra.mxu0 %v1696
          %2106 = vmatprep.subr.mxu0 %v1701
          %2107 = vmatpush1.msra.mxu0 %v1700
          %2108 = vmatprep.subr.mxu0 %v1705
          %2109 = vmatpush1.msra.mxu0 %v1704
          %2110 = vmatprep.subr.mxu0 %v1709
          %2111 = vmatpush1.msra.mxu0 %v1708
          %2112 = vmatprep.subr.mxu0 %v1713
          %2113 = vmatpush1.msra.mxu0 %v1712
          %2114 = vmatprep.subr.mxu0 %v1717
          %2115 = vmatpush1.msra.mxu0 %v1716
          %2116 = vmatprep.subr.mxu0 %v1721
          %2117 = vmatpush1.msra.mxu0 %v1720
          %2118 = vmatprep.subr.mxu0 %v1725
          %2119 = vmatpush1.msra.mxu0 %v1724
          %2120 = vmatprep.subr.mxu0 %v1729
          %2121 = vmatpush1.msra.mxu0 %v1728
          %2122 = vmatprep.subr.mxu0 %v1733
          %2123 = vmatpush1.msra.mxu0 %v1732
          %2124 = vmatprep.subr.mxu0 %v1737
          %2125 = vmatpush1.msra.mxu0 %v1736
          %2126 = vmatprep.subr.mxu0 %v1741
          %2127 = vmatpush1.msra.mxu0 %v1740
          %2128 = vmatprep.subr.mxu0 %v1745
          %2129 = vmatpush1.msra.mxu0 %v1744
          %2130 = vmatprep.subr.mxu0 %v1749
          %2131 = vmatpush1.msra.mxu0 %v1748
          %2132 = vmatprep.subr.mxu0 %v1753
          %2133 = vmatpush1.msra.mxu0 %v1752
          %2134 = vmatprep.subr.mxu0 %v1757
          %2135 = vmatpush1.msra.mxu0 %v1756
          %2136 = vmatprep.subr.mxu0 %v1761
          %2137 = vmatpush1.msra.mxu0 %v1760
          %2138 = vmatprep.subr.mxu0 %v1765
          %2139 = vmatpush1.msra.mxu0 %v1764
          %2140 = vmatprep.subr.mxu0 %v1769
          %2141 = vmatpush1.msra.mxu0 %v1768
          %2142 = vmatprep.subr.mxu0 %v1773
          %2143 = vmatpush1.msra.mxu0 %v1772
          %2144 = vmatprep.subr.mxu0 %v1777
          %2145 = vmatpush1.msra.mxu0 %v1776
          %2146 = vmatprep.subr.mxu0 %v1781
          %2147 = vmatpush1.msra.mxu0 %v1780
          %2148 = vmatprep.subr.mxu0 %v1785
          %2149 = vmatpush1.msra.mxu0 %v1784
          %2150 = vmatprep.subr.mxu0 %v1789
          %2151 = vmatpush1.msra.mxu0 %v1788
          %2152 = vmatprep.subr.mxu0 %v1793
          %2153 = vmatpush1.msra.mxu0 %v1792
          %2154 = vmatprep.subr.mxu0 %v1797
          %2155 = vmatpush1.msra.mxu0 %v1796
          %2156 = vmatprep.subr.mxu0 %v1801
          %2157 = vmatpush1.msra.mxu0 %v1800
          %2158 = vmatprep.mubr.f32.mxu0 %v1671
          %2159 = vmatmul.mubr.f32.gmra.mrb[0].mxu0 %v1670
          %v2160 = vpop.f32.mrb[0].mxu0
          %v2161 = vadd.f32 %v1943, %v2160
          %v2162 = vpop.f32.mrb[0].mxu0
          %v2163 = vadd.f32 %v1947, %v2162
          %2164 = vdwg.mxu0
          %2165 = vmatprep.subr.mxu0 %v1805
          %2166 = vmatpush1.msra.mxu0 %v1804
          %2167 = vmatprep.subr.mxu0 %v1809
          %2168 = vmatpush1.msra.mxu0 %v1808
          %2169 = vmatprep.subr.mxu0 %v1813
          %2170 = vmatpush1.msra.mxu0 %v1812
          %2171 = vmatprep.subr.mxu0 %v1817
          %2172 = vmatpush1.msra.mxu0 %v1816
          %2173 = vmatprep.subr.mxu0 %v1821
          %2174 = vmatpush1.msra.mxu0 %v1820
          %2175 = vmatprep.subr.mxu0 %v1825
          %2176 = vmatpush1.msra.mxu0 %v1824
          %2177 = vmatprep.subr.mxu0 %v1829
          %2178 = vmatpush1.msra.mxu0 %v1828
          %2179 = vmatprep.subr.mxu0 %v1833
          %2180 = vmatpush1.msra.mxu0 %v1832
          %2181 = vmatprep.subr.mxu0 %v1837
          %2182 = vmatpush1.msra.mxu0 %v1836
          %2183 = vmatprep.subr.mxu0 %v1841
          %2184 = vmatpush1.msra.mxu0 %v1840
          %2185 = vmatprep.subr.mxu0 %v1845
          %2186 = vmatpush1.msra.mxu0 %v1844
          %2187 = vmatprep.subr.mxu0 %v1849
          %2188 = vmatpush1.msra.mxu0 %v1848
          %2189 = vmatprep.subr.mxu0 %v1853
          %2190 = vmatpush1.msra.mxu0 %v1852
          %2191 = vmatprep.subr.mxu0 %v1857
          %2192 = vmatpush1.msra.mxu0 %v1856
          %2193 = vmatprep.subr.mxu0 %v1861
          %2194 = vmatpush1.msra.mxu0 %v1860
          %2195 = vmatprep.subr.mxu0 %v1865
          %2196 = vmatpush1.msra.mxu0 %v1864
          %2197 = vmatprep.subr.mxu0 %v1869
          %2198 = vmatpush1.msra.mxu0 %v1868
          %2199 = vmatprep.subr.mxu0 %v1873
          %2200 = vmatpush1.msra.mxu0 %v1872
          %2201 = vmatprep.subr.mxu0 %v1877
          %2202 = vmatpush1.msra.mxu0 %v1876
          %2203 = vmatprep.subr.mxu0 %v1881
          %2204 = vmatpush1.msra.mxu0 %v1880
          %2205 = vmatprep.subr.mxu0 %v1885
          %2206 = vmatpush1.msra.mxu0 %v1884
          %2207 = vmatprep.subr.mxu0 %v1889
          %2208 = vmatpush1.msra.mxu0 %v1888
          %2209 = vmatprep.subr.mxu0 %v1893
          %2210 = vmatpush1.msra.mxu0 %v1892
          %2211 = vmatprep.subr.mxu0 %v1897
          %2212 = vmatpush1.msra.mxu0 %v1896
          %2213 = vmatprep.subr.mxu0 %v1901
          %2214 = vmatpush1.msra.mxu0 %v1900
          %2215 = vmatprep.subr.mxu0 %v1905
          %2216 = vmatpush1.msra.mxu0 %v1904
          %2217 = vmatprep.subr.mxu0 %v1909
          %2218 = vmatpush1.msra.mxu0 %v1908
          %2219 = vmatprep.subr.mxu0 %v1913
          %2220 = vmatpush1.msra.mxu0 %v1912
          %2221 = vmatprep.subr.mxu0 %v1917
          %2222 = vmatpush1.msra.mxu0 %v1916
          %2223 = vmatprep.subr.mxu0 %v1921
          %2224 = vmatpush1.msra.mxu0 %v1920
          %2225 = vmatprep.subr.mxu0 %v1925
          %2226 = vmatpush1.msra.mxu0 %v1924
          %2227 = vmatprep.subr.mxu0 %v1929
          %2228 = vmatpush1.msra.mxu0 %v1928
          %2229 = vmatprep.mubr.f32.mxu0 %v1673
          %2230 = vmatmul.mubr.f32.gmra.mrb[0].mxu0 %v1672
          %v2231 = vpop.f32.mrb[0].mxu0
          %v2232 = vadd.f32 %v2161, %v2231
          %v2233 = vpop.f32.mrb[0].mxu0
          %v2234 = vadd.f32 %v2163, %v2233
          %2235 = vdwg.mxu0
          %v2236 = vmax.f32 %v2090, 0.0
          %v2237 = vmax.f32 %v2092, 0.0
          %v2238 = vmax.f32 %v2232, 0.0
          %v2239 = vmax.f32 %v2234, 0.0
          %v2240 = vld [vmem:[#allocation17] sm:$0xff]
          %v2241 = vld [vmem:[#allocation17 + $0x8] sm:$0xff]
          %v2242 = vld [vmem:[#allocation17 + $0x10] sm:$0xff]
          %v2243 = vld [vmem:[#allocation17 + $0x18] sm:$0xff]
          %v2244 = vld [vmem:[#allocation17 + $0x20] sm:$0xff]
          %v2245 = vld [vmem:[#allocation17 + $0x28] sm:$0xff]
          %v2246 = vld [vmem:[#allocation17 + $0x30] sm:$0xff]
          %v2247 = vld [vmem:[#allocation17 + $0x38] sm:$0xff]
          %v2248 = vld [vmem:[#allocation17 + $0x40] sm:$0xff]
          %v2249 = vld [vmem:[#allocation17 + $0x48] sm:$0xff]
          %v2250 = vld [vmem:[#allocation17 + $0x50] sm:$0xff]
          %v2251 = vld [vmem:[#allocation17 + $0x58] sm:$0xff]
          %v2252 = vld [vmem:[#allocation17 + $0x60] sm:$0xff]
          %v2253 = vld [vmem:[#allocation17 + $0x68] sm:$0xff]
          %v2254 = vld [vmem:[#allocation17 + $0x70] sm:$0xff]
          %v2255 = vld [vmem:[#allocation17 + $0x78] sm:$0xff]
          %v2256 = vld [vmem:[#allocation17 + $0x80] sm:$0xff]
          %v2257 = vld [vmem:[#allocation17 + $0x88] sm:$0xff]
          %v2258 = vld [vmem:[#allocation17 + $0x90] sm:$0xff]
          %v2259 = vld [vmem:[#allocation17 + $0x98] sm:$0xff]
          %v2260 = vld [vmem:[#allocation17 + $0xa0] sm:$0xff]
          %v2261 = vld [vmem:[#allocation17 + $0xa8] sm:$0xff]
          %v2262 = vld [vmem:[#allocation17 + $0xb0] sm:$0xff]
          %v2263 = vld [vmem:[#allocation17 + $0xb8] sm:$0xff]
          %v2264 = vld [vmem:[#allocation17 + $0xc0] sm:$0xff]
          %v2265 = vld [vmem:[#allocation17 + $0xc8] sm:$0xff]
          %v2266 = vld [vmem:[#allocation17 + $0xd0] sm:$0xff]
          %v2267 = vld [vmem:[#allocation17 + $0xd8] sm:$0xff]
          %v2268 = vld [vmem:[#allocation17 + $0xe0] sm:$0xff]
          %v2269 = vld [vmem:[#allocation17 + $0xe8] sm:$0xff]
          %v2270 = vld [vmem:[#allocation17 + $0xf0] sm:$0xff]
          %v2271 = vld [vmem:[#allocation17 + $0xf8] sm:$0xff]
          %v2272 = vld [vmem:[#allocation17 + $0x100] sm:$0xff]
          %v2273 = vld [vmem:[#allocation17 + $0x108] sm:$0xff]
          %v2274 = vld [vmem:[#allocation17 + $0x110] sm:$0xff]
          %v2275 = vld [vmem:[#allocation17 + $0x118] sm:$0xff]
          %v2276 = vld [vmem:[#allocation17 + $0x120] sm:$0xff]
          %v2277 = vld [vmem:[#allocation17 + $0x128] sm:$0xff]
          %v2278 = vld [vmem:[#allocation17 + $0x130] sm:$0xff]
          %v2279 = vld [vmem:[#allocation17 + $0x138] sm:$0xff]
          %v2280 = vld [vmem:[#allocation17 + $0x140] sm:$0xff]
          %v2281 = vld [vmem:[#allocation17 + $0x148] sm:$0xff]
          %v2282 = vld [vmem:[#allocation17 + $0x150] sm:$0xff]
          %v2283 = vld [vmem:[#allocation17 + $0x158] sm:$0xff]
          %v2284 = vld [vmem:[#allocation17 + $0x160] sm:$0xff]
          %v2285 = vld [vmem:[#allocation17 + $0x168] sm:$0xff]
          %v2286 = vld [vmem:[#allocation17 + $0x170] sm:$0xff]
          %v2287 = vld [vmem:[#allocation17 + $0x178] sm:$0xff]
          %v2288 = vld [vmem:[#allocation17 + $0x180] sm:$0xff]
          %v2289 = vld [vmem:[#allocation17 + $0x188] sm:$0xff]
          %v2290 = vld [vmem:[#allocation17 + $0x190] sm:$0xff]
          %v2291 = vld [vmem:[#allocation17 + $0x198] sm:$0xff]
          %v2292 = vld [vmem:[#allocation17 + $0x1a0] sm:$0xff]
          %v2293 = vld [vmem:[#allocation17 + $0x1a8] sm:$0xff]
          %v2294 = vld [vmem:[#allocation17 + $0x1b0] sm:$0xff]
          %v2295 = vld [vmem:[#allocation17 + $0x1b8] sm:$0xff]
          %v2296 = vld [vmem:[#allocation17 + $0x1c0] sm:$0xff]
          %v2297 = vld [vmem:[#allocation17 + $0x1c8] sm:$0xff]
          %v2298 = vld [vmem:[#allocation17 + $0x1d0] sm:$0xff]
          %v2299 = vld [vmem:[#allocation17 + $0x1d8] sm:$0xff]
          %v2300 = vld [vmem:[#allocation17 + $0x1e0] sm:$0xff]
          %v2301 = vld [vmem:[#allocation17 + $0x1e8] sm:$0xff]
          %v2302 = vld [vmem:[#allocation17 + $0x1f0] sm:$0xff]
          %v2303 = vld [vmem:[#allocation17 + $0x1f8] sm:$0xff]
          %v2304 = vld [vmem:[#allocation19] sm:$0x1]
          %v2306 = vlaneseq
          %v2307 = vshrl.u32 %v2306, 7
          %v2308 = vsub.s32 0, %v2307
          %v2309 = vrot.slane %v2304, %v2308
          %2311 = vmatprep.subr.mxu0 0.0
          %2312 = vmatpush1.msra.mxu0 %v2240
          %2313 = vmatprep.subr.mxu0 0.0
          %2314 = vmatpush1.msra.mxu0 %v2241
          %2315 = vmatprep.subr.mxu0 0.0
          %2316 = vmatpush1.msra.mxu0 %v2242
          %2317 = vmatprep.subr.mxu0 0.0
          %2318 = vmatpush1.msra.mxu0 %v2243
          %2319 = vmatprep.subr.mxu0 0.0
          %2320 = vmatpush1.msra.mxu0 %v2244
          %2321 = vmatprep.subr.mxu0 0.0
          %2322 = vmatpush1.msra.mxu0 %v2245
          %2323 = vmatprep.subr.mxu0 0.0
          %2324 = vmatpush1.msra.mxu0 %v2246
          %2325 = vmatprep.subr.mxu0 0.0
          %2326 = vmatpush1.msra.mxu0 %v2247
          %2327 = vmatprep.subr.mxu0 0.0
          %2328 = vmatpush1.msra.mxu0 %v2248
          %2329 = vmatprep.subr.mxu0 0.0
          %2330 = vmatpush1.msra.mxu0 %v2249
          %2331 = vmatprep.subr.mxu0 0.0
          %2332 = vmatpush1.msra.mxu0 %v2250
          %2333 = vmatprep.subr.mxu0 0.0
          %2334 = vmatpush1.msra.mxu0 %v2251
          %2335 = vmatprep.subr.mxu0 0.0
          %2336 = vmatpush1.msra.mxu0 %v2252
          %2337 = vmatprep.subr.mxu0 0.0
          %2338 = vmatpush1.msra.mxu0 %v2253
          %2339 = vmatprep.subr.mxu0 0.0
          %2340 = vmatpush1.msra.mxu0 %v2254
          %2341 = vmatprep.subr.mxu0 0.0
          %2342 = vmatpush1.msra.mxu0 %v2255
          %2343 = vmatprep.subr.mxu0 0.0
          %2344 = vmatpush1.msra.mxu0 %v2256
          %2345 = vmatprep.subr.mxu0 0.0
          %2346 = vmatpush1.msra.mxu0 %v2257
          %2347 = vmatprep.subr.mxu0 0.0
          %2348 = vmatpush1.msra.mxu0 %v2258
          %2349 = vmatprep.subr.mxu0 0.0
          %2350 = vmatpush1.msra.mxu0 %v2259
          %2351 = vmatprep.subr.mxu0 0.0
          %2352 = vmatpush1.msra.mxu0 %v2260
          %2353 = vmatprep.subr.mxu0 0.0
          %2354 = vmatpush1.msra.mxu0 %v2261
          %2355 = vmatprep.subr.mxu0 0.0
          %2356 = vmatpush1.msra.mxu0 %v2262
          %2357 = vmatprep.subr.mxu0 0.0
          %2358 = vmatpush1.msra.mxu0 %v2263
          %2359 = vmatprep.subr.mxu0 0.0
          %2360 = vmatpush1.msra.mxu0 %v2264
          %2361 = vmatprep.subr.mxu0 0.0
          %2362 = vmatpush1.msra.mxu0 %v2265
          %2363 = vmatprep.subr.mxu0 0.0
          %2364 = vmatpush1.msra.mxu0 %v2266
          %2365 = vmatprep.subr.mxu0 0.0
          %2366 = vmatpush1.msra.mxu0 %v2267
          %2367 = vmatprep.subr.mxu0 0.0
          %2368 = vmatpush1.msra.mxu0 %v2268
          %2369 = vmatprep.subr.mxu0 0.0
          %2370 = vmatpush1.msra.mxu0 %v2269
          %2371 = vmatprep.subr.mxu0 0.0
          %2372 = vmatpush1.msra.mxu0 %v2270
          %2373 = vmatprep.subr.mxu0 0.0
          %2374 = vmatpush1.msra.mxu0 %v2271
          %2375 = vmatprep.mubr.f32.mxu0 %v2237
          %2376 = vmatmul.mubr.f32.gmra.mrb[0].mxu0 %v2236
          %v2377 = vpop.f32.mrb[0].mxu0
          %v2378 = vadd.f32 %v2309, %v2377
          %v2379 = vpop.f32.mrb[0].mxu0
          %2380 = vdwg.mxu0
          %2381 = vmatprep.subr.mxu0 0.0
          %2382 = vmatpush1.msra.mxu0 %v2272
          %2383 = vmatprep.subr.mxu0 0.0
          %2384 = vmatpush1.msra.mxu0 %v2273
          %2385 = vmatprep.subr.mxu0 0.0
          %2386 = vmatpush1.msra.mxu0 %v2274
          %2387 = vmatprep.subr.mxu0 0.0
          %2388 = vmatpush1.msra.mxu0 %v2275
          %2389 = vmatprep.subr.mxu0 0.0
          %2390 = vmatpush1.msra.mxu0 %v2276
          %2391 = vmatprep.subr.mxu0 0.0
          %2392 = vmatpush1.msra.mxu0 %v2277
          %2393 = vmatprep.subr.mxu0 0.0
          %2394 = vmatpush1.msra.mxu0 %v2278
          %2395 = vmatprep.subr.mxu0 0.0
          %2396 = vmatpush1.msra.mxu0 %v2279
          %2397 = vmatprep.subr.mxu0 0.0
          %2398 = vmatpush1.msra.mxu0 %v2280
          %2399 = vmatprep.subr.mxu0 0.0
          %2400 = vmatpush1.msra.mxu0 %v2281
          %2401 = vmatprep.subr.mxu0 0.0
          %2402 = vmatpush1.msra.mxu0 %v2282
          %2403 = vmatprep.subr.mxu0 0.0
          %2404 = vmatpush1.msra.mxu0 %v2283
          %2405 = vmatprep.subr.mxu0 0.0
          %2406 = vmatpush1.msra.mxu0 %v2284
          %2407 = vmatprep.subr.mxu0 0.0
          %2408 = vmatpush1.msra.mxu0 %v2285
          %2409 = vmatprep.subr.mxu0 0.0
          %2410 = vmatpush1.msra.mxu0 %v2286
          %2411 = vmatprep.subr.mxu0 0.0
          %2412 = vmatpush1.msra.mxu0 %v2287
          %2413 = vmatprep.subr.mxu0 0.0
          %2414 = vmatpush1.msra.mxu0 %v2288
          %2415 = vmatprep.subr.mxu0 0.0
          %2416 = vmatpush1.msra.mxu0 %v2289
          %2417 = vmatprep.subr.mxu0 0.0
          %2418 = vmatpush1.msra.mxu0 %v2290
          %2419 = vmatprep.subr.mxu0 0.0
          %2420 = vmatpush1.msra.mxu0 %v2291
          %2421 = vmatprep.subr.mxu0 0.0
          %2422 = vmatpush1.msra.mxu0 %v2292
          %2423 = vmatprep.subr.mxu0 0.0
          %2424 = vmatpush1.msra.mxu0 %v2293
          %2425 = vmatprep.subr.mxu0 0.0
          %2426 = vmatpush1.msra.mxu0 %v2294
          %2427 = vmatprep.subr.mxu0 0.0
          %2428 = vmatpush1.msra.mxu0 %v2295
          %2429 = vmatprep.subr.mxu0 0.0
          %2430 = vmatpush1.msra.mxu0 %v2296
          %2431 = vmatprep.subr.mxu0 0.0
          %2432 = vmatpush1.msra.mxu0 %v2297
          %2433 = vmatprep.subr.mxu0 0.0
          %2434 = vmatpush1.msra.mxu0 %v2298
          %2435 = vmatprep.subr.mxu0 0.0
          %2436 = vmatpush1.msra.mxu0 %v2299
          %2437 = vmatprep.subr.mxu0 0.0
          %2438 = vmatpush1.msra.mxu0 %v2300
          %2439 = vmatprep.subr.mxu0 0.0
          %2440 = vmatpush1.msra.mxu0 %v2301
          %2441 = vmatprep.subr.mxu0 0.0
          %2442 = vmatpush1.msra.mxu0 %v2302
          %2443 = vmatprep.subr.mxu0 0.0
          %2444 = vmatpush1.msra.mxu0 %v2303
          %2445 = vmatprep.mubr.f32.mxu0 %v2239
          %2446 = vmatmul.mubr.f32.gmra.mrb[0].mxu0 %v2238
          %v2447 = vpop.f32.mrb[0].mxu0
          %v2448 = vadd.f32 %v2378, %v2447
          %v2449 = vpop.f32.mrb[0].mxu0
          %2450 = vdwg.mxu0
          %2451 = vst [vmem:[%s474] sm:$0xff] %v2448
        $region104: #{tpu_custom_call.1} parent=55 // pred_fallthru
          _
        %s2452 = sand.u32 %s250, 1
        %s2453 = scalar_lea.sflag [#allocation7], %s2452
        %s2454 = sand.u32 %s250, 1
        %s2455 = smul.addr %s2454, 8
        %s2456 = scalar_lea.vmem [#allocation20], %s2455
        // Predicated region
        $region109: #{tpu_custom_call.1} parent=55 // pred_check
          %p2457 = pneg %p260
        $region110: #{tpu_custom_call.1} parent=55 // pred_check_branch
          %2459 = sbr.rel (%p2457) target = $region112
        $region111: #{tpu_custom_call.1} parent=55 // pred_region
          %s2460 = smul.u32 %s35, %s34
          %s2462 = ssub.s32 128, 128
          %2463 = vsyncadd %s2453, %s2462
          %s2464 = smul.addr %s2460, 128
          %s2465 = scalar_lea.hbm %s9, %s2464
          %s2467 = sshll.u32 %s2456, 4
          %s2468 = int_to_ptr.vmem [resolvable:$true] %s2467
          %2470 = dma.vmem_to_hbm [thread:$0]  %s2468, 128, %s2465, %s2453
        $region112: #{tpu_custom_call.1} parent=55 // pred_fallthru
          _
      $region56: #{tpu_custom_call.1} parent=5 // pred_fallthru
        _
      %p2471 = scmp.le.s32.totalorder 2, %s25
      // Predicated region
      $region113: #{tpu_custom_call.1} parent=5 // pred_check
        %p2472 = pneg %p2471
      $region114: #{tpu_custom_call.1} parent=5 // pred_check_branch
        %2474 = sbr.rel (%p2472) target = $region116
      $region115: #{tpu_custom_call.1} parent=5 // pred_region
        %s2475 = ssub.s32 %s25, 2
        // Predicated region
        $region117: #{tpu_custom_call.1} parent=115 // pred_check
          %p2476 = pneg %p266
        $region118: #{tpu_custom_call.1} parent=115 // pred_check_branch
          %2478 = sbr.rel (%p2476) target = $region120
        $region119: #{tpu_custom_call.1} parent=115 // pred_region
          %s2479 = sand.u32 %s251, 1
          %s2480 = scalar_lea.sflag [#allocation7], %s2479
          %s2481 = sand.u32 %s251, 1
          %s2482 = smul.addr %s2481, 8
          %s2483 = scalar_lea.vmem [#allocation20], %s2482
          %2484 = dma.done %s2480, 128
        $region120: #{tpu_custom_call.1} parent=115 // pred_fallthru
          _
      $region116: #{tpu_custom_call.1} parent=5 // pred_fallthru
        _
    $region6: #{tpu_custom_call.1} parent=1 // loop_footer
      %s29 = sadd.s32 1, %s25
    $region7: #{tpu_custom_call.1} parent=1 // loop_footer_branch
      %24 = sbr.rel target = $region3
    $region8: #{tpu_custom_call.1} parent=1 // loop_exit
      _
    %2485 = vsyncpa [#allocation6], 1
    %s2486 = scalar_lea.sflag [#allocation6], 1
    %2487 = vsyncpa %s2486, 1
    %2488 = vsyncpa [#allocation9], 1
    %2489 = vsyncpa [#allocation12], 1
    %2490 = vsyncpa [#allocation15], 1
    %2491 = vsyncpa [#allocation18], 1
    %2492 = vsyncpa [#allocation7], 1
    %s2493 = scalar_lea.sflag [#allocation7], 1
    %2494 = vsyncpa %s2493, 1

</llo_original>
